<compile_context>
chip_gen: v7x
topology: tpu7x:2x2x1
jax: 0.10.0
libtpu: 0.0.40
codegen_flags: <defaults>
</compile_context>

<pallas_src>
import jax
import jax.numpy as jnp
from jax.experimental import pallas as pl
from jax.experimental.pallas import tpu as pltpu

UPSCALE = 4
TM_MAX = 8192        # upper bound on pixels per grid step (pre-packing lane tile)


def _cdiv(a, b):
    return -(-a // b)


def _round_up(x, m):
    return _cdiv(x, m) * m


def _mxu_pack_factor():
    """Pixel-group pack factor: 4 on 256x256-MXU chips (v6e/v7x), else 2."""
    try:
        kind = jax.devices()[0].device_kind.lower()
    except Exception:
        return 4
    if "v6" in kind or "v7" in kind:
        return 4
    if "tpu" in kind:
        return 2   # v2..v5: 128x128 MXU; 4x packing would be push-neutral there
    return 4


def srnet_kernel(p_ref, w1_ref, wmid_ref, w6_ref, bh_ref, b6_ref, o_ref):
    """One tile of P*TMP pixels, packed as P groups of TMP pixels on sublanes.

      p_ref    : (P*4,   TMP)     bf16  2x2 patch taps, group-blocked rows
      w1_ref   : (P*64,  P*4)     bf16  conv1, block-diagonal
      wmid_ref : (4, P*64, P*64)  bf16  conv2..conv5 stacked, block-diagonal
      w6_ref   : (P*16,  P*64)    bf16  conv6, block-diagonal
      bh_ref   : (P*64, 8)        f32   col l = bias of conv(l+1), l = 0..4
      b6_ref   : (P*16, 1)        f32   conv6 bias
      o_ref    : (P*16, TMP)      bf16
    """
    # conv1: (P*64, P*4) @ (P*4, TMP); same TM/P push count as a mid layer.
    h = (jnp.dot(w1_ref[...], p_ref[...], preferred_element_type=jnp.float32)
         + bh_ref[:, 0:1])
    # conv2..conv5: fused bias+ReLU+cast epilogue, bf16 operands, f32 acc.
    for l in range(4):
        a = jnp.maximum(h, 0.0).astype(jnp.bfloat16)
        h = (jnp.dot(wmid_ref[l], a, preferred_element_type=jnp.float32)
             + bh_ref[:, l + 1:l + 2])
    # conv6: ReLU then (P*16, P*64) @ (P*64, TMP), no trailing ReLU; bf16 store.
    a = jnp.maximum(h, 0.0).astype(jnp.bfloat16)
    o_ref[...] = (jnp.dot(w6_ref[...], a, preferred_element_type=jnp.float32)
                  + b6_ref[...]).astype(jnp.bfloat16)


def init_params(key, upscale=UPSCALE, pack=None):
    """Kaiming-normal weights packed block-diagonally (bf16), zero biases."""
    if pack is None:
        pack = _mxu_pack_factor()
    r2 = upscale * upscale
    assert r2 <= 64, "bias/packing layout assumes upscale**2 <= 64"
    ks = jax.random.split(key, 6)

    def kaiming(k, shape, fan_in):
        return jax.random.normal(k, shape, jnp.float32) * jnp.sqrt(2.0 / fan_in)

    def block_diag(w):
        # (C_out, C_in) -> (pack*C_out, pack*C_in) with w repeated on the diagonal.
        return jnp.kron(jnp.eye(pack, dtype=jnp.float32), w).astype(jnp.bfloat16)

    # (C_out, C_in) layout; conv1's 2x2 taps flattened row-major (di, dj).
    w1 = block_diag(kaiming(ks[0], (64, 4), 4))                       # (P*64, P*4)
    w_mid = jnp.stack(
        [block_diag(kaiming(ks[i], (64, 64), 64)) for i in range(1, 5)], axis=0)
    w6 = block_diag(kaiming(ks[5], (r2, 64), 64))                     # (P*r2, P*64)
    # Biases are zero at init (matches the PyTorch init); packed per group.
    b_hid = jnp.zeros((pack * 64, 8), jnp.float32)   # cols 0..4: conv1..conv5
    b_out = jnp.zeros((pack * r2, 1), jnp.float32)   # conv6
    return {"w1": w1, "w_mid": w_mid, "w6": w6, "b_hid": b_hid, "b_out": b_out}


def srnet_forward(x, params, upscale=UPSCALE, tm_max=TM_MAX):
    B, C, H, W = x.shape
    Hp, Wp = H - 1, W - 1
    r = upscale
    r2 = r * r
    N = B * C * Hp * Wp

    P = params["w6"].shape[0] // r2          # pixel-group pack factor (static)

    # Even number of grid steps (keeps both v7x TensorCores busy); lane tile a
    # multiple of P*128 so every packed pixel group stays lane-aligned.
    steps = max(2, 2 * _cdiv(N, 2 * tm_max))
    tm = max(P * 128, _round_up(_cdiv(N, steps), P * 128))   # pixels per step
    tmp = tm // P                                            # packed lanes per step
    npad = steps * tm

    # 2x2 valid-conv patch extraction, pixels on lanes.  The reshape to B*C
    # planes matches the module's x_in.reshape(B*C, 1, H, W) + Conv2d(1, 64, 2).
    # TODO(synk): fuse the extraction into the kernel (pl.ANY + manual DMA over
    # overlapping 2-row windows) to remove this extra HBM round-trip.
    xr = x.reshape(B * C, H, W)
    patches = jnp.stack(
        [xr[:, :-1, :-1], xr[:, :-1, 1:], xr[:, 1:, :-1], xr[:, 1:, 1:]],
        axis=0)                               # (4, B*C, Hp, Wp), (di,dj) row-major
    patches = patches.reshape(4, N).astype(jnp.bfloat16)
    patches = jnp.pad(patches, ((0, 0), (0, npad - N)))
    # Pack P pixel groups per tile onto sublanes: tile i / group g holds pixels
    # [i*tm + g*tmp, i*tm + (g+1)*tmp).
    patches = patches.reshape(4, steps, P, tmp).transpose(2, 0, 1, 3)
    patches = patches.reshape(P * 4, steps * tmp)

    out = pl.pallas_call(
        srnet_kernel,
        out_shape=jax.ShapeDtypeStruct((P * r2, steps * tmp), jnp.bfloat16),
        grid=(steps,),
        in_specs=[
            pl.BlockSpec((P * 4, tmp), lambda i: (0, i)),
            pl.BlockSpec((P * 64, P * 4), lambda i: (0, 0)),
            pl.BlockSpec((4, P * 64, P * 64), lambda i: (0, 0, 0)),
            pl.BlockSpec((P * r2, P * 64), lambda i: (0, 0)),
            pl.BlockSpec((P * 64, 8), lambda i: (0, 0)),
            pl.BlockSpec((P * r2, 1), lambda i: (0, 0)),
        ],
        out_specs=pl.BlockSpec((P * r2, tmp), lambda i: (0, i)),
        compiler_params=pltpu.CompilerParams(
            dimension_semantics=("parallel",),
            vmem_limit_bytes=32 * 1024 * 1024),   # safe on v5e/v6e/v7x
    )(patches, params["w1"], params["w_mid"], params["w6"],
      params["b_hid"], params["b_out"])

    # Unpack pixel groups, then PixelShuffle(upscale):
    # channel ch = i*r + j -> spatial (h*r + i, w*r + j).
    out = out.reshape(P, r2, steps, tmp).transpose(1, 2, 0, 3).reshape(r2, npad)
    out = out[:, :N].reshape(r, r, B * C, Hp, Wp)
    out = out.transpose(2, 3, 0, 4, 1).reshape(B * C, Hp * r, Wp * r)
    return out.reshape(B, C, r * Hp, r * Wp)


if __name__ == "__main__":
    key = jax.random.PRNGKey(0)
    pkey, xkey = jax.random.split(key)
    params = init_params(pkey)

    # NCHW input consistent with the module's forward.
    x = jax.random.normal(xkey, (2, 4, 16, 16), jnp.float32)

    y = jax.jit(srnet_forward)(x, params)
    jax.block_until_ready(y)

    expected_shape = (2, 4, UPSCALE * 15, UPSCALE * 15)
    assert y.shape == expected_shape, (y.shape, expected_shape)
    print("KERNEL_OK")
</pallas_src>

<mosaic_0001>
module attributes {stable_mosaic.version = 11 : i64} {
  func.func @srnet_kernel(%arg0: i32, %arg1: memref<16x256xbf16, #tpu.memory_space<vmem>>, %arg2: memref<256x16xbf16, #tpu.memory_space<vmem>>, %arg3: memref<4x256x256xbf16, #tpu.memory_space<vmem>>, %arg4: memref<64x256xbf16, #tpu.memory_space<vmem>>, %arg5: memref<256x8xf32, #tpu.memory_space<vmem>>, %arg6: memref<64x1xf32, #tpu.memory_space<vmem>>, %arg7: memref<64x256xbf16, #tpu.memory_space<vmem>>) attributes {dimension_semantics = [#tpu.dimension_semantics<parallel>], iteration_bounds = array<i64: 2>, scalar_prefetch = 0 : i64, scratch_operands = 0 : i64, tpu.core_type = #tpu.core_type<tc>, window_params = [{transform_indices = @transform_0, window_bounds = array<i64: 16, 256>}, {pipeline_mode = #tpu.pipeline_mode<synchronous>, transform_indices = @transform_1, window_bounds = array<i64: 256, 16>}, {pipeline_mode = #tpu.pipeline_mode<synchronous>, transform_indices = @transform_2, window_bounds = array<i64: 4, 256, 256>}, {pipeline_mode = #tpu.pipeline_mode<synchronous>, transform_indices = @transform_3, window_bounds = array<i64: 64, 256>}, {pipeline_mode = #tpu.pipeline_mode<synchronous>, transform_indices = @transform_4, window_bounds = array<i64: 256, 8>}, {pipeline_mode = #tpu.pipeline_mode<synchronous>, transform_indices = @transform_5, window_bounds = array<i64: 64, 1>}, {transform_indices = @transform_6, window_bounds = array<i64: 64, 256>}]} {
    %c0 = arith.constant 0 : index
    %c0_0 = arith.constant 0 : index
    %0 = vector.load %arg2[%c0, %c0_0] : memref<256x16xbf16, #tpu.memory_space<vmem>>, vector<256x16xbf16>
    %c0_1 = arith.constant 0 : index
    %c0_2 = arith.constant 0 : index
    %1 = vector.load %arg1[%c0_1, %c0_2] : memref<16x256xbf16, #tpu.memory_space<vmem>>, vector<16x256xbf16>
    %cst = arith.constant dense<0.000000e+00> : vector<256x256xf32>
    %2 = tpu.matmul %0, %1, %cst {dimension_numbers = #tpu.dot_dimension_numbers<[1], [0], [0], [1], [0, 0, 1, 1], [], []>} : vector<256x16xbf16>, vector<16x256xbf16>, vector<256x256xf32> -> vector<256x256xf32>
    %c0_3 = arith.constant 0 : index
    %c0_4 = arith.constant 0 : index
    %3 = vector.load %arg5[%c0_3, %c0_4] : memref<256x8xf32, #tpu.memory_space<vmem>>, vector<256x1xf32>
    %4 = vector.broadcast %3 : vector<256x1xf32> to vector<256x256xf32>
    %5 = arith.addf %2, %4 : vector<256x256xf32>
    %cst_5 = arith.constant 0.000000e+00 : f32
    %6 = vector.broadcast %cst_5 : f32 to vector<256x256xf32>
    %7 = arith.maximumf %5, %6 : vector<256x256xf32>
    %8 = arith.truncf %7 : vector<256x256xf32> to vector<256x256xbf16>
    %c0_6 = arith.constant 0 : index
    %c0_7 = arith.constant 0 : index
    %c0_8 = arith.constant 0 : index
    %9 = vector.load %arg3[%c0_6, %c0_7, %c0_8] : memref<4x256x256xbf16, #tpu.memory_space<vmem>>, vector<1x256x256xbf16>
    %10 = vector.shape_cast %9 : vector<1x256x256xbf16> to vector<256x256xbf16>
    %cst_9 = arith.constant dense<0.000000e+00> : vector<256x256xf32>
    %11 = tpu.matmul %10, %8, %cst_9 {dimension_numbers = #tpu.dot_dimension_numbers<[1], [0], [0], [1], [0, 0, 1, 1], [], []>} : vector<256x256xbf16>, vector<256x256xbf16>, vector<256x256xf32> -> vector<256x256xf32>
    %c0_10 = arith.constant 0 : index
    %c1 = arith.constant 1 : index
    %12 = vector.load %arg5[%c0_10, %c1] : memref<256x8xf32, #tpu.memory_space<vmem>>, vector<256x1xf32>
    %13 = vector.broadcast %12 : vector<256x1xf32> to vector<256x256xf32>
    %14 = arith.addf %11, %13 : vector<256x256xf32>
    %cst_11 = arith.constant 0.000000e+00 : f32
    %15 = vector.broadcast %cst_11 : f32 to vector<256x256xf32>
    %16 = arith.maximumf %14, %15 : vector<256x256xf32>
    %17 = arith.truncf %16 : vector<256x256xf32> to vector<256x256xbf16>
    %c1_12 = arith.constant 1 : index
    %c0_13 = arith.constant 0 : index
    %c0_14 = arith.constant 0 : index
    %18 = vector.load %arg3[%c1_12, %c0_13, %c0_14] : memref<4x256x256xbf16, #tpu.memory_space<vmem>>, vector<1x256x256xbf16>
    %19 = vector.shape_cast %18 : vector<1x256x256xbf16> to vector<256x256xbf16>
    %cst_15 = arith.constant dense<0.000000e+00> : vector<256x256xf32>
    %20 = tpu.matmul %19, %17, %cst_15 {dimension_numbers = #tpu.dot_dimension_numbers<[1], [0], [0], [1], [0, 0, 1, 1], [], []>} : vector<256x256xbf16>, vector<256x256xbf16>, vector<256x256xf32> -> vector<256x256xf32>
    %c0_16 = arith.constant 0 : index
    %c2 = arith.constant 2 : index
    %21 = vector.load %arg5[%c0_16, %c2] : memref<256x8xf32, #tpu.memory_space<vmem>>, vector<256x1xf32>
    %22 = vector.broadcast %21 : vector<256x1xf32> to vector<256x256xf32>
    %23 = arith.addf %20, %22 : vector<256x256xf32>
    %cst_17 = arith.constant 0.000000e+00 : f32
    %24 = vector.broadcast %cst_17 : f32 to vector<256x256xf32>
    %25 = arith.maximumf %23, %24 : vector<256x256xf32>
    %26 = arith.truncf %25 : vector<256x256xf32> to vector<256x256xbf16>
    %c2_18 = arith.constant 2 : index
    %c0_19 = arith.constant 0 : index
    %c0_20 = arith.constant 0 : index
    %27 = vector.load %arg3[%c2_18, %c0_19, %c0_20] : memref<4x256x256xbf16, #tpu.memory_space<vmem>>, vector<1x256x256xbf16>
    %28 = vector.shape_cast %27 : vector<1x256x256xbf16> to vector<256x256xbf16>
    %cst_21 = arith.constant dense<0.000000e+00> : vector<256x256xf32>
    %29 = tpu.matmul %28, %26, %cst_21 {dimension_numbers = #tpu.dot_dimension_numbers<[1], [0], [0], [1], [0, 0, 1, 1], [], []>} : vector<256x256xbf16>, vector<256x256xbf16>, vector<256x256xf32> -> vector<256x256xf32>
    %c0_22 = arith.constant 0 : index
    %c3 = arith.constant 3 : index
    %30 = vector.load %arg5[%c0_22, %c3] : memref<256x8xf32, #tpu.memory_space<vmem>>, vector<256x1xf32>
    %31 = vector.broadcast %30 : vector<256x1xf32> to vector<256x256xf32>
    %32 = arith.addf %29, %31 : vector<256x256xf32>
    %cst_23 = arith.constant 0.000000e+00 : f32
    %33 = vector.broadcast %cst_23 : f32 to vector<256x256xf32>
    %34 = arith.maximumf %32, %33 : vector<256x256xf32>
    %35 = arith.truncf %34 : vector<256x256xf32> to vector<256x256xbf16>
    %c3_24 = arith.constant 3 : index
    %c0_25 = arith.constant 0 : index
    %c0_26 = arith.constant 0 : index
    %36 = vector.load %arg3[%c3_24, %c0_25, %c0_26] : memref<4x256x256xbf16, #tpu.memory_space<vmem>>, vector<1x256x256xbf16>
    %37 = vector.shape_cast %36 : vector<1x256x256xbf16> to vector<256x256xbf16>
    %cst_27 = arith.constant dense<0.000000e+00> : vector<256x256xf32>
    %38 = tpu.matmul %37, %35, %cst_27 {dimension_numbers = #tpu.dot_dimension_numbers<[1], [0], [0], [1], [0, 0, 1, 1], [], []>} : vector<256x256xbf16>, vector<256x256xbf16>, vector<256x256xf32> -> vector<256x256xf32>
    %c0_28 = arith.constant 0 : index
    %c4 = arith.constant 4 : index
    %39 = vector.load %arg5[%c0_28, %c4] : memref<256x8xf32, #tpu.memory_space<vmem>>, vector<256x1xf32>
    %40 = vector.broadcast %39 : vector<256x1xf32> to vector<256x256xf32>
    %41 = arith.addf %38, %40 : vector<256x256xf32>
    %cst_29 = arith.constant 0.000000e+00 : f32
    %42 = vector.broadcast %cst_29 : f32 to vector<256x256xf32>
    %43 = arith.maximumf %41, %42 : vector<256x256xf32>
    %44 = arith.truncf %43 : vector<256x256xf32> to vector<256x256xbf16>
    %c0_30 = arith.constant 0 : index
    %c0_31 = arith.constant 0 : index
    %45 = vector.load %arg4[%c0_30, %c0_31] : memref<64x256xbf16, #tpu.memory_space<vmem>>, vector<64x256xbf16>
    %cst_32 = arith.constant dense<0.000000e+00> : vector<64x256xf32>
    %46 = tpu.matmul %45, %44, %cst_32 {dimension_numbers = #tpu.dot_dimension_numbers<[1], [0], [0], [1], [0, 0, 1, 1], [], []>} : vector<64x256xbf16>, vector<256x256xbf16>, vector<64x256xf32> -> vector<64x256xf32>
    %c0_33 = arith.constant 0 : index
    %c0_34 = arith.constant 0 : index
    %47 = vector.load %arg6[%c0_33, %c0_34] : memref<64x1xf32, #tpu.memory_space<vmem>>, vector<64x1xf32>
    %48 = vector.broadcast %47 : vector<64x1xf32> to vector<64x256xf32>
    %49 = arith.addf %46, %48 : vector<64x256xf32>
    %50 = arith.truncf %49 : vector<64x256xf32> to vector<64x256xbf16>
    %c0_35 = arith.constant 0 : index
    %c0_36 = arith.constant 0 : index
    %51 = vector.load %arg7[%c0_35, %c0_36] : memref<64x256xbf16, #tpu.memory_space<vmem>>, vector<64x256xbf16>
    tpu.vector_store %arg7[%c0_35, %c0_36], %50 {strides = array<i32>} : memref<64x256xbf16, #tpu.memory_space<vmem>>, vector<64x256xbf16>,
    return
  }
  func.func @transform_0(%arg0: i32) -> (i32, i32) {
    %c0_i32 = arith.constant 0 : i32
    %c0_i32_0 = arith.constant 0 : i32
    return %c0_i32, %arg0 : i32, i32
  }
  func.func @transform_1(%arg0: i32) -> (i32, i32) {
    %c0_i32 = arith.constant 0 : i32
    %c0_i32_0 = arith.constant 0 : i32
    %c0_i32_1 = arith.constant 0 : i32
    return %c0_i32, %c0_i32_0 : i32, i32
  }
  func.func @transform_2(%arg0: i32) -> (i32, i32, i32) {
    %c0_i32 = arith.constant 0 : i32
    %c0_i32_0 = arith.constant 0 : i32
    %c0_i32_1 = arith.constant 0 : i32
    %c0_i32_2 = arith.constant 0 : i32
    return %c0_i32, %c0_i32_0, %c0_i32_1 : i32, i32, i32
  }
  func.func @transform_3(%arg0: i32) -> (i32, i32) {
    %c0_i32 = arith.constant 0 : i32
    %c0_i32_0 = arith.constant 0 : i32
    %c0_i32_1 = arith.constant 0 : i32
    return %c0_i32, %c0_i32_0 : i32, i32
  }
  func.func @transform_4(%arg0: i32) -> (i32, i32) {
    %c0_i32 = arith.constant 0 : i32
    %c0_i32_0 = arith.constant 0 : i32
    %c0_i32_1 = arith.constant 0 : i32
    return %c0_i32, %c0_i32_0 : i32, i32
  }
  func.func @transform_5(%arg0: i32) -> (i32, i32) {
    %c0_i32 = arith.constant 0 : i32
    %c0_i32_0 = arith.constant 0 : i32
    %c0_i32_1 = arith.constant 0 : i32
    return %c0_i32, %c0_i32_0 : i32, i32
  }
  func.func @transform_6(%arg0: i32) -> (i32, i32) {
    %c0_i32 = arith.constant 0 : i32
    %c0_i32_0 = arith.constant 0 : i32
    return %c0_i32, %arg0 : i32, i32
  }
}

</mosaic_0001>

<llo_original>
// kernel: srnet_forward.1
$region0: #{srnet_forward.1}
  #allocation0 [shape = 'u32[]', space=smem, size = 0x4, offset = 0x4, fixed_abs, tag = 'smem constant byte address 0x4 - core index']
  #allocation1 [shape = 'u32[144,128]{1,0:T(1,128)}', space=vmem, size = 0x12000, scoped, tag = 'internal scratch']
  %s0 = inlined_call_operand.vmem [shape: bf16[16,512], index: 0, kind: input, shape index: {}]
  %s1 = inlined_call_operand.vmem [shape: bf16[256,16], index: 1, kind: input, shape index: {}]
  %s2 = inlined_call_operand.hbm [shape: bf16[4,256,256], index: 2, kind: input, shape index: {}]
  %s3 = inlined_call_operand.hbm [shape: bf16[64,256], index: 3, kind: input, shape index: {}]
  %s4 = inlined_call_operand.vmem [shape: f32[256,8], index: 4, kind: input, shape index: {}]
  %s5 = inlined_call_operand.vmem [shape: f32[64,1], index: 5, kind: input, shape index: {}]
  %s6 = inlined_call_operand.vmem [shape: bf16[64,512], index: 6, kind: output, shape index: {}]
  %s7 = sld [smem:[#allocation0]]
  $region137: #{srnet_forward.1} parent=0
    _
  %s9 = ssub.s32 1, %s7
  %s10 = scalar_select 0, %s9, %s7
  $region1: #{srnet_forward.1} parent=0
    #allocation2 [shape = 'u8[16384]{0}', space=vmem, size = 0x4000, scoped, tag = 'input window, operand 0']
    #allocation3 [shape = 'u8[524288]{0}', space=vmem, size = 0x80000, scoped, tag = 'input window, operand 2, single buffered']
    #allocation4 [shape = 's32[2]{0}', space=sflag, size = 0x8, scoped, tag = 'scoped memory for srnet_forward.1']
    #allocation5 [shape = 'u8[32768]{0}', space=vmem, size = 0x8000, scoped, tag = 'input window, operand 3, single buffered']
    #allocation6 [shape = 's32[1]{0}', space=sflag, size = 0x4, scoped, tag = 'scoped memory for srnet_forward.1']
    #allocation7 [shape = 'u8[65536]{0}', space=vmem, size = 0x10000, scoped, tag = 'output window, operand 0']
    %11 = vsyncpa [#allocation4], 0
    %12 = vsyncpa [#allocation6], 0
    loop: start=0, step=1, limit=4
    $region2: #{srnet_forward.1} parent=1 // loop_pre_header
      _
    $region3: #{srnet_forward.1} parent=1 // loop_header
      %s14 = sphi 0, %s18
      %p15 = scmp.ge.s32.totalorder %s14, 4
      %s24 = sphi 0, %s26
      %s27 = sphi 0, %s24
      %s28 = sphi 0, %s27
      %s44 = sphi 0, %s28
      %s48 = sphi 0, %s48
      %s50 = sphi 0, %s48
      %s51 = sphi 0, %s50
      %s65 = sphi 0, %s51
      %s69 = sphi 0, %s69
      %s71 = sphi 0, %s69
      %s72 = sphi 0, %s71
      %s86 = sphi 0, %s72
      %s90 = sphi 0, %s90
      %s92 = sphi 0, %s90
      %s93 = sphi 0, %s92
      %s107 = sphi 0, %s93
      %s111 = sphi 0, %s111
      %s113 = sphi 0, %s111
      %s114 = sphi 0, %s113
      %s128 = sphi 0, %s114
      %s132 = sphi 0, %s132
      %s134 = sphi 0, %s132
      %s135 = sphi 0, %s134
      %s149 = sphi 0, %s135
      %s155 = sphi 0, %s157
      %s158 = sphi 0, %s155
      %s159 = sphi 0, %s158
      %s175 = sphi 0, %s159
    $region4: #{srnet_forward.1} parent=1 // loop_header_branch
      %17 = sbr.rel (%p15) target = $region8
    $region5: #{srnet_forward.1} parent=1 // loop_body
      %s19 = ssub.s32 %s14, 1
      %s20 = ssub.s32 %s14, 2
      %s21 = sadd.s32 %s14, 1
      %s22 = ssub.s32 %s14, %s21
      %p23 = scmp.eq.s32.totalorder %s22, 0
      %s25 = sadd.s32 %s24, 1
      %s26 = scalar_select %p23, %s24, %s25
      %p29 = pneg %p23
      %p30 = scmp.eq.s32.totalorder %s14, 1
      %p31 = por %p29, %p30
      %p32 = scmp.ne.s32.totalorder %s24, %s27
      %p33 = scmp.eq.s32.totalorder %s14, 0
      %p34 = por %p32, %p33
      %p35 = scmp.ne.s32.totalorder %s24, %s27
      %p36 = scmp.eq.s32.totalorder %s19, 1
      %p37 = por %p35, %p36
      %p38 = scmp.ne.s32.totalorder %s27, %s28
      %p39 = scmp.eq.s32.totalorder %s19, 0
      %p40 = por %p38, %p39
      %p41 = scmp.ne.s32.totalorder %s27, %s28
      %p42 = scmp.eq.s32.totalorder %s20, 1
      %p43 = por %p41, %p42
      %p45 = scmp.ne.s32.totalorder %s28, %s44
      %p46 = scmp.eq.s32.totalorder %s20, 0
      %p47 = por %p45, %p46
      %s49 = sadd.s32 %s48, 1
      %p52 = scmp.eq.s32.totalorder %s14, 1
      %p53 = scmp.ne.s32.totalorder %s48, %s50
      %p54 = scmp.eq.s32.totalorder %s14, 0
      %p55 = por %p53, %p54
      %p56 = scmp.ne.s32.totalorder %s48, %s50
      %p57 = scmp.eq.s32.totalorder %s19, 1
      %p58 = por %p56, %p57
      %p59 = scmp.ne.s32.totalorder %s50, %s51
      %p60 = scmp.eq.s32.totalorder %s19, 0
      %p61 = por %p59, %p60
      %p62 = scmp.ne.s32.totalorder %s50, %s51
      %p63 = scmp.eq.s32.totalorder %s20, 1
      %p64 = por %p62, %p63
      %p66 = scmp.ne.s32.totalorder %s51, %s65
      %p67 = scmp.eq.s32.totalorder %s20, 0
      %p68 = por %p66, %p67
      %s70 = sadd.s32 %s69, 1
      %p73 = scmp.eq.s32.totalorder %s14, 1
      %p74 = scmp.ne.s32.totalorder %s69, %s71
      %p75 = scmp.eq.s32.totalorder %s14, 0
      %p76 = por %p74, %p75
      %p77 = scmp.ne.s32.totalorder %s69, %s71
      %p78 = scmp.eq.s32.totalorder %s19, 1
      %p79 = por %p77, %p78
      %p80 = scmp.ne.s32.totalorder %s71, %s72
      %p81 = scmp.eq.s32.totalorder %s19, 0
      %p82 = por %p80, %p81
      %p83 = scmp.ne.s32.totalorder %s71, %s72
      %p84 = scmp.eq.s32.totalorder %s20, 1
      %p85 = por %p83, %p84
      %p87 = scmp.ne.s32.totalorder %s72, %s86
      %p88 = scmp.eq.s32.totalorder %s20, 0
      %p89 = por %p87, %p88
      %s91 = sadd.s32 %s90, 1
      %p94 = scmp.eq.s32.totalorder %s14, 1
      %p95 = scmp.ne.s32.totalorder %s90, %s92
      %p96 = scmp.eq.s32.totalorder %s14, 0
      %p97 = por %p95, %p96
      %p98 = scmp.ne.s32.totalorder %s90, %s92
      %p99 = scmp.eq.s32.totalorder %s19, 1
      %p100 = por %p98, %p99
      %p101 = scmp.ne.s32.totalorder %s92, %s93
      %p102 = scmp.eq.s32.totalorder %s19, 0
      %p103 = por %p101, %p102
      %p104 = scmp.ne.s32.totalorder %s92, %s93
      %p105 = scmp.eq.s32.totalorder %s20, 1
      %p106 = por %p104, %p105
      %p108 = scmp.ne.s32.totalorder %s93, %s107
      %p109 = scmp.eq.s32.totalorder %s20, 0
      %p110 = por %p108, %p109
      %s112 = sadd.s32 %s111, 1
      %p115 = scmp.eq.s32.totalorder %s14, 1
      %p116 = scmp.ne.s32.totalorder %s111, %s113
      %p117 = scmp.eq.s32.totalorder %s14, 0
      %p118 = por %p116, %p117
      %p119 = scmp.ne.s32.totalorder %s111, %s113
      %p120 = scmp.eq.s32.totalorder %s19, 1
      %p121 = por %p119, %p120
      %p122 = scmp.ne.s32.totalorder %s113, %s114
      %p123 = scmp.eq.s32.totalorder %s19, 0
      %p124 = por %p122, %p123
      %p125 = scmp.ne.s32.totalorder %s113, %s114
      %p126 = scmp.eq.s32.totalorder %s20, 1
      %p127 = por %p125, %p126
      %p129 = scmp.ne.s32.totalorder %s114, %s128
      %p130 = scmp.eq.s32.totalorder %s20, 0
      %p131 = por %p129, %p130
      %s133 = sadd.s32 %s132, 1
      %p136 = scmp.eq.s32.totalorder %s14, 1
      %p137 = scmp.ne.s32.totalorder %s132, %s134
      %p138 = scmp.eq.s32.totalorder %s14, 0
      %p139 = por %p137, %p138
      %p140 = scmp.ne.s32.totalorder %s132, %s134
      %p141 = scmp.eq.s32.totalorder %s19, 1
      %p142 = por %p140, %p141
      %p143 = scmp.ne.s32.totalorder %s134, %s135
      %p144 = scmp.eq.s32.totalorder %s19, 0
      %p145 = por %p143, %p144
      %p146 = scmp.ne.s32.totalorder %s134, %s135
      %p147 = scmp.eq.s32.totalorder %s20, 1
      %p148 = por %p146, %p147
      %p150 = scmp.ne.s32.totalorder %s135, %s149
      %p151 = scmp.eq.s32.totalorder %s20, 0
      %p152 = por %p150, %p151
      %s153 = ssub.s32 %s14, %s21
      %p154 = scmp.eq.s32.totalorder %s153, 0
      %s156 = sadd.s32 %s155, 1
      %s157 = scalar_select %p154, %s155, %s156
      %p160 = pneg %p154
      %p161 = scmp.eq.s32.totalorder %s14, 1
      %p162 = por %p160, %p161
      %p163 = scmp.ne.s32.totalorder %s155, %s158
      %p164 = scmp.eq.s32.totalorder %s14, 0
      %p165 = por %p163, %p164
      %p166 = scmp.ne.s32.totalorder %s155, %s158
      %p167 = scmp.eq.s32.totalorder %s19, 1
      %p168 = por %p166, %p167
      %p169 = scmp.ne.s32.totalorder %s158, %s159
      %p170 = scmp.eq.s32.totalorder %s19, 0
      %p171 = por %p169, %p170
      %p172 = scmp.ne.s32.totalorder %s158, %s159
      %p173 = scmp.eq.s32.totalorder %s20, 1
      %p174 = por %p172, %p173
      %p176 = scmp.ne.s32.totalorder %s159, %s175
      %p177 = scmp.eq.s32.totalorder %s20, 0
      %p178 = por %p176, %p177
      %p179 = scmp.le.s32.totalorder 1, %s14
      %p180 = scmp.lt.s32.totalorder %s14, 3
      %p181 = pnand %p179, %p180
      %p182 = pneg %p181
      // Predicated region
      $region9: #{srnet_forward.1} parent=5 // pred_check
        _
      $region10: #{srnet_forward.1} parent=5 // pred_check_branch
        %184 = sbr.rel (%p181) target = $region12
      $region11: #{srnet_forward.1} parent=5 // pred_region
        %s185 = ssub.s32 %s14, 1
        // Predicated region
        $region13: #{srnet_forward.1} parent=11 // pred_check
          %p186 = pneg %p61
        $region14: #{srnet_forward.1} parent=11 // pred_check_branch
          %188 = sbr.rel (%p186) target = $region16
        $region15: #{srnet_forward.1} parent=11 // pred_region
          _
        $region16: #{srnet_forward.1} parent=11 // pred_fallthru
          _
        // Predicated region
        $region17: #{srnet_forward.1} parent=11 // pred_check
          %p189 = pneg %p82
        $region18: #{srnet_forward.1} parent=11 // pred_check_branch
          %191 = sbr.rel (%p189) target = $region20
        $region19: #{srnet_forward.1} parent=11 // pred_region
          %s193 = ssub.s32 16384, 16384
          %194 = vsyncadd [#allocation4], %s193
          %s195 = sshll.u32 [#allocation3], 4
          %s196 = int_to_ptr.vmem [resolvable:$true] %s195
          %201 = dma.hbm_to_vmem [thread:$0]  %s2, 16384, %s196, [#allocation4], 128, 128, 8
        $region20: #{srnet_forward.1} parent=11 // pred_fallthru
          _
        // Predicated region
        $region21: #{srnet_forward.1} parent=11 // pred_check
          %p202 = pneg %p103
        $region22: #{srnet_forward.1} parent=11 // pred_check_branch
          %204 = sbr.rel (%p202) target = $region24
        $region23: #{srnet_forward.1} parent=11 // pred_region
          %s206 = ssub.s32 1024, 1024
          %207 = vsyncadd [#allocation6], %s206
          %s208 = sshll.u32 [#allocation5], 4
          %s209 = int_to_ptr.vmem [resolvable:$true] %s208
          %214 = dma.hbm_to_vmem [thread:$0]  %s3, 1024, %s209, [#allocation6], 128, 128, 8
        $region24: #{srnet_forward.1} parent=11 // pred_fallthru
          _
        // Predicated region
        $region25: #{srnet_forward.1} parent=11 // pred_check
          %p215 = pneg %p124
        $region26: #{srnet_forward.1} parent=11 // pred_check_branch
          %217 = sbr.rel (%p215) target = $region28
        $region27: #{srnet_forward.1} parent=11 // pred_region
          _
        $region28: #{srnet_forward.1} parent=11 // pred_fallthru
          _
        // Predicated region
        $region29: #{srnet_forward.1} parent=11 // pred_check
          %p218 = pneg %p145
        $region30: #{srnet_forward.1} parent=11 // pred_check_branch
          %220 = sbr.rel (%p218) target = $region32
        $region31: #{srnet_forward.1} parent=11 // pred_region
          _
        $region32: #{srnet_forward.1} parent=11 // pred_fallthru
          _
      $region12: #{srnet_forward.1} parent=5 // pred_fallthru
        _
      %p221 = scmp.lt.s32.totalorder %s14, 2
      // Predicated region
      $region33: #{srnet_forward.1} parent=5 // pred_check
        %p222 = pneg %p221
      $region34: #{srnet_forward.1} parent=5 // pred_check_branch
        %224 = sbr.rel (%p222) target = $region36
      $region35: #{srnet_forward.1} parent=5 // pred_region
        // Predicated region
        $region37: #{srnet_forward.1} parent=35 // pred_check
          %p225 = pneg %p34
        $region38: #{srnet_forward.1} parent=35 // pred_check_branch
          %227 = sbr.rel (%p225) target = $region40
        $region39: #{srnet_forward.1} parent=35 // pred_region
          %s228 = sand.u32 %s24, 1
          %s229 = sand.u32 %s24, 1
          %s230 = smul.addr %s229, 16
          %s231 = scalar_lea.vmem [#allocation2], %s230
          %s232 = smul.u32 2, %s14
          %s233 = smul.addr %s232, 4
          %s234 = scalar_lea.vmem %s0, %s233
          // Predicated region
          $region41: #{srnet_forward.1} parent=39 // pred_check
            _
          $region42: #{srnet_forward.1} parent=39 // pred_check_branch
            %236 = sbr.rel (0) target = $region44
          $region43: #{srnet_forward.1} parent=39 // pred_region
            // Predicated region
            $region45: #{srnet_forward.1} parent=43 // pred_check
              _
            $region46: #{srnet_forward.1} parent=43 // pred_check_branch
              %238 = sbr.rel (0) target = $region48
            $region47: #{srnet_forward.1} parent=43 // pred_region
              // Predicated region
              $region60: #{srnet_forward.1} parent=47 // pred_check
                _
              $region61: #{srnet_forward.1} parent=47 // pred_check_branch
                %255 = sbr.rel (0) target = $region63
              $region62: #{srnet_forward.1} parent=47 // pred_region
                loop: start=0, step=1, limit=1
                $region64: #{srnet_forward.1} parent=62 // loop_pre_header
                  _
                $region65: #{srnet_forward.1} parent=62 // loop_header
                  %s257 = sphi 0, %s261
                  %p258 = scmp.ge.s32.totalorder %s257, 1
                  %s262 = sphi %s234, %s234
                  %s263 = sphi %s231, %s231
                $region66: #{srnet_forward.1} parent=62 // loop_header_branch
                  %260 = sbr.rel (%p258) target = $region70
                $region67: #{srnet_forward.1} parent=62 // loop_body
                  %v264 = vld [vmem:[%s262] sm:$0xff]
                  %265 = vst [vmem:[%s263] sm:$0xff] %v264
                  %v266 = vld [vmem:[%s262 + $0x10] sm:$0xff]
                  %267 = vst [vmem:[%s263 + $0x8] sm:$0xff] %v266
                $region68: #{srnet_forward.1} parent=62 // loop_footer
                  %s261 = sadd.s32 1, %s257
                $region69: #{srnet_forward.1} parent=62 // loop_footer_branch
                  %256 = sbr.rel target = $region65
                $region70: #{srnet_forward.1} parent=62 // loop_exit
                  _
              $region63: #{srnet_forward.1} parent=47 // pred_fallthru
                _
              // Predicated region
              $region71: #{srnet_forward.1} parent=47 // pred_check
                _
              $region72: #{srnet_forward.1} parent=47 // pred_check_branch
                %269 = sbr.rel target = $region74
              $region73: #{srnet_forward.1} parent=47 // pred_region
                _
              $region74: #{srnet_forward.1} parent=47 // pred_fallthru
                _
            $region48: #{srnet_forward.1} parent=43 // pred_fallthru
              _
            // Predicated region
            $region49: #{srnet_forward.1} parent=43 // pred_check
              _
            $region50: #{srnet_forward.1} parent=43 // pred_check_branch
              %240 = sbr.rel target = $region52
            $region51: #{srnet_forward.1} parent=43 // pred_region
              loop: start=0, step=1, limit=1
              $region53: #{srnet_forward.1} parent=51 // loop_pre_header
                _
              $region54: #{srnet_forward.1} parent=51 // loop_header
                %s243 = sphi 0, %s247
                %p244 = scmp.ge.s32.totalorder %s243, 1
                %s248 = sphi %s234, %s234
                %s249 = sphi %s231, %s231
              $region55: #{srnet_forward.1} parent=51 // loop_header_branch
                %246 = sbr.rel (%p244) target = $region59
              $region56: #{srnet_forward.1} parent=51 // loop_body
                %v250 = vld [vmem:[%s248] sm:$0xff]
                %251 = vst [vmem:[%s249] sm:$0xff] %v250
                %v252 = vld [vmem:[%s248 + $0x10] sm:$0xff]
                %253 = vst [vmem:[%s249 + $0x8] sm:$0xff] %v252
              $region57: #{srnet_forward.1} parent=51 // loop_footer
                %s247 = sadd.s32 1, %s243
              $region58: #{srnet_forward.1} parent=51 // loop_footer_branch
                %242 = sbr.rel target = $region54
              $region59: #{srnet_forward.1} parent=51 // loop_exit
                _
            $region52: #{srnet_forward.1} parent=43 // pred_fallthru
              _
          $region44: #{srnet_forward.1} parent=39 // pred_fallthru
            _
          %270 = vnop
        $region40: #{srnet_forward.1} parent=35 // pred_fallthru
          _
      $region36: #{srnet_forward.1} parent=5 // pred_fallthru
        _
      %p271 = scmp.le.s32.totalorder 1, %s14
      %p272 = scmp.lt.s32.totalorder %s14, 3
      %p273 = pnand %p271, %p272
      %p274 = pneg %p273
      // Predicated region
      $region75: #{srnet_forward.1} parent=5 // pred_check
        _
      $region76: #{srnet_forward.1} parent=5 // pred_check_branch
        %276 = sbr.rel (%p273) target = $region78
      $region77: #{srnet_forward.1} parent=5 // pred_region
        %s277 = ssub.s32 %s14, 1
        %s278 = sand.u32 %s27, 1
        %s279 = sand.u32 %s27, 1
        %s280 = smul.addr %s279, 16
        %s281 = scalar_lea.vmem [#allocation2], %s280
        // Predicated region
        $region79: #{srnet_forward.1} parent=77 // pred_check
          %p282 = pneg %p40
        $region80: #{srnet_forward.1} parent=77 // pred_check_branch
          %284 = sbr.rel (%p282) target = $region82
        $region81: #{srnet_forward.1} parent=77 // pred_region
          _
        $region82: #{srnet_forward.1} parent=77 // pred_fallthru
          _
        // Predicated region
        $region83: #{srnet_forward.1} parent=77 // pred_check
          %p285 = pneg %p82
        $region84: #{srnet_forward.1} parent=77 // pred_check_branch
          %287 = sbr.rel (%p285) target = $region86
        $region85: #{srnet_forward.1} parent=77 // pred_region
          %288 = dma.done [#allocation4], 16384
        $region86: #{srnet_forward.1} parent=77 // pred_fallthru
          _
        // Predicated region
        $region87: #{srnet_forward.1} parent=77 // pred_check
          %p289 = pneg %p103
        $region88: #{srnet_forward.1} parent=77 // pred_check_branch
          %291 = sbr.rel (%p289) target = $region90
        $region89: #{srnet_forward.1} parent=77 // pred_region
          %292 = dma.done [#allocation6], 1024
        $region90: #{srnet_forward.1} parent=77 // pred_fallthru
          _
        %s293 = sand.u32 %s27, 1
        %s294 = sand.u32 %s27, 1
        %s295 = smul.addr %s294, 16
        %s296 = scalar_lea.vmem [#allocation2], %s295
        %p297 = pneg %p40
        %p298 = pneg %p37
        %p299 = pneg %p61
        %p300 = pneg %p58
        %p301 = pneg %p82
        %p302 = pneg %p79
        %p303 = pneg %p103
        %p304 = pneg %p100
        %p305 = pneg %p124
        %p306 = pneg %p121
        %p307 = pneg %p145
        %p308 = pneg %p142
        %p309 = pneg %p171
        %p310 = pneg %p168
        %s311 = sand.u32 %s158, 1
        %s312 = sand.u32 %s158, 1
        %s313 = smul.addr %s312, 64
        %s314 = scalar_lea.vmem [#allocation7], %s313
        %s315 = smul.u32 2, %s19
        %s316 = smul.u32 2, %s19
        %v318 = vld [vmem:[%s1] sm:$0xf]
        %v319 = vld [vmem:[%s1 + $0x4] sm:$0xf]
        %v320 = vld [vmem:[%s1 + $0x8] sm:$0xf]
        %v321 = vld [vmem:[%s1 + $0xc] sm:$0xf]
        %v322 = vld [vmem:[%s1 + $0x10] sm:$0xf]
        %v323 = vld [vmem:[%s1 + $0x14] sm:$0xf]
        %v324 = vld [vmem:[%s1 + $0x18] sm:$0xf]
        %v325 = vld [vmem:[%s1 + $0x1c] sm:$0xf]
        %v326 = vld [vmem:[%s1 + $0x20] sm:$0xf]
        %v327 = vld [vmem:[%s1 + $0x24] sm:$0xf]
        %v328 = vld [vmem:[%s1 + $0x28] sm:$0xf]
        %v329 = vld [vmem:[%s1 + $0x2c] sm:$0xf]
        %v330 = vld [vmem:[%s1 + $0x30] sm:$0xf]
        %v331 = vld [vmem:[%s1 + $0x34] sm:$0xf]
        %v332 = vld [vmem:[%s1 + $0x38] sm:$0xf]
        %v333 = vld [vmem:[%s1 + $0x3c] sm:$0xf]
        %v334 = vld [vmem:[%s1 + $0x40] sm:$0xf]
        %v335 = vld [vmem:[%s1 + $0x44] sm:$0xf]
        %v336 = vld [vmem:[%s1 + $0x48] sm:$0xf]
        %v337 = vld [vmem:[%s1 + $0x4c] sm:$0xf]
        %v338 = vld [vmem:[%s1 + $0x50] sm:$0xf]
        %v339 = vld [vmem:[%s1 + $0x54] sm:$0xf]
        %v340 = vld [vmem:[%s1 + $0x58] sm:$0xf]
        %v341 = vld [vmem:[%s1 + $0x5c] sm:$0xf]
        %v342 = vld [vmem:[%s1 + $0x60] sm:$0xf]
        %v343 = vld [vmem:[%s1 + $0x64] sm:$0xf]
        %v344 = vld [vmem:[%s1 + $0x68] sm:$0xf]
        %v345 = vld [vmem:[%s1 + $0x6c] sm:$0xf]
        %v346 = vld [vmem:[%s1 + $0x70] sm:$0xf]
        %v347 = vld [vmem:[%s1 + $0x74] sm:$0xf]
        %v348 = vld [vmem:[%s1 + $0x78] sm:$0xf]
        %v349 = vld [vmem:[%s1 + $0x7c] sm:$0xf]
        %v350 = vld [vmem:[%s281] sm:$0xff]
        %v351 = vld [vmem:[%s281 + $0x8] sm:$0xff]
        %v352 = vld [vmem:[%s4] sm:$0xff]
        %v353 = vld [vmem:[%s4 + $0x8] sm:$0xff]
        %v354 = vld [vmem:[%s4 + $0x10] sm:$0xff]
        %v355 = vld [vmem:[%s4 + $0x18] sm:$0xff]
        %v356 = vld [vmem:[%s4 + $0x20] sm:$0xff]
        %v357 = vld [vmem:[%s4 + $0x28] sm:$0xff]
        %v358 = vld [vmem:[%s4 + $0x30] sm:$0xff]
        %v359 = vld [vmem:[%s4 + $0x38] sm:$0xff]
        %v360 = vld [vmem:[%s4 + $0x40] sm:$0xff]
        %v361 = vld [vmem:[%s4 + $0x48] sm:$0xff]
        %v362 = vld [vmem:[%s4 + $0x50] sm:$0xff]
        %v363 = vld [vmem:[%s4 + $0x58] sm:$0xff]
        %v364 = vld [vmem:[%s4 + $0x60] sm:$0xff]
        %v365 = vld [vmem:[%s4 + $0x68] sm:$0xff]
        %v366 = vld [vmem:[%s4 + $0x70] sm:$0xff]
        %v367 = vld [vmem:[%s4 + $0x78] sm:$0xff]
        %v368 = vld [vmem:[%s4 + $0x80] sm:$0xff]
        %v369 = vld [vmem:[%s4 + $0x88] sm:$0xff]
        %v370 = vld [vmem:[%s4 + $0x90] sm:$0xff]
        %v371 = vld [vmem:[%s4 + $0x98] sm:$0xff]
        %v372 = vld [vmem:[%s4 + $0xa0] sm:$0xff]
        %v373 = vld [vmem:[%s4 + $0xa8] sm:$0xff]
        %v374 = vld [vmem:[%s4 + $0xb0] sm:$0xff]
        %v375 = vld [vmem:[%s4 + $0xb8] sm:$0xff]
        %v376 = vld [vmem:[%s4 + $0xc0] sm:$0xff]
        %v377 = vld [vmem:[%s4 + $0xc8] sm:$0xff]
        %v378 = vld [vmem:[%s4 + $0xd0] sm:$0xff]
        %v379 = vld [vmem:[%s4 + $0xd8] sm:$0xff]
        %v380 = vld [vmem:[%s4 + $0xe0] sm:$0xff]
        %v381 = vld [vmem:[%s4 + $0xe8] sm:$0xff]
        %v382 = vld [vmem:[%s4 + $0xf0] sm:$0xff]
        %v383 = vld [vmem:[%s4 + $0xf8] sm:$0xff]
        %385 = vset.pattern.permute.xlu0 0
        %386 = vperm.xlu0 %385, %v352
        %v387 = vpop.permute.xlu0 %386
        %390 = vset.pattern.permute.xlu0 0
        %391 = vperm.xlu0 %390, %v353
        %v392 = vpop.permute.xlu0 %391
        %395 = vset.pattern.permute.xlu0 0
        %396 = vperm.xlu0 %395, %v354
        %v397 = vpop.permute.xlu0 %396
        %400 = vset.pattern.permute.xlu0 0
        %401 = vperm.xlu0 %400, %v355
        %v402 = vpop.permute.xlu0 %401
        %405 = vset.pattern.permute.xlu0 0
        %406 = vperm.xlu0 %405, %v356
        %v407 = vpop.permute.xlu0 %406
        %410 = vset.pattern.permute.xlu0 0
        %411 = vperm.xlu0 %410, %v357
        %v412 = vpop.permute.xlu0 %411
        %415 = vset.pattern.permute.xlu0 0
        %416 = vperm.xlu0 %415, %v358
        %v417 = vpop.permute.xlu0 %416
        %420 = vset.pattern.permute.xlu0 0
        %421 = vperm.xlu0 %420, %v359
        %v422 = vpop.permute.xlu0 %421
        %425 = vset.pattern.permute.xlu0 0
        %426 = vperm.xlu0 %425, %v360
        %v427 = vpop.permute.xlu0 %426
        %430 = vset.pattern.permute.xlu0 0
        %431 = vperm.xlu0 %430, %v361
        %v432 = vpop.permute.xlu0 %431
        %435 = vset.pattern.permute.xlu0 0
        %436 = vperm.xlu0 %435, %v362
        %v437 = vpop.permute.xlu0 %436
        %440 = vset.pattern.permute.xlu0 0
        %441 = vperm.xlu0 %440, %v363
        %v442 = vpop.permute.xlu0 %441
        %445 = vset.pattern.permute.xlu0 0
        %446 = vperm.xlu0 %445, %v364
        %v447 = vpop.permute.xlu0 %446
        %450 = vset.pattern.permute.xlu0 0
        %451 = vperm.xlu0 %450, %v365
        %v452 = vpop.permute.xlu0 %451
        %455 = vset.pattern.permute.xlu0 0
        %456 = vperm.xlu0 %455, %v366
        %v457 = vpop.permute.xlu0 %456
        %460 = vset.pattern.permute.xlu0 0
        %461 = vperm.xlu0 %460, %v367
        %v462 = vpop.permute.xlu0 %461
        %465 = vset.pattern.permute.xlu0 0
        %466 = vperm.xlu0 %465, %v368
        %v467 = vpop.permute.xlu0 %466
        %470 = vset.pattern.permute.xlu0 0
        %471 = vperm.xlu0 %470, %v369
        %v472 = vpop.permute.xlu0 %471
        %475 = vset.pattern.permute.xlu0 0
        %476 = vperm.xlu0 %475, %v370
        %v477 = vpop.permute.xlu0 %476
        %480 = vset.pattern.permute.xlu0 0
        %481 = vperm.xlu0 %480, %v371
        %v482 = vpop.permute.xlu0 %481
        %485 = vset.pattern.permute.xlu0 0
        %486 = vperm.xlu0 %485, %v372
        %v487 = vpop.permute.xlu0 %486
        %490 = vset.pattern.permute.xlu0 0
        %491 = vperm.xlu0 %490, %v373
        %v492 = vpop.permute.xlu0 %491
        %495 = vset.pattern.permute.xlu0 0
        %496 = vperm.xlu0 %495, %v374
        %v497 = vpop.permute.xlu0 %496
        %500 = vset.pattern.permute.xlu0 0
        %501 = vperm.xlu0 %500, %v375
        %v502 = vpop.permute.xlu0 %501
        %505 = vset.pattern.permute.xlu0 0
        %506 = vperm.xlu0 %505, %v376
        %v507 = vpop.permute.xlu0 %506
        %510 = vset.pattern.permute.xlu0 0
        %511 = vperm.xlu0 %510, %v377
        %v512 = vpop.permute.xlu0 %511
        %515 = vset.pattern.permute.xlu0 0
        %516 = vperm.xlu0 %515, %v378
        %v517 = vpop.permute.xlu0 %516
        %520 = vset.pattern.permute.xlu0 0
        %521 = vperm.xlu0 %520, %v379
        %v522 = vpop.permute.xlu0 %521
        %525 = vset.pattern.permute.xlu0 0
        %526 = vperm.xlu0 %525, %v380
        %v527 = vpop.permute.xlu0 %526
        %530 = vset.pattern.permute.xlu0 0
        %531 = vperm.xlu0 %530, %v381
        %v532 = vpop.permute.xlu0 %531
        %535 = vset.pattern.permute.xlu0 0
        %536 = vperm.xlu0 %535, %v382
        %v537 = vpop.permute.xlu0 %536
        %540 = vset.pattern.permute.xlu0 0
        %541 = vperm.xlu0 %540, %v383
        %v542 = vpop.permute.xlu0 %541
        %v576 = vunpack.c.l.b16 %v318
        %v577 = vunpack.c.l.b16 %v319
        %v578 = vunpack.c.l.b16 %v320
        %v579 = vunpack.c.l.b16 %v321
        %v580 = vunpack.c.l.b16 %v322
        %v581 = vunpack.c.l.b16 %v323
        %v582 = vunpack.c.l.b16 %v324
        %v583 = vunpack.c.l.b16 %v325
        %v584 = vunpack.c.l.b16 %v326
        %v585 = vunpack.c.l.b16 %v327
        %v586 = vunpack.c.l.b16 %v328
        %v587 = vunpack.c.l.b16 %v329
        %v588 = vunpack.c.l.b16 %v330
        %v589 = vunpack.c.l.b16 %v331
        %v590 = vunpack.c.l.b16 %v332
        %v591 = vunpack.c.l.b16 %v333
        %v592 = vunpack.c.l.b16 %v334
        %v593 = vunpack.c.l.b16 %v335
        %v594 = vunpack.c.l.b16 %v336
        %v595 = vunpack.c.l.b16 %v337
        %v596 = vunpack.c.l.b16 %v338
        %v597 = vunpack.c.l.b16 %v339
        %v598 = vunpack.c.l.b16 %v340
        %v599 = vunpack.c.l.b16 %v341
        %v600 = vunpack.c.l.b16 %v342
        %v601 = vunpack.c.l.b16 %v343
        %v602 = vunpack.c.l.b16 %v344
        %v603 = vunpack.c.l.b16 %v345
        %v604 = vunpack.c.l.b16 %v346
        %v605 = vunpack.c.l.b16 %v347
        %v606 = vunpack.c.l.b16 %v348
        %v607 = vunpack.c.l.b16 %v349
        %v608 = vpack.c.b16 %v577, %v576
        %v609 = vpack.c.b16 %v579, %v578
        %v610 = vpack.c.b16 %v581, %v580
        %v611 = vpack.c.b16 %v583, %v582
        %v612 = vpack.c.b16 %v585, %v584
        %v613 = vpack.c.b16 %v587, %v586
        %v614 = vpack.c.b16 %v589, %v588
        %v615 = vpack.c.b16 %v591, %v590
        %v616 = vpack.c.b16 %v593, %v592
        %v617 = vpack.c.b16 %v595, %v594
        %v618 = vpack.c.b16 %v597, %v596
        %v619 = vpack.c.b16 %v599, %v598
        %v620 = vpack.c.b16 %v601, %v600
        %v621 = vpack.c.b16 %v603, %v602
        %v622 = vpack.c.b16 %v605, %v604
        %v623 = vpack.c.b16 %v607, %v606
        %v626 = vunpack.c.l.b16 %v350
        %v627 = vunpack.c.h.b16 %v350
        %v628 = vunpack.c.l.b16 %v351
        %v629 = vunpack.c.h.b16 %v351
        %v630 = vpack.c.b16 %v628, %v626
        %v631 = vpack.c.b16 %v629, %v627
        %vm634 = vcmask 130048
        %v636 = vsel %vm634, %v608, 0
        %v639 = vsel %vm634, %v609, 0
        %v642 = vsel %vm634, %v610, 0
        %v645 = vsel %vm634, %v611, 0
        %v648 = vsel %vm634, %v612, 0
        %v651 = vsel %vm634, %v613, 0
        %v654 = vsel %vm634, %v614, 0
        %v657 = vsel %vm634, %v615, 0
        %v660 = vsel %vm634, %v616, 0
        %v663 = vsel %vm634, %v617, 0
        %v666 = vsel %vm634, %v618, 0
        %v669 = vsel %vm634, %v619, 0
        %v672 = vsel %vm634, %v620, 0
        %v675 = vsel %vm634, %v621, 0
        %v678 = vsel %vm634, %v622, 0
        %v681 = vsel %vm634, %v623, 0
        %683 = vmatprep.subr.bf16.mxu0 %v631
        %684 = vmatpush1.bf16.msra.mxu0 %v630
        %685 = vmatprep.subr.bf16.mxu0 0
        %686 = vmatpush1.bf16.msra.mxu0 0
        %687 = vmatprep.subr.bf16.mxu0 0
        %688 = vmatpush1.bf16.msra.mxu0 0
        %689 = vmatprep.subr.bf16.mxu0 0
        %690 = vmatpush1.bf16.msra.mxu0 0
        %691 = vmatprep.subr.bf16.mxu0 0
        %692 = vmatpush1.bf16.msra.mxu0 0
        %693 = vmatprep.subr.bf16.mxu0 0
        %694 = vmatpush1.bf16.msra.mxu0 0
        %695 = vmatprep.subr.bf16.mxu0 0
        %696 = vmatpush1.bf16.msra.mxu0 0
        %697 = vmatprep.subr.bf16.mxu0 0
        %698 = vmatpush1.bf16.msra.mxu0 0
        %699 = vmatprep.subr.bf16.mxu0 0
        %700 = vmatpush1.bf16.msra.mxu0 0
        %701 = vmatprep.subr.bf16.mxu0 0
        %702 = vmatpush1.bf16.msra.mxu0 0
        %703 = vmatprep.subr.bf16.mxu0 0
        %704 = vmatpush1.bf16.msra.mxu0 0
        %705 = vmatprep.subr.bf16.mxu0 0
        %706 = vmatpush1.bf16.msra.mxu0 0
        %707 = vmatprep.subr.bf16.mxu0 0
        %708 = vmatpush1.bf16.msra.mxu0 0
        %709 = vmatprep.subr.bf16.mxu0 0
        %710 = vmatpush1.bf16.msra.mxu0 0
        %711 = vmatprep.subr.bf16.mxu0 0
        %712 = vmatpush1.bf16.msra.mxu0 0
        %713 = vmatprep.subr.bf16.mxu0 0
        %714 = vmatpush1.bf16.msra.mxu0 0
        %715 = vmatprep.mubr.bf16.mxu0 0
        %716 = vmatmul.mubr.bf16.gmra.mrb[0].mxu0 %v636
        %v717 = vpop.f32.mrb[0].mxu0
        %v718 = vadd.f32 %v387, %v717
        %v719 = vpop.f32.mrb[0].mxu0
        %v720 = vadd.f32 %v387, %v719
        %v721 = vpop.f32.mrb[0].mxu0
        %v722 = vadd.f32 %v392, %v721
        %v723 = vpop.f32.mrb[0].mxu0
        %v724 = vadd.f32 %v392, %v723
        %725 = vmatprep.mubr.bf16.mxu0 0
        %726 = vmatmul.mubr.bf16.gmra.mrb[0].mxu0 %v639
        %v727 = vpop.f32.mrb[0].mxu0
        %v728 = vadd.f32 %v397, %v727
        %v729 = vpop.f32.mrb[0].mxu0
        %v730 = vadd.f32 %v397, %v729
        %v731 = vpop.f32.mrb[0].mxu0
        %v732 = vadd.f32 %v402, %v731
        %v733 = vpop.f32.mrb[0].mxu0
        %v734 = vadd.f32 %v402, %v733
        %735 = vmatprep.mubr.bf16.mxu0 0
        %736 = vmatmul.mubr.bf16.gmra.mrb[0].mxu0 %v642
        %v737 = vpop.f32.mrb[0].mxu0
        %v738 = vadd.f32 %v407, %v737
        %v739 = vpop.f32.mrb[0].mxu0
        %v740 = vadd.f32 %v407, %v739
        %v741 = vpop.f32.mrb[0].mxu0
        %v742 = vadd.f32 %v412, %v741
        %v743 = vpop.f32.mrb[0].mxu0
        %v744 = vadd.f32 %v412, %v743
        %745 = vmatprep.mubr.bf16.mxu0 0
        %746 = vmatmul.mubr.bf16.gmra.mrb[0].mxu0 %v645
        %v747 = vpop.f32.mrb[0].mxu0
        %v748 = vadd.f32 %v417, %v747
        %v749 = vpop.f32.mrb[0].mxu0
        %v750 = vadd.f32 %v417, %v749
        %v751 = vpop.f32.mrb[0].mxu0
        %v752 = vadd.f32 %v422, %v751
        %v753 = vpop.f32.mrb[0].mxu0
        %v754 = vadd.f32 %v422, %v753
        %755 = vmatprep.mubr.bf16.mxu0 0
        %756 = vmatmul.mubr.bf16.gmra.mrb[0].mxu0 %v648
        %v757 = vpop.f32.mrb[0].mxu0
        %v758 = vadd.f32 %v427, %v757
        %v759 = vpop.f32.mrb[0].mxu0
        %v760 = vadd.f32 %v427, %v759
        %v761 = vpop.f32.mrb[0].mxu0
        %v762 = vadd.f32 %v432, %v761
        %v763 = vpop.f32.mrb[0].mxu0
        %v764 = vadd.f32 %v432, %v763
        %765 = vmatprep.mubr.bf16.mxu0 0
        %766 = vmatmul.mubr.bf16.gmra.mrb[0].mxu0 %v651
        %v767 = vpop.f32.mrb[0].mxu0
        %v768 = vadd.f32 %v437, %v767
        %v769 = vpop.f32.mrb[0].mxu0
        %v770 = vadd.f32 %v437, %v769
        %v771 = vpop.f32.mrb[0].mxu0
        %v772 = vadd.f32 %v442, %v771
        %v773 = vpop.f32.mrb[0].mxu0
        %v774 = vadd.f32 %v442, %v773
        %775 = vmatprep.mubr.bf16.mxu0 0
        %776 = vmatmul.mubr.bf16.gmra.mrb[0].mxu0 %v654
        %v777 = vpop.f32.mrb[0].mxu0
        %v778 = vadd.f32 %v447, %v777
        %v779 = vpop.f32.mrb[0].mxu0
        %v780 = vadd.f32 %v447, %v779
        %v781 = vpop.f32.mrb[0].mxu0
        %v782 = vadd.f32 %v452, %v781
        %v783 = vpop.f32.mrb[0].mxu0
        %v784 = vadd.f32 %v452, %v783
        %785 = vmatprep.mubr.bf16.mxu0 0
        %786 = vmatmul.mubr.bf16.gmra.mrb[0].mxu0 %v657
        %v787 = vpop.f32.mrb[0].mxu0
        %v788 = vadd.f32 %v457, %v787
        %v789 = vpop.f32.mrb[0].mxu0
        %v790 = vadd.f32 %v457, %v789
        %v791 = vpop.f32.mrb[0].mxu0
        %v792 = vadd.f32 %v462, %v791
        %v793 = vpop.f32.mrb[0].mxu0
        %v794 = vadd.f32 %v462, %v793
        %795 = vmatprep.mubr.bf16.mxu0 0
        %796 = vmatmul.mubr.bf16.gmra.mrb[0].mxu0 %v660
        %v797 = vpop.f32.mrb[0].mxu0
        %v798 = vadd.f32 %v467, %v797
        %v799 = vpop.f32.mrb[0].mxu0
        %v800 = vadd.f32 %v467, %v799
        %v801 = vpop.f32.mrb[0].mxu0
        %v802 = vadd.f32 %v472, %v801
        %v803 = vpop.f32.mrb[0].mxu0
        %v804 = vadd.f32 %v472, %v803
        %805 = vmatprep.mubr.bf16.mxu0 0
        %806 = vmatmul.mubr.bf16.gmra.mrb[0].mxu0 %v663
        %v807 = vpop.f32.mrb[0].mxu0
        %v808 = vadd.f32 %v477, %v807
        %v809 = vpop.f32.mrb[0].mxu0
        %v810 = vadd.f32 %v477, %v809
        %v811 = vpop.f32.mrb[0].mxu0
        %v812 = vadd.f32 %v482, %v811
        %v813 = vpop.f32.mrb[0].mxu0
        %v814 = vadd.f32 %v482, %v813
        %815 = vmatprep.mubr.bf16.mxu0 0
        %816 = vmatmul.mubr.bf16.gmra.mrb[0].mxu0 %v666
        %v817 = vpop.f32.mrb[0].mxu0
        %v818 = vadd.f32 %v487, %v817
        %v819 = vpop.f32.mrb[0].mxu0
        %v820 = vadd.f32 %v487, %v819
        %v821 = vpop.f32.mrb[0].mxu0
        %v822 = vadd.f32 %v492, %v821
        %v823 = vpop.f32.mrb[0].mxu0
        %v824 = vadd.f32 %v492, %v823
        %825 = vmatprep.mubr.bf16.mxu0 0
        %826 = vmatmul.mubr.bf16.gmra.mrb[0].mxu0 %v669
        %v827 = vpop.f32.mrb[0].mxu0
        %v828 = vadd.f32 %v497, %v827
        %v829 = vpop.f32.mrb[0].mxu0
        %v830 = vadd.f32 %v497, %v829
        %v831 = vpop.f32.mrb[0].mxu0
        %v832 = vadd.f32 %v502, %v831
        %v833 = vpop.f32.mrb[0].mxu0
        %v834 = vadd.f32 %v502, %v833
        %835 = vmatprep.mubr.bf16.mxu0 0
        %836 = vmatmul.mubr.bf16.gmra.mrb[0].mxu0 %v672
        %v837 = vpop.f32.mrb[0].mxu0
        %v838 = vadd.f32 %v507, %v837
        %v839 = vpop.f32.mrb[0].mxu0
        %v840 = vadd.f32 %v507, %v839
        %v841 = vpop.f32.mrb[0].mxu0
        %v842 = vadd.f32 %v512, %v841
        %v843 = vpop.f32.mrb[0].mxu0
        %v844 = vadd.f32 %v512, %v843
        %845 = vmatprep.mubr.bf16.mxu0 0
        %846 = vmatmul.mubr.bf16.gmra.mrb[0].mxu0 %v675
        %v847 = vpop.f32.mrb[0].mxu0
        %v848 = vadd.f32 %v517, %v847
        %v849 = vpop.f32.mrb[0].mxu0
        %v850 = vadd.f32 %v517, %v849
        %v851 = vpop.f32.mrb[0].mxu0
        %v852 = vadd.f32 %v522, %v851
        %v853 = vpop.f32.mrb[0].mxu0
        %v854 = vadd.f32 %v522, %v853
        %855 = vmatprep.mubr.bf16.mxu0 0
        %856 = vmatmul.mubr.bf16.gmra.mrb[0].mxu0 %v678
        %v857 = vpop.f32.mrb[0].mxu0
        %v858 = vadd.f32 %v527, %v857
        %v859 = vpop.f32.mrb[0].mxu0
        %v860 = vadd.f32 %v527, %v859
        %v861 = vpop.f32.mrb[0].mxu0
        %v862 = vadd.f32 %v532, %v861
        %v863 = vpop.f32.mrb[0].mxu0
        %v864 = vadd.f32 %v532, %v863
        %865 = vmatprep.mubr.bf16.mxu0 0
        %866 = vmatmul.mubr.bf16.gmra.mrb[0].mxu0 %v681
        %v867 = vpop.f32.mrb[0].mxu0
        %v868 = vadd.f32 %v537, %v867
        %v869 = vpop.f32.mrb[0].mxu0
        %v870 = vadd.f32 %v537, %v869
        %v871 = vpop.f32.mrb[0].mxu0
        %v872 = vadd.f32 %v542, %v871
        %v873 = vpop.f32.mrb[0].mxu0
        %v874 = vadd.f32 %v542, %v873
        %875 = vdwg.mxu0
        %v876 = vmax.f32 %v718, 0.0
        %v877 = vmax.f32 %v720, 0.0
        %v878 = vmax.f32 %v722, 0.0
        %v879 = vmax.f32 %v724, 0.0
        %v880 = vmax.f32 %v728, 0.0
        %v881 = vmax.f32 %v730, 0.0
        %v882 = vmax.f32 %v732, 0.0
        %v883 = vmax.f32 %v734, 0.0
        %v884 = vmax.f32 %v738, 0.0
        %v885 = vmax.f32 %v740, 0.0
        %v886 = vmax.f32 %v742, 0.0
        %v887 = vmax.f32 %v744, 0.0
        %v888 = vmax.f32 %v748, 0.0
        %v889 = vmax.f32 %v750, 0.0
        %v890 = vmax.f32 %v752, 0.0
        %v891 = vmax.f32 %v754, 0.0
        %v892 = vmax.f32 %v758, 0.0
        %v893 = vmax.f32 %v760, 0.0
        %v894 = vmax.f32 %v762, 0.0
        %v895 = vmax.f32 %v764, 0.0
        %v896 = vmax.f32 %v768, 0.0
        %v897 = vmax.f32 %v770, 0.0
        %v898 = vmax.f32 %v772, 0.0
        %v899 = vmax.f32 %v774, 0.0
        %v900 = vmax.f32 %v778, 0.0
        %v901 = vmax.f32 %v780, 0.0
        %v902 = vmax.f32 %v782, 0.0
        %v903 = vmax.f32 %v784, 0.0
        %v904 = vmax.f32 %v788, 0.0
        %v905 = vmax.f32 %v790, 0.0
        %v906 = vmax.f32 %v792, 0.0
        %v907 = vmax.f32 %v794, 0.0
        %v908 = vmax.f32 %v798, 0.0
        %v909 = vmax.f32 %v800, 0.0
        %v910 = vmax.f32 %v802, 0.0
        %v911 = vmax.f32 %v804, 0.0
        %v912 = vmax.f32 %v808, 0.0
        %v913 = vmax.f32 %v810, 0.0
        %v914 = vmax.f32 %v812, 0.0
        %v915 = vmax.f32 %v814, 0.0
        %v916 = vmax.f32 %v818, 0.0
        %v917 = vmax.f32 %v820, 0.0
        %v918 = vmax.f32 %v822, 0.0
        %v919 = vmax.f32 %v824, 0.0
        %v920 = vmax.f32 %v828, 0.0
        %v921 = vmax.f32 %v830, 0.0
        %v922 = vmax.f32 %v832, 0.0
        %v923 = vmax.f32 %v834, 0.0
        %v924 = vmax.f32 %v838, 0.0
        %v925 = vmax.f32 %v840, 0.0
        %v926 = vmax.f32 %v842, 0.0
        %v927 = vmax.f32 %v844, 0.0
        %v928 = vmax.f32 %v848, 0.0
        %v929 = vmax.f32 %v850, 0.0
        %v930 = vmax.f32 %v852, 0.0
        %v931 = vmax.f32 %v854, 0.0
        %v932 = vmax.f32 %v858, 0.0
        %v933 = vmax.f32 %v860, 0.0
        %v934 = vmax.f32 %v862, 0.0
        %v935 = vmax.f32 %v864, 0.0
        %v936 = vmax.f32 %v868, 0.0
        %v937 = vmax.f32 %v870, 0.0
        %v938 = vmax.f32 %v872, 0.0
        %v939 = vmax.f32 %v874, 0.0
        %v940 = vpack.c.bf16 %v878, %v876
        %v941 = vpack.c.bf16 %v879, %v877
        %v942 = vpack.c.bf16 %v882, %v880
        %v943 = vpack.c.bf16 %v883, %v881
        %v944 = vpack.c.bf16 %v886, %v884
        %v945 = vpack.c.bf16 %v887, %v885
        %v946 = vpack.c.bf16 %v890, %v888
        %v947 = vpack.c.bf16 %v891, %v889
        %v948 = vpack.c.bf16 %v894, %v892
        %v949 = vpack.c.bf16 %v895, %v893
        %v950 = vpack.c.bf16 %v898, %v896
        %v951 = vpack.c.bf16 %v899, %v897
        %v952 = vpack.c.bf16 %v902, %v900
        %v953 = vpack.c.bf16 %v903, %v901
        %v954 = vpack.c.bf16 %v906, %v904
        %v955 = vpack.c.bf16 %v907, %v905
        %v956 = vpack.c.bf16 %v910, %v908
        %v957 = vpack.c.bf16 %v911, %v909
        %v958 = vpack.c.bf16 %v914, %v912
        %v959 = vpack.c.bf16 %v915, %v913
        %v960 = vpack.c.bf16 %v918, %v916
        %v961 = vpack.c.bf16 %v919, %v917
        %v962 = vpack.c.bf16 %v922, %v920
        %v963 = vpack.c.bf16 %v923, %v921
        %v964 = vpack.c.bf16 %v926, %v924
        %v965 = vpack.c.bf16 %v927, %v925
        %v966 = vpack.c.bf16 %v930, %v928
        %v967 = vpack.c.bf16 %v931, %v929
        %v968 = vpack.c.bf16 %v934, %v932
        %v969 = vpack.c.bf16 %v935, %v933
        %v970 = vpack.c.bf16 %v938, %v936
        %v971 = vpack.c.bf16 %v939, %v937
        %v972 = vld [vmem:[#allocation3] sm:$0xff]
        %v973 = vld [vmem:[#allocation3 + $0x8] sm:$0xff]
        %v974 = vld [vmem:[#allocation3 + $0x10] sm:$0xff]
        %v975 = vld [vmem:[#allocation3 + $0x18] sm:$0xff]
        %v976 = vld [vmem:[#allocation3 + $0x20] sm:$0xff]
        %v977 = vld [vmem:[#allocation3 + $0x28] sm:$0xff]
        %v978 = vld [vmem:[#allocation3 + $0x30] sm:$0xff]
        %v979 = vld [vmem:[#allocation3 + $0x38] sm:$0xff]
        %v980 = vld [vmem:[#allocation3 + $0x40] sm:$0xff]
        %v981 = vld [vmem:[#allocation3 + $0x48] sm:$0xff]
        %v982 = vld [vmem:[#allocation3 + $0x50] sm:$0xff]
        %v983 = vld [vmem:[#allocation3 + $0x58] sm:$0xff]
        %v984 = vld [vmem:[#allocation3 + $0x60] sm:$0xff]
        %v985 = vld [vmem:[#allocation3 + $0x68] sm:$0xff]
        %v986 = vld [vmem:[#allocation3 + $0x70] sm:$0xff]
        %v987 = vld [vmem:[#allocation3 + $0x78] sm:$0xff]
        %v988 = vld [vmem:[#allocation3 + $0x80] sm:$0xff]
        %v989 = vld [vmem:[#allocation3 + $0x88] sm:$0xff]
        %v990 = vld [vmem:[#allocation3 + $0x90] sm:$0xff]
        %v991 = vld [vmem:[#allocation3 + $0x98] sm:$0xff]
        %v992 = vld [vmem:[#allocation3 + $0xa0] sm:$0xff]
        %v993 = vld [vmem:[#allocation3 + $0xa8] sm:$0xff]
        %v994 = vld [vmem:[#allocation3 + $0xb0] sm:$0xff]
        %v995 = vld [vmem:[#allocation3 + $0xb8] sm:$0xff]
        %v996 = vld [vmem:[#allocation3 + $0xc0] sm:$0xff]
        %v997 = vld [vmem:[#allocation3 + $0xc8] sm:$0xff]
        %v998 = vld [vmem:[#allocation3 + $0xd0] sm:$0xff]
        %v999 = vld [vmem:[#allocation3 + $0xd8] sm:$0xff]
        %v1000 = vld [vmem:[#allocation3 + $0xe0] sm:$0xff]
        %v1001 = vld [vmem:[#allocation3 + $0xe8] sm:$0xff]
        %v1002 = vld [vmem:[#allocation3 + $0xf0] sm:$0xff]
        %v1003 = vld [vmem:[#allocation3 + $0xf8] sm:$0xff]
        %1004 = vset.pattern.permute.xlu0 1
        %1005 = vperm.xlu0 %1004, %v352
        %v1006 = vpop.permute.xlu0 %1005
        %1008 = vset.pattern.permute.xlu0 1
        %1009 = vperm.xlu0 %1008, %v353
        %v1010 = vpop.permute.xlu0 %1009
        %1012 = vset.pattern.permute.xlu0 1
        %1013 = vperm.xlu0 %1012, %v354
        %v1014 = vpop.permute.xlu0 %1013
        %1016 = vset.pattern.permute.xlu0 1
        %1017 = vperm.xlu0 %1016, %v355
        %v1018 = vpop.permute.xlu0 %1017
        %1020 = vset.pattern.permute.xlu0 1
        %1021 = vperm.xlu0 %1020, %v356
        %v1022 = vpop.permute.xlu0 %1021
        %1024 = vset.pattern.permute.xlu0 1
        %1025 = vperm.xlu0 %1024, %v357
        %v1026 = vpop.permute.xlu0 %1025
        %1028 = vset.pattern.permute.xlu0 1
        %1029 = vperm.xlu0 %1028, %v358
        %v1030 = vpop.permute.xlu0 %1029
        %1032 = vset.pattern.permute.xlu0 1
        %1033 = vperm.xlu0 %1032, %v359
        %v1034 = vpop.permute.xlu0 %1033
        %1036 = vset.pattern.permute.xlu0 1
        %1037 = vperm.xlu0 %1036, %v360
        %v1038 = vpop.permute.xlu0 %1037
        %1040 = vset.pattern.permute.xlu0 1
        %1041 = vperm.xlu0 %1040, %v361
        %v1042 = vpop.permute.xlu0 %1041
        %1044 = vset.pattern.permute.xlu0 1
        %1045 = vperm.xlu0 %1044, %v362
        %v1046 = vpop.permute.xlu0 %1045
        %1048 = vset.pattern.permute.xlu0 1
        %1049 = vperm.xlu0 %1048, %v363
        %v1050 = vpop.permute.xlu0 %1049
        %1052 = vset.pattern.permute.xlu0 1
        %1053 = vperm.xlu0 %1052, %v364
        %v1054 = vpop.permute.xlu0 %1053
        %1056 = vset.pattern.permute.xlu0 1
        %1057 = vperm.xlu0 %1056, %v365
        %v1058 = vpop.permute.xlu0 %1057
        %1060 = vset.pattern.permute.xlu0 1
        %1061 = vperm.xlu0 %1060, %v366
        %v1062 = vpop.permute.xlu0 %1061
        %1064 = vset.pattern.permute.xlu0 1
        %1065 = vperm.xlu0 %1064, %v367
        %v1066 = vpop.permute.xlu0 %1065
        %1068 = vset.pattern.permute.xlu0 1
        %1069 = vperm.xlu0 %1068, %v368
        %v1070 = vpop.permute.xlu0 %1069
        %1072 = vset.pattern.permute.xlu0 1
        %1073 = vperm.xlu0 %1072, %v369
        %v1074 = vpop.permute.xlu0 %1073
        %1076 = vset.pattern.permute.xlu0 1
        %1077 = vperm.xlu0 %1076, %v370
        %v1078 = vpop.permute.xlu0 %1077
        %1080 = vset.pattern.permute.xlu0 1
        %1081 = vperm.xlu0 %1080, %v371
        %v1082 = vpop.permute.xlu0 %1081
        %1084 = vset.pattern.permute.xlu0 1
        %1085 = vperm.xlu0 %1084, %v372
        %v1086 = vpop.permute.xlu0 %1085
        %1088 = vset.pattern.permute.xlu0 1
        %1089 = vperm.xlu0 %1088, %v373
        %v1090 = vpop.permute.xlu0 %1089
        %1092 = vset.pattern.permute.xlu0 1
        %1093 = vperm.xlu0 %1092, %v374
        %v1094 = vpop.permute.xlu0 %1093
        %1096 = vset.pattern.permute.xlu0 1
        %1097 = vperm.xlu0 %1096, %v375
        %v1098 = vpop.permute.xlu0 %1097
        %1100 = vset.pattern.permute.xlu0 1
        %1101 = vperm.xlu0 %1100, %v376
        %v1102 = vpop.permute.xlu0 %1101
        %1104 = vset.pattern.permute.xlu0 1
        %1105 = vperm.xlu0 %1104, %v377
        %v1106 = vpop.permute.xlu0 %1105
        %1108 = vset.pattern.permute.xlu0 1
        %1109 = vperm.xlu0 %1108, %v378
        %v1110 = vpop.permute.xlu0 %1109
        %1112 = vset.pattern.permute.xlu0 1
        %1113 = vperm.xlu0 %1112, %v379
        %v1114 = vpop.permute.xlu0 %1113
        %1116 = vset.pattern.permute.xlu0 1
        %1117 = vperm.xlu0 %1116, %v380
        %v1118 = vpop.permute.xlu0 %1117
        %1120 = vset.pattern.permute.xlu0 1
        %1121 = vperm.xlu0 %1120, %v381
        %v1122 = vpop.permute.xlu0 %1121
        %1124 = vset.pattern.permute.xlu0 1
        %1125 = vperm.xlu0 %1124, %v382
        %v1126 = vpop.permute.xlu0 %1125
        %1128 = vset.pattern.permute.xlu0 1
        %1129 = vperm.xlu0 %1128, %v383
        %v1130 = vpop.permute.xlu0 %1129
        %v1164 = vunpack.c.l.b16 %v972
        %v1165 = vunpack.c.h.b16 %v972
        %v1166 = vunpack.c.l.b16 %v973
        %v1167 = vunpack.c.h.b16 %v973
        %v1168 = vunpack.c.l.b16 %v974
        %v1169 = vunpack.c.h.b16 %v974
        %v1170 = vunpack.c.l.b16 %v975
        %v1171 = vunpack.c.h.b16 %v975
        %v1172 = vunpack.c.l.b16 %v976
        %v1173 = vunpack.c.h.b16 %v976
        %v1174 = vunpack.c.l.b16 %v977
        %v1175 = vunpack.c.h.b16 %v977
        %v1176 = vunpack.c.l.b16 %v978
        %v1177 = vunpack.c.h.b16 %v978
        %v1178 = vunpack.c.l.b16 %v979
        %v1179 = vunpack.c.h.b16 %v979
        %v1180 = vunpack.c.l.b16 %v980
        %v1181 = vunpack.c.h.b16 %v980
        %v1182 = vunpack.c.l.b16 %v981
        %v1183 = vunpack.c.h.b16 %v981
        %v1184 = vunpack.c.l.b16 %v982
        %v1185 = vunpack.c.h.b16 %v982
        %v1186 = vunpack.c.l.b16 %v983
        %v1187 = vunpack.c.h.b16 %v983
        %v1188 = vunpack.c.l.b16 %v984
        %v1189 = vunpack.c.h.b16 %v984
        %v1190 = vunpack.c.l.b16 %v985
        %v1191 = vunpack.c.h.b16 %v985
        %v1192 = vunpack.c.l.b16 %v986
        %v1193 = vunpack.c.h.b16 %v986
        %v1194 = vunpack.c.l.b16 %v987
        %v1195 = vunpack.c.h.b16 %v987
        %v1196 = vunpack.c.l.b16 %v988
        %v1197 = vunpack.c.h.b16 %v988
        %v1198 = vunpack.c.l.b16 %v989
        %v1199 = vunpack.c.h.b16 %v989
        %v1200 = vunpack.c.l.b16 %v990
        %v1201 = vunpack.c.h.b16 %v990
        %v1202 = vunpack.c.l.b16 %v991
        %v1203 = vunpack.c.h.b16 %v991
        %v1204 = vunpack.c.l.b16 %v992
        %v1205 = vunpack.c.h.b16 %v992
        %v1206 = vunpack.c.l.b16 %v993
        %v1207 = vunpack.c.h.b16 %v993
        %v1208 = vunpack.c.l.b16 %v994
        %v1209 = vunpack.c.h.b16 %v994
        %v1210 = vunpack.c.l.b16 %v995
        %v1211 = vunpack.c.h.b16 %v995
        %v1212 = vunpack.c.l.b16 %v996
        %v1213 = vunpack.c.h.b16 %v996
        %v1214 = vunpack.c.l.b16 %v997
        %v1215 = vunpack.c.h.b16 %v997
        %v1216 = vunpack.c.l.b16 %v998
        %v1217 = vunpack.c.h.b16 %v998
        %v1218 = vunpack.c.l.b16 %v999
        %v1219 = vunpack.c.h.b16 %v999
        %v1220 = vunpack.c.l.b16 %v1000
        %v1221 = vunpack.c.h.b16 %v1000
        %v1222 = vunpack.c.l.b16 %v1001
        %v1223 = vunpack.c.h.b16 %v1001
        %v1224 = vunpack.c.l.b16 %v1002
        %v1225 = vunpack.c.h.b16 %v1002
        %v1226 = vunpack.c.l.b16 %v1003
        %v1227 = vunpack.c.h.b16 %v1003
        %v1228 = vpack.c.b16 %v1166, %v1164
        %v1229 = vpack.c.b16 %v1167, %v1165
        %v1230 = vpack.c.b16 %v1170, %v1168
        %v1231 = vpack.c.b16 %v1171, %v1169
        %v1232 = vpack.c.b16 %v1174, %v1172
        %v1233 = vpack.c.b16 %v1175, %v1173
        %v1234 = vpack.c.b16 %v1178, %v1176
        %v1235 = vpack.c.b16 %v1179, %v1177
        %v1236 = vpack.c.b16 %v1182, %v1180
        %v1237 = vpack.c.b16 %v1183, %v1181
        %v1238 = vpack.c.b16 %v1186, %v1184
        %v1239 = vpack.c.b16 %v1187, %v1185
        %v1240 = vpack.c.b16 %v1190, %v1188
        %v1241 = vpack.c.b16 %v1191, %v1189
        %v1242 = vpack.c.b16 %v1194, %v1192
        %v1243 = vpack.c.b16 %v1195, %v1193
        %v1244 = vpack.c.b16 %v1198, %v1196
        %v1245 = vpack.c.b16 %v1199, %v1197
        %v1246 = vpack.c.b16 %v1202, %v1200
        %v1247 = vpack.c.b16 %v1203, %v1201
        %v1248 = vpack.c.b16 %v1206, %v1204
        %v1249 = vpack.c.b16 %v1207, %v1205
        %v1250 = vpack.c.b16 %v1210, %v1208
        %v1251 = vpack.c.b16 %v1211, %v1209
        %v1252 = vpack.c.b16 %v1214, %v1212
        %v1253 = vpack.c.b16 %v1215, %v1213
        %v1254 = vpack.c.b16 %v1218, %v1216
        %v1255 = vpack.c.b16 %v1219, %v1217
        %v1256 = vpack.c.b16 %v1222, %v1220
        %v1257 = vpack.c.b16 %v1223, %v1221
        %v1258 = vpack.c.b16 %v1226, %v1224
        %v1259 = vpack.c.b16 %v1227, %v1225
        %1292 = vmatprep.subr.bf16.mxu0 %v941
        %1293 = vmatpush1.bf16.msra.mxu0 %v940
        %1294 = vmatprep.subr.bf16.mxu0 %v943
        %1295 = vmatpush1.bf16.msra.mxu0 %v942
        %1296 = vmatprep.subr.bf16.mxu0 %v945
        %1297 = vmatpush1.bf16.msra.mxu0 %v944
        %1298 = vmatprep.subr.bf16.mxu0 %v947
        %1299 = vmatpush1.bf16.msra.mxu0 %v946
        %1300 = vmatprep.subr.bf16.mxu0 %v949
        %1301 = vmatpush1.bf16.msra.mxu0 %v948
        %1302 = vmatprep.subr.bf16.mxu0 %v951
        %1303 = vmatpush1.bf16.msra.mxu0 %v950
        %1304 = vmatprep.subr.bf16.mxu0 %v953
        %1305 = vmatpush1.bf16.msra.mxu0 %v952
        %1306 = vmatprep.subr.bf16.mxu0 %v955
        %1307 = vmatpush1.bf16.msra.mxu0 %v954
        %1308 = vmatprep.subr.bf16.mxu0 %v957
        %1309 = vmatpush1.bf16.msra.mxu0 %v956
        %1310 = vmatprep.subr.bf16.mxu0 %v959
        %1311 = vmatpush1.bf16.msra.mxu0 %v958
        %1312 = vmatprep.subr.bf16.mxu0 %v961
        %1313 = vmatpush1.bf16.msra.mxu0 %v960
        %1314 = vmatprep.subr.bf16.mxu0 %v963
        %1315 = vmatpush1.bf16.msra.mxu0 %v962
        %1316 = vmatprep.subr.bf16.mxu0 %v965
        %1317 = vmatpush1.bf16.msra.mxu0 %v964
        %1318 = vmatprep.subr.bf16.mxu0 %v967
        %1319 = vmatpush1.bf16.msra.mxu0 %v966
        %1320 = vmatprep.subr.bf16.mxu0 %v969
        %1321 = vmatpush1.bf16.msra.mxu0 %v968
        %1322 = vmatprep.subr.bf16.mxu0 %v971
        %1323 = vmatpush1.bf16.msra.mxu0 %v970
        %1324 = vmatprep.mubr.bf16.mxu0 %v1229
        %1325 = vmatmul.mubr.bf16.gmra.mrb[0].mxu0 %v1228
        %v1326 = vpop.f32.mrb[0].mxu0
        %v1327 = vadd.f32 %v1006, %v1326
        %v1328 = vpop.f32.mrb[0].mxu0
        %v1329 = vadd.f32 %v1006, %v1328
        %v1330 = vpop.f32.mrb[0].mxu0
        %v1331 = vadd.f32 %v1010, %v1330
        %v1332 = vpop.f32.mrb[0].mxu0
        %v1333 = vadd.f32 %v1010, %v1332
        %1334 = vmatprep.mubr.bf16.mxu0 %v1231
        %1335 = vmatmul.mubr.bf16.gmra.mrb[0].mxu0 %v1230
        %v1336 = vpop.f32.mrb[0].mxu0
        %v1337 = vadd.f32 %v1014, %v1336
        %v1338 = vpop.f32.mrb[0].mxu0
        %v1339 = vadd.f32 %v1014, %v1338
        %v1340 = vpop.f32.mrb[0].mxu0
        %v1341 = vadd.f32 %v1018, %v1340
        %v1342 = vpop.f32.mrb[0].mxu0
        %v1343 = vadd.f32 %v1018, %v1342
        %1344 = vmatprep.mubr.bf16.mxu0 %v1233
        %1345 = vmatmul.mubr.bf16.gmra.mrb[0].mxu0 %v1232
        %v1346 = vpop.f32.mrb[0].mxu0
        %v1347 = vadd.f32 %v1022, %v1346
        %v1348 = vpop.f32.mrb[0].mxu0
        %v1349 = vadd.f32 %v1022, %v1348
        %v1350 = vpop.f32.mrb[0].mxu0
        %v1351 = vadd.f32 %v1026, %v1350
        %v1352 = vpop.f32.mrb[0].mxu0
        %v1353 = vadd.f32 %v1026, %v1352
        %1354 = vmatprep.mubr.bf16.mxu0 %v1235
        %1355 = vmatmul.mubr.bf16.gmra.mrb[0].mxu0 %v1234
        %v1356 = vpop.f32.mrb[0].mxu0
        %v1357 = vadd.f32 %v1030, %v1356
        %v1358 = vpop.f32.mrb[0].mxu0
        %v1359 = vadd.f32 %v1030, %v1358
        %v1360 = vpop.f32.mrb[0].mxu0
        %v1361 = vadd.f32 %v1034, %v1360
        %v1362 = vpop.f32.mrb[0].mxu0
        %v1363 = vadd.f32 %v1034, %v1362
        %1364 = vmatprep.mubr.bf16.mxu0 %v1237
        %1365 = vmatmul.mubr.bf16.gmra.mrb[0].mxu0 %v1236
        %v1366 = vpop.f32.mrb[0].mxu0
        %v1367 = vadd.f32 %v1038, %v1366
        %v1368 = vpop.f32.mrb[0].mxu0
        %v1369 = vadd.f32 %v1038, %v1368
        %v1370 = vpop.f32.mrb[0].mxu0
        %v1371 = vadd.f32 %v1042, %v1370
        %v1372 = vpop.f32.mrb[0].mxu0
        %v1373 = vadd.f32 %v1042, %v1372
        %1374 = vmatprep.mubr.bf16.mxu0 %v1239
        %1375 = vmatmul.mubr.bf16.gmra.mrb[0].mxu0 %v1238
        %v1376 = vpop.f32.mrb[0].mxu0
        %v1377 = vadd.f32 %v1046, %v1376
        %v1378 = vpop.f32.mrb[0].mxu0
        %v1379 = vadd.f32 %v1046, %v1378
        %v1380 = vpop.f32.mrb[0].mxu0
        %v1381 = vadd.f32 %v1050, %v1380
        %v1382 = vpop.f32.mrb[0].mxu0
        %v1383 = vadd.f32 %v1050, %v1382
        %1384 = vmatprep.mubr.bf16.mxu0 %v1241
        %1385 = vmatmul.mubr.bf16.gmra.mrb[0].mxu0 %v1240
        %v1386 = vpop.f32.mrb[0].mxu0
        %v1387 = vadd.f32 %v1054, %v1386
        %v1388 = vpop.f32.mrb[0].mxu0
        %v1389 = vadd.f32 %v1054, %v1388
        %v1390 = vpop.f32.mrb[0].mxu0
        %v1391 = vadd.f32 %v1058, %v1390
        %v1392 = vpop.f32.mrb[0].mxu0
        %v1393 = vadd.f32 %v1058, %v1392
        %1394 = vmatprep.mubr.bf16.mxu0 %v1243
        %1395 = vmatmul.mubr.bf16.gmra.mrb[0].mxu0 %v1242
        %v1396 = vpop.f32.mrb[0].mxu0
        %v1397 = vadd.f32 %v1062, %v1396
        %v1398 = vpop.f32.mrb[0].mxu0
        %v1399 = vadd.f32 %v1062, %v1398
        %v1400 = vpop.f32.mrb[0].mxu0
        %v1401 = vadd.f32 %v1066, %v1400
        %v1402 = vpop.f32.mrb[0].mxu0
        %v1403 = vadd.f32 %v1066, %v1402
        %1404 = vmatprep.mubr.bf16.mxu0 %v1245
        %1405 = vmatmul.mubr.bf16.gmra.mrb[0].mxu0 %v1244
        %v1406 = vpop.f32.mrb[0].mxu0
        %v1407 = vadd.f32 %v1070, %v1406
        %v1408 = vpop.f32.mrb[0].mxu0
        %v1409 = vadd.f32 %v1070, %v1408
        %v1410 = vpop.f32.mrb[0].mxu0
        %v1411 = vadd.f32 %v1074, %v1410
        %v1412 = vpop.f32.mrb[0].mxu0
        %v1413 = vadd.f32 %v1074, %v1412
        %1414 = vmatprep.mubr.bf16.mxu0 %v1247
        %1415 = vmatmul.mubr.bf16.gmra.mrb[0].mxu0 %v1246
        %v1416 = vpop.f32.mrb[0].mxu0
        %v1417 = vadd.f32 %v1078, %v1416
        %v1418 = vpop.f32.mrb[0].mxu0
        %v1419 = vadd.f32 %v1078, %v1418
        %v1420 = vpop.f32.mrb[0].mxu0
        %v1421 = vadd.f32 %v1082, %v1420
        %v1422 = vpop.f32.mrb[0].mxu0
        %v1423 = vadd.f32 %v1082, %v1422
        %1424 = vmatprep.mubr.bf16.mxu0 %v1249
        %1425 = vmatmul.mubr.bf16.gmra.mrb[0].mxu0 %v1248
        %v1426 = vpop.f32.mrb[0].mxu0
        %v1427 = vadd.f32 %v1086, %v1426
        %v1428 = vpop.f32.mrb[0].mxu0
        %v1429 = vadd.f32 %v1086, %v1428
        %v1430 = vpop.f32.mrb[0].mxu0
        %v1431 = vadd.f32 %v1090, %v1430
        %v1432 = vpop.f32.mrb[0].mxu0
        %v1433 = vadd.f32 %v1090, %v1432
        %1434 = vmatprep.mubr.bf16.mxu0 %v1251
        %1435 = vmatmul.mubr.bf16.gmra.mrb[0].mxu0 %v1250
        %v1436 = vpop.f32.mrb[0].mxu0
        %v1437 = vadd.f32 %v1094, %v1436
        %v1438 = vpop.f32.mrb[0].mxu0
        %v1439 = vadd.f32 %v1094, %v1438
        %v1440 = vpop.f32.mrb[0].mxu0
        %v1441 = vadd.f32 %v1098, %v1440
        %v1442 = vpop.f32.mrb[0].mxu0
        %v1443 = vadd.f32 %v1098, %v1442
        %1444 = vmatprep.mubr.bf16.mxu0 %v1253
        %1445 = vmatmul.mubr.bf16.gmra.mrb[0].mxu0 %v1252
        %v1446 = vpop.f32.mrb[0].mxu0
        %v1447 = vadd.f32 %v1102, %v1446
        %v1448 = vpop.f32.mrb[0].mxu0
        %v1449 = vadd.f32 %v1102, %v1448
        %v1450 = vpop.f32.mrb[0].mxu0
        %v1451 = vadd.f32 %v1106, %v1450
        %v1452 = vpop.f32.mrb[0].mxu0
        %v1453 = vadd.f32 %v1106, %v1452
        %1454 = vmatprep.mubr.bf16.mxu0 %v1255
        %1455 = vmatmul.mubr.bf16.gmra.mrb[0].mxu0 %v1254
        %v1456 = vpop.f32.mrb[0].mxu0
        %v1457 = vadd.f32 %v1110, %v1456
        %v1458 = vpop.f32.mrb[0].mxu0
        %v1459 = vadd.f32 %v1110, %v1458
        %v1460 = vpop.f32.mrb[0].mxu0
        %v1461 = vadd.f32 %v1114, %v1460
        %v1462 = vpop.f32.mrb[0].mxu0
        %v1463 = vadd.f32 %v1114, %v1462
        %1464 = vmatprep.mubr.bf16.mxu0 %v1257
        %1465 = vmatmul.mubr.bf16.gmra.mrb[0].mxu0 %v1256
        %v1466 = vpop.f32.mrb[0].mxu0
        %v1467 = vadd.f32 %v1118, %v1466
        %v1468 = vpop.f32.mrb[0].mxu0
        %v1469 = vadd.f32 %v1118, %v1468
        %v1470 = vpop.f32.mrb[0].mxu0
        %v1471 = vadd.f32 %v1122, %v1470
        %v1472 = vpop.f32.mrb[0].mxu0
        %v1473 = vadd.f32 %v1122, %v1472
        %1474 = vmatprep.mubr.bf16.mxu0 %v1259
        %1475 = vmatmul.mubr.bf16.gmra.mrb[0].mxu0 %v1258
        %v1476 = vpop.f32.mrb[0].mxu0
        %v1477 = vadd.f32 %v1126, %v1476
        %v1478 = vpop.f32.mrb[0].mxu0
        %v1479 = vadd.f32 %v1126, %v1478
        %v1480 = vpop.f32.mrb[0].mxu0
        %v1481 = vadd.f32 %v1130, %v1480
        %v1482 = vpop.f32.mrb[0].mxu0
        %v1483 = vadd.f32 %v1130, %v1482
        %1484 = vdwg.mxu0
        %v1485 = vmax.f32 %v1327, 0.0
        %v1486 = vmax.f32 %v1329, 0.0
        %v1487 = vmax.f32 %v1331, 0.0
        %v1488 = vmax.f32 %v1333, 0.0
        %v1489 = vmax.f32 %v1337, 0.0
        %v1490 = vmax.f32 %v1339, 0.0
        %v1491 = vmax.f32 %v1341, 0.0
        %v1492 = vmax.f32 %v1343, 0.0
        %v1493 = vmax.f32 %v1347, 0.0
        %v1494 = vmax.f32 %v1349, 0.0
        %v1495 = vmax.f32 %v1351, 0.0
        %v1496 = vmax.f32 %v1353, 0.0
        %v1497 = vmax.f32 %v1357, 0.0
        %v1498 = vmax.f32 %v1359, 0.0
        %v1499 = vmax.f32 %v1361, 0.0
        %v1500 = vmax.f32 %v1363, 0.0
        %v1501 = vmax.f32 %v1367, 0.0
        %v1502 = vmax.f32 %v1369, 0.0
        %v1503 = vmax.f32 %v1371, 0.0
        %v1504 = vmax.f32 %v1373, 0.0
        %v1505 = vmax.f32 %v1377, 0.0
        %v1506 = vmax.f32 %v1379, 0.0
        %v1507 = vmax.f32 %v1381, 0.0
        %v1508 = vmax.f32 %v1383, 0.0
        %v1509 = vmax.f32 %v1387, 0.0
        %v1510 = vmax.f32 %v1389, 0.0
        %v1511 = vmax.f32 %v1391, 0.0
        %v1512 = vmax.f32 %v1393, 0.0
        %v1513 = vmax.f32 %v1397, 0.0
        %v1514 = vmax.f32 %v1399, 0.0
        %v1515 = vmax.f32 %v1401, 0.0
        %v1516 = vmax.f32 %v1403, 0.0
        %v1517 = vmax.f32 %v1407, 0.0
        %v1518 = vmax.f32 %v1409, 0.0
        %v1519 = vmax.f32 %v1411, 0.0
        %v1520 = vmax.f32 %v1413, 0.0
        %v1521 = vmax.f32 %v1417, 0.0
        %v1522 = vmax.f32 %v1419, 0.0
        %v1523 = vmax.f32 %v1421, 0.0
        %v1524 = vmax.f32 %v1423, 0.0
        %v1525 = vmax.f32 %v1427, 0.0
        %v1526 = vmax.f32 %v1429, 0.0
        %v1527 = vmax.f32 %v1431, 0.0
        %v1528 = vmax.f32 %v1433, 0.0
        %v1529 = vmax.f32 %v1437, 0.0
        %v1530 = vmax.f32 %v1439, 0.0
        %v1531 = vmax.f32 %v1441, 0.0
        %v1532 = vmax.f32 %v1443, 0.0
        %v1533 = vmax.f32 %v1447, 0.0
        %v1534 = vmax.f32 %v1449, 0.0
        %v1535 = vmax.f32 %v1451, 0.0
        %v1536 = vmax.f32 %v1453, 0.0
        %v1537 = vmax.f32 %v1457, 0.0
        %v1538 = vmax.f32 %v1459, 0.0
        %v1539 = vmax.f32 %v1461, 0.0
        %v1540 = vmax.f32 %v1463, 0.0
        %v1541 = vmax.f32 %v1467, 0.0
        %v1542 = vmax.f32 %v1469, 0.0
        %v1543 = vmax.f32 %v1471, 0.0
        %v1544 = vmax.f32 %v1473, 0.0
        %v1545 = vmax.f32 %v1477, 0.0
        %v1546 = vmax.f32 %v1479, 0.0
        %v1547 = vmax.f32 %v1481, 0.0
        %v1548 = vmax.f32 %v1483, 0.0
        %v1549 = vpack.c.bf16 %v1487, %v1485
        %v1550 = vpack.c.bf16 %v1488, %v1486
        %v1551 = vpack.c.bf16 %v1491, %v1489
        %v1552 = vpack.c.bf16 %v1492, %v1490
        %v1553 = vpack.c.bf16 %v1495, %v1493
        %v1554 = vpack.c.bf16 %v1496, %v1494
        %v1555 = vpack.c.bf16 %v1499, %v1497
        %v1556 = vpack.c.bf16 %v1500, %v1498
        %v1557 = vpack.c.bf16 %v1503, %v1501
        %v1558 = vpack.c.bf16 %v1504, %v1502
        %v1559 = vpack.c.bf16 %v1507, %v1505
        %v1560 = vpack.c.bf16 %v1508, %v1506
        %v1561 = vpack.c.bf16 %v1511, %v1509
        %v1562 = vpack.c.bf16 %v1512, %v1510
        %v1563 = vpack.c.bf16 %v1515, %v1513
        %v1564 = vpack.c.bf16 %v1516, %v1514
        %v1565 = vpack.c.bf16 %v1519, %v1517
        %v1566 = vpack.c.bf16 %v1520, %v1518
        %v1567 = vpack.c.bf16 %v1523, %v1521
        %v1568 = vpack.c.bf16 %v1524, %v1522
        %v1569 = vpack.c.bf16 %v1527, %v1525
        %v1570 = vpack.c.bf16 %v1528, %v1526
        %v1571 = vpack.c.bf16 %v1531, %v1529
        %v1572 = vpack.c.bf16 %v1532, %v1530
        %v1573 = vpack.c.bf16 %v1535, %v1533
        %v1574 = vpack.c.bf16 %v1536, %v1534
        %v1575 = vpack.c.bf16 %v1539, %v1537
        %v1576 = vpack.c.bf16 %v1540, %v1538
        %v1577 = vpack.c.bf16 %v1543, %v1541
        %v1578 = vpack.c.bf16 %v1544, %v1542
        %v1579 = vpack.c.bf16 %v1547, %v1545
        %v1580 = vpack.c.bf16 %v1548, %v1546
        %s1581 = scalar_lea.vmem [#allocation3], 256
        %v1582 = vld [vmem:[%s1581] sm:$0xff]
        %v1583 = vld [vmem:[%s1581 + $0x8] sm:$0xff]
        %v1584 = vld [vmem:[%s1581 + $0x10] sm:$0xff]
        %v1585 = vld [vmem:[%s1581 + $0x18] sm:$0xff]
        %v1586 = vld [vmem:[%s1581 + $0x20] sm:$0xff]
        %v1587 = vld [vmem:[%s1581 + $0x28] sm:$0xff]
        %v1588 = vld [vmem:[%s1581 + $0x30] sm:$0xff]
        %v1589 = vld [vmem:[%s1581 + $0x38] sm:$0xff]
        %v1590 = vld [vmem:[%s1581 + $0x40] sm:$0xff]
        %v1591 = vld [vmem:[%s1581 + $0x48] sm:$0xff]
        %v1592 = vld [vmem:[%s1581 + $0x50] sm:$0xff]
        %v1593 = vld [vmem:[%s1581 + $0x58] sm:$0xff]
        %v1594 = vld [vmem:[%s1581 + $0x60] sm:$0xff]
        %v1595 = vld [vmem:[%s1581 + $0x68] sm:$0xff]
        %v1596 = vld [vmem:[%s1581 + $0x70] sm:$0xff]
        %v1597 = vld [vmem:[%s1581 + $0x78] sm:$0xff]
        %v1598 = vld [vmem:[%s1581 + $0x80] sm:$0xff]
        %v1599 = vld [vmem:[%s1581 + $0x88] sm:$0xff]
        %v1600 = vld [vmem:[%s1581 + $0x90] sm:$0xff]
        %v1601 = vld [vmem:[%s1581 + $0x98] sm:$0xff]
        %v1602 = vld [vmem:[%s1581 + $0xa0] sm:$0xff]
        %v1603 = vld [vmem:[%s1581 + $0xa8] sm:$0xff]
        %v1604 = vld [vmem:[%s1581 + $0xb0] sm:$0xff]
        %v1605 = vld [vmem:[%s1581 + $0xb8] sm:$0xff]
        %v1606 = vld [vmem:[%s1581 + $0xc0] sm:$0xff]
        %v1607 = vld [vmem:[%s1581 + $0xc8] sm:$0xff]
        %v1608 = vld [vmem:[%s1581 + $0xd0] sm:$0xff]
        %v1609 = vld [vmem:[%s1581 + $0xd8] sm:$0xff]
        %v1610 = vld [vmem:[%s1581 + $0xe0] sm:$0xff]
        %v1611 = vld [vmem:[%s1581 + $0xe8] sm:$0xff]
        %v1612 = vld [vmem:[%s1581 + $0xf0] sm:$0xff]
        %v1613 = vld [vmem:[%s1581 + $0xf8] sm:$0xff]
        %1614 = vset.pattern.permute.xlu0 2
        %1615 = vperm.xlu0 %1614, %v352
        %v1616 = vpop.permute.xlu0 %1615
        %1618 = vset.pattern.permute.xlu0 2
        %1619 = vperm.xlu0 %1618, %v353
        %v1620 = vpop.permute.xlu0 %1619
        %1622 = vset.pattern.permute.xlu0 2
        %1623 = vperm.xlu0 %1622, %v354
        %v1624 = vpop.permute.xlu0 %1623
        %1626 = vset.pattern.permute.xlu0 2
        %1627 = vperm.xlu0 %1626, %v355
        %v1628 = vpop.permute.xlu0 %1627
        %1630 = vset.pattern.permute.xlu0 2
        %1631 = vperm.xlu0 %1630, %v356
        %v1632 = vpop.permute.xlu0 %1631
        %1634 = vset.pattern.permute.xlu0 2
        %1635 = vperm.xlu0 %1634, %v357
        %v1636 = vpop.permute.xlu0 %1635
        %1638 = vset.pattern.permute.xlu0 2
        %1639 = vperm.xlu0 %1638, %v358
        %v1640 = vpop.permute.xlu0 %1639
        %1642 = vset.pattern.permute.xlu0 2
        %1643 = vperm.xlu0 %1642, %v359
        %v1644 = vpop.permute.xlu0 %1643
        %1646 = vset.pattern.permute.xlu0 2
        %1647 = vperm.xlu0 %1646, %v360
        %v1648 = vpop.permute.xlu0 %1647
        %1650 = vset.pattern.permute.xlu0 2
        %1651 = vperm.xlu0 %1650, %v361
        %v1652 = vpop.permute.xlu0 %1651
        %1654 = vset.pattern.permute.xlu0 2
        %1655 = vperm.xlu0 %1654, %v362
        %v1656 = vpop.permute.xlu0 %1655
        %1658 = vset.pattern.permute.xlu0 2
        %1659 = vperm.xlu0 %1658, %v363
        %v1660 = vpop.permute.xlu0 %1659
        %1662 = vset.pattern.permute.xlu0 2
        %1663 = vperm.xlu0 %1662, %v364
        %v1664 = vpop.permute.xlu0 %1663
        %1666 = vset.pattern.permute.xlu0 2
        %1667 = vperm.xlu0 %1666, %v365
        %v1668 = vpop.permute.xlu0 %1667
        %1670 = vset.pattern.permute.xlu0 2
        %1671 = vperm.xlu0 %1670, %v366
        %v1672 = vpop.permute.xlu0 %1671
        %1674 = vset.pattern.permute.xlu0 2
        %1675 = vperm.xlu0 %1674, %v367
        %v1676 = vpop.permute.xlu0 %1675
        %1678 = vset.pattern.permute.xlu0 2
        %1679 = vperm.xlu0 %1678, %v368
        %v1680 = vpop.permute.xlu0 %1679
        %1682 = vset.pattern.permute.xlu0 2
        %1683 = vperm.xlu0 %1682, %v369
        %v1684 = vpop.permute.xlu0 %1683
        %1686 = vset.pattern.permute.xlu0 2
        %1687 = vperm.xlu0 %1686, %v370
        %v1688 = vpop.permute.xlu0 %1687
        %1690 = vset.pattern.permute.xlu0 2
        %1691 = vperm.xlu0 %1690, %v371
        %v1692 = vpop.permute.xlu0 %1691
        %1694 = vset.pattern.permute.xlu0 2
        %1695 = vperm.xlu0 %1694, %v372
        %v1696 = vpop.permute.xlu0 %1695
        %1698 = vset.pattern.permute.xlu0 2
        %1699 = vperm.xlu0 %1698, %v373
        %v1700 = vpop.permute.xlu0 %1699
        %1702 = vset.pattern.permute.xlu0 2
        %1703 = vperm.xlu0 %1702, %v374
        %v1704 = vpop.permute.xlu0 %1703
        %1706 = vset.pattern.permute.xlu0 2
        %1707 = vperm.xlu0 %1706, %v375
        %v1708 = vpop.permute.xlu0 %1707
        %1710 = vset.pattern.permute.xlu0 2
        %1711 = vperm.xlu0 %1710, %v376
        %v1712 = vpop.permute.xlu0 %1711
        %1714 = vset.pattern.permute.xlu0 2
        %1715 = vperm.xlu0 %1714, %v377
        %v1716 = vpop.permute.xlu0 %1715
        %1718 = vset.pattern.permute.xlu0 2
        %1719 = vperm.xlu0 %1718, %v378
        %v1720 = vpop.permute.xlu0 %1719
        %1722 = vset.pattern.permute.xlu0 2
        %1723 = vperm.xlu0 %1722, %v379
        %v1724 = vpop.permute.xlu0 %1723
        %1726 = vset.pattern.permute.xlu0 2
        %1727 = vperm.xlu0 %1726, %v380
        %v1728 = vpop.permute.xlu0 %1727
        %1730 = vset.pattern.permute.xlu0 2
        %1731 = vperm.xlu0 %1730, %v381
        %v1732 = vpop.permute.xlu0 %1731
        %1734 = vset.pattern.permute.xlu0 2
        %1735 = vperm.xlu0 %1734, %v382
        %v1736 = vpop.permute.xlu0 %1735
        %1738 = vset.pattern.permute.xlu0 2
        %1739 = vperm.xlu0 %1738, %v383
        %v1740 = vpop.permute.xlu0 %1739
        %v1774 = vunpack.c.l.b16 %v1582
        %v1775 = vunpack.c.h.b16 %v1582
        %v1776 = vunpack.c.l.b16 %v1583
        %v1777 = vunpack.c.h.b16 %v1583
        %v1778 = vunpack.c.l.b16 %v1584
        %v1779 = vunpack.c.h.b16 %v1584
        %v1780 = vunpack.c.l.b16 %v1585
        %v1781 = vunpack.c.h.b16 %v1585
        %v1782 = vunpack.c.l.b16 %v1586
        %v1783 = vunpack.c.h.b16 %v1586
        %v1784 = vunpack.c.l.b16 %v1587
        %v1785 = vunpack.c.h.b16 %v1587
        %v1786 = vunpack.c.l.b16 %v1588
        %v1787 = vunpack.c.h.b16 %v1588
        %v1788 = vunpack.c.l.b16 %v1589
        %v1789 = vunpack.c.h.b16 %v1589
        %v1790 = vunpack.c.l.b16 %v1590
        %v1791 = vunpack.c.h.b16 %v1590
        %v1792 = vunpack.c.l.b16 %v1591
        %v1793 = vunpack.c.h.b16 %v1591
        %v1794 = vunpack.c.l.b16 %v1592
        %v1795 = vunpack.c.h.b16 %v1592
        %v1796 = vunpack.c.l.b16 %v1593
        %v1797 = vunpack.c.h.b16 %v1593
        %v1798 = vunpack.c.l.b16 %v1594
        %v1799 = vunpack.c.h.b16 %v1594
        %v1800 = vunpack.c.l.b16 %v1595
        %v1801 = vunpack.c.h.b16 %v1595
        %v1802 = vunpack.c.l.b16 %v1596
        %v1803 = vunpack.c.h.b16 %v1596
        %v1804 = vunpack.c.l.b16 %v1597
        %v1805 = vunpack.c.h.b16 %v1597
        %v1806 = vunpack.c.l.b16 %v1598
        %v1807 = vunpack.c.h.b16 %v1598
        %v1808 = vunpack.c.l.b16 %v1599
        %v1809 = vunpack.c.h.b16 %v1599
        %v1810 = vunpack.c.l.b16 %v1600
        %v1811 = vunpack.c.h.b16 %v1600
        %v1812 = vunpack.c.l.b16 %v1601
        %v1813 = vunpack.c.h.b16 %v1601
        %v1814 = vunpack.c.l.b16 %v1602
        %v1815 = vunpack.c.h.b16 %v1602
        %v1816 = vunpack.c.l.b16 %v1603
        %v1817 = vunpack.c.h.b16 %v1603
        %v1818 = vunpack.c.l.b16 %v1604
        %v1819 = vunpack.c.h.b16 %v1604
        %v1820 = vunpack.c.l.b16 %v1605
        %v1821 = vunpack.c.h.b16 %v1605
        %v1822 = vunpack.c.l.b16 %v1606
        %v1823 = vunpack.c.h.b16 %v1606
        %v1824 = vunpack.c.l.b16 %v1607
        %v1825 = vunpack.c.h.b16 %v1607
        %v1826 = vunpack.c.l.b16 %v1608
        %v1827 = vunpack.c.h.b16 %v1608
        %v1828 = vunpack.c.l.b16 %v1609
        %v1829 = vunpack.c.h.b16 %v1609
        %v1830 = vunpack.c.l.b16 %v1610
        %v1831 = vunpack.c.h.b16 %v1610
        %v1832 = vunpack.c.l.b16 %v1611
        %v1833 = vunpack.c.h.b16 %v1611
        %v1834 = vunpack.c.l.b16 %v1612
        %v1835 = vunpack.c.h.b16 %v1612
        %v1836 = vunpack.c.l.b16 %v1613
        %v1837 = vunpack.c.h.b16 %v1613
        %v1838 = vpack.c.b16 %v1776, %v1774
        %v1839 = vpack.c.b16 %v1777, %v1775
        %v1840 = vpack.c.b16 %v1780, %v1778
        %v1841 = vpack.c.b16 %v1781, %v1779
        %v1842 = vpack.c.b16 %v1784, %v1782
        %v1843 = vpack.c.b16 %v1785, %v1783
        %v1844 = vpack.c.b16 %v1788, %v1786
        %v1845 = vpack.c.b16 %v1789, %v1787
        %v1846 = vpack.c.b16 %v1792, %v1790
        %v1847 = vpack.c.b16 %v1793, %v1791
        %v1848 = vpack.c.b16 %v1796, %v1794
        %v1849 = vpack.c.b16 %v1797, %v1795
        %v1850 = vpack.c.b16 %v1800, %v1798
        %v1851 = vpack.c.b16 %v1801, %v1799
        %v1852 = vpack.c.b16 %v1804, %v1802
        %v1853 = vpack.c.b16 %v1805, %v1803
        %v1854 = vpack.c.b16 %v1808, %v1806
        %v1855 = vpack.c.b16 %v1809, %v1807
        %v1856 = vpack.c.b16 %v1812, %v1810
        %v1857 = vpack.c.b16 %v1813, %v1811
        %v1858 = vpack.c.b16 %v1816, %v1814
        %v1859 = vpack.c.b16 %v1817, %v1815
        %v1860 = vpack.c.b16 %v1820, %v1818
        %v1861 = vpack.c.b16 %v1821, %v1819
        %v1862 = vpack.c.b16 %v1824, %v1822
        %v1863 = vpack.c.b16 %v1825, %v1823
        %v1864 = vpack.c.b16 %v1828, %v1826
        %v1865 = vpack.c.b16 %v1829, %v1827
        %v1866 = vpack.c.b16 %v1832, %v1830
        %v1867 = vpack.c.b16 %v1833, %v1831
        %v1868 = vpack.c.b16 %v1836, %v1834
        %v1869 = vpack.c.b16 %v1837, %v1835
        %1902 = vmatprep.subr.bf16.mxu0 %v1550
        %1903 = vmatpush1.bf16.msra.mxu0 %v1549
        %1904 = vmatprep.subr.bf16.mxu0 %v1552
        %1905 = vmatpush1.bf16.msra.mxu0 %v1551
        %1906 = vmatprep.subr.bf16.mxu0 %v1554
        %1907 = vmatpush1.bf16.msra.mxu0 %v1553
        %1908 = vmatprep.subr.bf16.mxu0 %v1556
        %1909 = vmatpush1.bf16.msra.mxu0 %v1555
        %1910 = vmatprep.subr.bf16.mxu0 %v1558
        %1911 = vmatpush1.bf16.msra.mxu0 %v1557
        %1912 = vmatprep.subr.bf16.mxu0 %v1560
        %1913 = vmatpush1.bf16.msra.mxu0 %v1559
        %1914 = vmatprep.subr.bf16.mxu0 %v1562
        %1915 = vmatpush1.bf16.msra.mxu0 %v1561
        %1916 = vmatprep.subr.bf16.mxu0 %v1564
        %1917 = vmatpush1.bf16.msra.mxu0 %v1563
        %1918 = vmatprep.subr.bf16.mxu0 %v1566
        %1919 = vmatpush1.bf16.msra.mxu0 %v1565
        %1920 = vmatprep.subr.bf16.mxu0 %v1568
        %1921 = vmatpush1.bf16.msra.mxu0 %v1567
        %1922 = vmatprep.subr.bf16.mxu0 %v1570
        %1923 = vmatpush1.bf16.msra.mxu0 %v1569
        %1924 = vmatprep.subr.bf16.mxu0 %v1572
        %1925 = vmatpush1.bf16.msra.mxu0 %v1571
        %1926 = vmatprep.subr.bf16.mxu0 %v1574
        %1927 = vmatpush1.bf16.msra.mxu0 %v1573
        %1928 = vmatprep.subr.bf16.mxu0 %v1576
        %1929 = vmatpush1.bf16.msra.mxu0 %v1575
        %1930 = vmatprep.subr.bf16.mxu0 %v1578
        %1931 = vmatpush1.bf16.msra.mxu0 %v1577
        %1932 = vmatprep.subr.bf16.mxu0 %v1580
        %1933 = vmatpush1.bf16.msra.mxu0 %v1579
        %1934 = vmatprep.mubr.bf16.mxu0 %v1839
        %1935 = vmatmul.mubr.bf16.gmra.mrb[0].mxu0 %v1838
        %v1936 = vpop.f32.mrb[0].mxu0
        %v1937 = vadd.f32 %v1616, %v1936
        %v1938 = vpop.f32.mrb[0].mxu0
        %v1939 = vadd.f32 %v1616, %v1938
        %v1940 = vpop.f32.mrb[0].mxu0
        %v1941 = vadd.f32 %v1620, %v1940
        %v1942 = vpop.f32.mrb[0].mxu0
        %v1943 = vadd.f32 %v1620, %v1942
        %1944 = vmatprep.mubr.bf16.mxu0 %v1841
        %1945 = vmatmul.mubr.bf16.gmra.mrb[0].mxu0 %v1840
        %v1946 = vpop.f32.mrb[0].mxu0
        %v1947 = vadd.f32 %v1624, %v1946
        %v1948 = vpop.f32.mrb[0].mxu0
        %v1949 = vadd.f32 %v1624, %v1948
        %v1950 = vpop.f32.mrb[0].mxu0
        %v1951 = vadd.f32 %v1628, %v1950
        %v1952 = vpop.f32.mrb[0].mxu0
        %v1953 = vadd.f32 %v1628, %v1952
        %1954 = vmatprep.mubr.bf16.mxu0 %v1843
        %1955 = vmatmul.mubr.bf16.gmra.mrb[0].mxu0 %v1842
        %v1956 = vpop.f32.mrb[0].mxu0
        %v1957 = vadd.f32 %v1632, %v1956
        %v1958 = vpop.f32.mrb[0].mxu0
        %v1959 = vadd.f32 %v1632, %v1958
        %v1960 = vpop.f32.mrb[0].mxu0
        %v1961 = vadd.f32 %v1636, %v1960
        %v1962 = vpop.f32.mrb[0].mxu0
        %v1963 = vadd.f32 %v1636, %v1962
        %1964 = vmatprep.mubr.bf16.mxu0 %v1845
        %1965 = vmatmul.mubr.bf16.gmra.mrb[0].mxu0 %v1844
        %v1966 = vpop.f32.mrb[0].mxu0
        %v1967 = vadd.f32 %v1640, %v1966
        %v1968 = vpop.f32.mrb[0].mxu0
        %v1969 = vadd.f32 %v1640, %v1968
        %v1970 = vpop.f32.mrb[0].mxu0
        %v1971 = vadd.f32 %v1644, %v1970
        %v1972 = vpop.f32.mrb[0].mxu0
        %v1973 = vadd.f32 %v1644, %v1972
        %1974 = vmatprep.mubr.bf16.mxu0 %v1847
        %1975 = vmatmul.mubr.bf16.gmra.mrb[0].mxu0 %v1846
        %v1976 = vpop.f32.mrb[0].mxu0
        %v1977 = vadd.f32 %v1648, %v1976
        %v1978 = vpop.f32.mrb[0].mxu0
        %v1979 = vadd.f32 %v1648, %v1978
        %v1980 = vpop.f32.mrb[0].mxu0
        %v1981 = vadd.f32 %v1652, %v1980
        %v1982 = vpop.f32.mrb[0].mxu0
        %v1983 = vadd.f32 %v1652, %v1982
        %1984 = vmatprep.mubr.bf16.mxu0 %v1849
        %1985 = vmatmul.mubr.bf16.gmra.mrb[0].mxu0 %v1848
        %v1986 = vpop.f32.mrb[0].mxu0
        %v1987 = vadd.f32 %v1656, %v1986
        %v1988 = vpop.f32.mrb[0].mxu0
        %v1989 = vadd.f32 %v1656, %v1988
        %v1990 = vpop.f32.mrb[0].mxu0
        %v1991 = vadd.f32 %v1660, %v1990
        %v1992 = vpop.f32.mrb[0].mxu0
        %v1993 = vadd.f32 %v1660, %v1992
        %1994 = vmatprep.mubr.bf16.mxu0 %v1851
        %1995 = vmatmul.mubr.bf16.gmra.mrb[0].mxu0 %v1850
        %v1996 = vpop.f32.mrb[0].mxu0
        %v1997 = vadd.f32 %v1664, %v1996
        %v1998 = vpop.f32.mrb[0].mxu0
        %v1999 = vadd.f32 %v1664, %v1998
        %v2000 = vpop.f32.mrb[0].mxu0
        %v2001 = vadd.f32 %v1668, %v2000
        %v2002 = vpop.f32.mrb[0].mxu0
        %v2003 = vadd.f32 %v1668, %v2002
        %2004 = vmatprep.mubr.bf16.mxu0 %v1853
        %2005 = vmatmul.mubr.bf16.gmra.mrb[0].mxu0 %v1852
        %v2006 = vpop.f32.mrb[0].mxu0
        %v2007 = vadd.f32 %v1672, %v2006
        %v2008 = vpop.f32.mrb[0].mxu0
        %v2009 = vadd.f32 %v1672, %v2008
        %v2010 = vpop.f32.mrb[0].mxu0
        %v2011 = vadd.f32 %v1676, %v2010
        %v2012 = vpop.f32.mrb[0].mxu0
        %v2013 = vadd.f32 %v1676, %v2012
        %2014 = vmatprep.mubr.bf16.mxu0 %v1855
        %2015 = vmatmul.mubr.bf16.gmra.mrb[0].mxu0 %v1854
        %v2016 = vpop.f32.mrb[0].mxu0
        %v2017 = vadd.f32 %v1680, %v2016
        %v2018 = vpop.f32.mrb[0].mxu0
        %v2019 = vadd.f32 %v1680, %v2018
        %v2020 = vpop.f32.mrb[0].mxu0
        %v2021 = vadd.f32 %v1684, %v2020
        %v2022 = vpop.f32.mrb[0].mxu0
        %v2023 = vadd.f32 %v1684, %v2022
        %2024 = vmatprep.mubr.bf16.mxu0 %v1857
        %2025 = vmatmul.mubr.bf16.gmra.mrb[0].mxu0 %v1856
        %v2026 = vpop.f32.mrb[0].mxu0
        %v2027 = vadd.f32 %v1688, %v2026
        %v2028 = vpop.f32.mrb[0].mxu0
        %v2029 = vadd.f32 %v1688, %v2028
        %v2030 = vpop.f32.mrb[0].mxu0
        %v2031 = vadd.f32 %v1692, %v2030
        %v2032 = vpop.f32.mrb[0].mxu0
        %v2033 = vadd.f32 %v1692, %v2032
        %2034 = vmatprep.mubr.bf16.mxu0 %v1859
        %2035 = vmatmul.mubr.bf16.gmra.mrb[0].mxu0 %v1858
        %v2036 = vpop.f32.mrb[0].mxu0
        %v2037 = vadd.f32 %v1696, %v2036
        %v2038 = vpop.f32.mrb[0].mxu0
        %v2039 = vadd.f32 %v1696, %v2038
        %v2040 = vpop.f32.mrb[0].mxu0
        %v2041 = vadd.f32 %v1700, %v2040
        %v2042 = vpop.f32.mrb[0].mxu0
        %v2043 = vadd.f32 %v1700, %v2042
        %2044 = vmatprep.mubr.bf16.mxu0 %v1861
        %2045 = vmatmul.mubr.bf16.gmra.mrb[0].mxu0 %v1860
        %v2046 = vpop.f32.mrb[0].mxu0
        %v2047 = vadd.f32 %v1704, %v2046
        %v2048 = vpop.f32.mrb[0].mxu0
        %v2049 = vadd.f32 %v1704, %v2048
        %v2050 = vpop.f32.mrb[0].mxu0
        %v2051 = vadd.f32 %v1708, %v2050
        %v2052 = vpop.f32.mrb[0].mxu0
        %v2053 = vadd.f32 %v1708, %v2052
        %2054 = vmatprep.mubr.bf16.mxu0 %v1863
        %2055 = vmatmul.mubr.bf16.gmra.mrb[0].mxu0 %v1862
        %v2056 = vpop.f32.mrb[0].mxu0
        %v2057 = vadd.f32 %v1712, %v2056
        %v2058 = vpop.f32.mrb[0].mxu0
        %v2059 = vadd.f32 %v1712, %v2058
        %v2060 = vpop.f32.mrb[0].mxu0
        %v2061 = vadd.f32 %v1716, %v2060
        %v2062 = vpop.f32.mrb[0].mxu0
        %v2063 = vadd.f32 %v1716, %v2062
        %2064 = vmatprep.mubr.bf16.mxu0 %v1865
        %2065 = vmatmul.mubr.bf16.gmra.mrb[0].mxu0 %v1864
        %v2066 = vpop.f32.mrb[0].mxu0
        %v2067 = vadd.f32 %v1720, %v2066
        %v2068 = vpop.f32.mrb[0].mxu0
        %v2069 = vadd.f32 %v1720, %v2068
        %v2070 = vpop.f32.mrb[0].mxu0
        %v2071 = vadd.f32 %v1724, %v2070
        %v2072 = vpop.f32.mrb[0].mxu0
        %v2073 = vadd.f32 %v1724, %v2072
        %2074 = vmatprep.mubr.bf16.mxu0 %v1867
        %2075 = vmatmul.mubr.bf16.gmra.mrb[0].mxu0 %v1866
        %v2076 = vpop.f32.mrb[0].mxu0
        %v2077 = vadd.f32 %v1728, %v2076
        %v2078 = vpop.f32.mrb[0].mxu0
        %v2079 = vadd.f32 %v1728, %v2078
        %v2080 = vpop.f32.mrb[0].mxu0
        %v2081 = vadd.f32 %v1732, %v2080
        %v2082 = vpop.f32.mrb[0].mxu0
        %v2083 = vadd.f32 %v1732, %v2082
        %2084 = vmatprep.mubr.bf16.mxu0 %v1869
        %2085 = vmatmul.mubr.bf16.gmra.mrb[0].mxu0 %v1868
        %v2086 = vpop.f32.mrb[0].mxu0
        %v2087 = vadd.f32 %v1736, %v2086
        %v2088 = vpop.f32.mrb[0].mxu0
        %v2089 = vadd.f32 %v1736, %v2088
        %v2090 = vpop.f32.mrb[0].mxu0
        %v2091 = vadd.f32 %v1740, %v2090
        %v2092 = vpop.f32.mrb[0].mxu0
        %v2093 = vadd.f32 %v1740, %v2092
        %2094 = vdwg.mxu0
        %v2095 = vmax.f32 %v1937, 0.0
        %v2096 = vmax.f32 %v1939, 0.0
        %v2097 = vmax.f32 %v1941, 0.0
        %v2098 = vmax.f32 %v1943, 0.0
        %v2099 = vmax.f32 %v1947, 0.0
        %v2100 = vmax.f32 %v1949, 0.0
        %v2101 = vmax.f32 %v1951, 0.0
        %v2102 = vmax.f32 %v1953, 0.0
        %v2103 = vmax.f32 %v1957, 0.0
        %v2104 = vmax.f32 %v1959, 0.0
        %v2105 = vmax.f32 %v1961, 0.0
        %v2106 = vmax.f32 %v1963, 0.0
        %v2107 = vmax.f32 %v1967, 0.0
        %v2108 = vmax.f32 %v1969, 0.0
        %v2109 = vmax.f32 %v1971, 0.0
        %v2110 = vmax.f32 %v1973, 0.0
        %v2111 = vmax.f32 %v1977, 0.0
        %v2112 = vmax.f32 %v1979, 0.0
        %v2113 = vmax.f32 %v1981, 0.0
        %v2114 = vmax.f32 %v1983, 0.0
        %v2115 = vmax.f32 %v1987, 0.0
        %v2116 = vmax.f32 %v1989, 0.0
        %v2117 = vmax.f32 %v1991, 0.0
        %v2118 = vmax.f32 %v1993, 0.0
        %v2119 = vmax.f32 %v1997, 0.0
        %v2120 = vmax.f32 %v1999, 0.0
        %v2121 = vmax.f32 %v2001, 0.0
        %v2122 = vmax.f32 %v2003, 0.0
        %v2123 = vmax.f32 %v2007, 0.0
        %v2124 = vmax.f32 %v2009, 0.0
        %v2125 = vmax.f32 %v2011, 0.0
        %v2126 = vmax.f32 %v2013, 0.0
        %v2127 = vmax.f32 %v2017, 0.0
        %v2128 = vmax.f32 %v2019, 0.0
        %v2129 = vmax.f32 %v2021, 0.0
        %v2130 = vmax.f32 %v2023, 0.0
        %v2131 = vmax.f32 %v2027, 0.0
        %v2132 = vmax.f32 %v2029, 0.0
        %v2133 = vmax.f32 %v2031, 0.0
        %v2134 = vmax.f32 %v2033, 0.0
        %v2135 = vmax.f32 %v2037, 0.0
        %v2136 = vmax.f32 %v2039, 0.0
        %v2137 = vmax.f32 %v2041, 0.0
        %v2138 = vmax.f32 %v2043, 0.0
        %v2139 = vmax.f32 %v2047, 0.0
        %v2140 = vmax.f32 %v2049, 0.0
        %v2141 = vmax.f32 %v2051, 0.0
        %v2142 = vmax.f32 %v2053, 0.0
        %v2143 = vmax.f32 %v2057, 0.0
        %v2144 = vmax.f32 %v2059, 0.0
        %v2145 = vmax.f32 %v2061, 0.0
        %v2146 = vmax.f32 %v2063, 0.0
        %v2147 = vmax.f32 %v2067, 0.0
        %v2148 = vmax.f32 %v2069, 0.0
        %v2149 = vmax.f32 %v2071, 0.0
        %v2150 = vmax.f32 %v2073, 0.0
        %v2151 = vmax.f32 %v2077, 0.0
        %v2152 = vmax.f32 %v2079, 0.0
        %v2153 = vmax.f32 %v2081, 0.0
        %v2154 = vmax.f32 %v2083, 0.0
        %v2155 = vmax.f32 %v2087, 0.0
        %v2156 = vmax.f32 %v2089, 0.0
        %v2157 = vmax.f32 %v2091, 0.0
        %v2158 = vmax.f32 %v2093, 0.0
        %v2159 = vpack.c.bf16 %v2097, %v2095
        %v2160 = vpack.c.bf16 %v2098, %v2096
        %v2161 = vpack.c.bf16 %v2101, %v2099
        %v2162 = vpack.c.bf16 %v2102, %v2100
        %v2163 = vpack.c.bf16 %v2105, %v2103
        %v2164 = vpack.c.bf16 %v2106, %v2104
        %v2165 = vpack.c.bf16 %v2109, %v2107
        %v2166 = vpack.c.bf16 %v2110, %v2108
        %v2167 = vpack.c.bf16 %v2113, %v2111
        %v2168 = vpack.c.bf16 %v2114, %v2112
        %v2169 = vpack.c.bf16 %v2117, %v2115
        %v2170 = vpack.c.bf16 %v2118, %v2116
        %v2171 = vpack.c.bf16 %v2121, %v2119
        %v2172 = vpack.c.bf16 %v2122, %v2120
        %v2173 = vpack.c.bf16 %v2125, %v2123
        %v2174 = vpack.c.bf16 %v2126, %v2124
        %v2175 = vpack.c.bf16 %v2129, %v2127
        %v2176 = vpack.c.bf16 %v2130, %v2128
        %v2177 = vpack.c.bf16 %v2133, %v2131
        %v2178 = vpack.c.bf16 %v2134, %v2132
        %v2179 = vpack.c.bf16 %v2137, %v2135
        %v2180 = vpack.c.bf16 %v2138, %v2136
        %v2181 = vpack.c.bf16 %v2141, %v2139
        %v2182 = vpack.c.bf16 %v2142, %v2140
        %v2183 = vpack.c.bf16 %v2145, %v2143
        %v2184 = vpack.c.bf16 %v2146, %v2144
        %v2185 = vpack.c.bf16 %v2149, %v2147
        %v2186 = vpack.c.bf16 %v2150, %v2148
        %v2187 = vpack.c.bf16 %v2153, %v2151
        %v2188 = vpack.c.bf16 %v2154, %v2152
        %v2189 = vpack.c.bf16 %v2157, %v2155
        %v2190 = vpack.c.bf16 %v2158, %v2156
        %s2191 = scalar_lea.vmem [#allocation3], 512
        %v2192 = vld [vmem:[%s2191] sm:$0xff]
        %v2193 = vld [vmem:[%s2191 + $0x8] sm:$0xff]
        %v2194 = vld [vmem:[%s2191 + $0x10] sm:$0xff]
        %v2195 = vld [vmem:[%s2191 + $0x18] sm:$0xff]
        %v2196 = vld [vmem:[%s2191 + $0x20] sm:$0xff]
        %v2197 = vld [vmem:[%s2191 + $0x28] sm:$0xff]
        %v2198 = vld [vmem:[%s2191 + $0x30] sm:$0xff]
        %v2199 = vld [vmem:[%s2191 + $0x38] sm:$0xff]
        %v2200 = vld [vmem:[%s2191 + $0x40] sm:$0xff]
        %v2201 = vld [vmem:[%s2191 + $0x48] sm:$0xff]
        %v2202 = vld [vmem:[%s2191 + $0x50] sm:$0xff]
        %v2203 = vld [vmem:[%s2191 + $0x58] sm:$0xff]
        %v2204 = vld [vmem:[%s2191 + $0x60] sm:$0xff]
        %v2205 = vld [vmem:[%s2191 + $0x68] sm:$0xff]
        %v2206 = vld [vmem:[%s2191 + $0x70] sm:$0xff]
        %v2207 = vld [vmem:[%s2191 + $0x78] sm:$0xff]
        %v2208 = vld [vmem:[%s2191 + $0x80] sm:$0xff]
        %v2209 = vld [vmem:[%s2191 + $0x88] sm:$0xff]
        %v2210 = vld [vmem:[%s2191 + $0x90] sm:$0xff]
        %v2211 = vld [vmem:[%s2191 + $0x98] sm:$0xff]
        %v2212 = vld [vmem:[%s2191 + $0xa0] sm:$0xff]
        %v2213 = vld [vmem:[%s2191 + $0xa8] sm:$0xff]
        %v2214 = vld [vmem:[%s2191 + $0xb0] sm:$0xff]
        %v2215 = vld [vmem:[%s2191 + $0xb8] sm:$0xff]
        %v2216 = vld [vmem:[%s2191 + $0xc0] sm:$0xff]
        %v2217 = vld [vmem:[%s2191 + $0xc8] sm:$0xff]
        %v2218 = vld [vmem:[%s2191 + $0xd0] sm:$0xff]
        %v2219 = vld [vmem:[%s2191 + $0xd8] sm:$0xff]
        %v2220 = vld [vmem:[%s2191 + $0xe0] sm:$0xff]
        %v2221 = vld [vmem:[%s2191 + $0xe8] sm:$0xff]
        %v2222 = vld [vmem:[%s2191 + $0xf0] sm:$0xff]
        %v2223 = vld [vmem:[%s2191 + $0xf8] sm:$0xff]
        %2224 = vset.pattern.permute.xlu0 3
        %2225 = vperm.xlu0 %2224, %v352
        %v2226 = vpop.permute.xlu0 %2225
        %2228 = vset.pattern.permute.xlu0 3
        %2229 = vperm.xlu0 %2228, %v353
        %v2230 = vpop.permute.xlu0 %2229
        %2232 = vset.pattern.permute.xlu0 3
        %2233 = vperm.xlu0 %2232, %v354
        %v2234 = vpop.permute.xlu0 %2233
        %2236 = vset.pattern.permute.xlu0 3
        %2237 = vperm.xlu0 %2236, %v355
        %v2238 = vpop.permute.xlu0 %2237
        %2240 = vset.pattern.permute.xlu0 3
        %2241 = vperm.xlu0 %2240, %v356
        %v2242 = vpop.permute.xlu0 %2241
        %2244 = vset.pattern.permute.xlu0 3
        %2245 = vperm.xlu0 %2244, %v357
        %v2246 = vpop.permute.xlu0 %2245
        %2248 = vset.pattern.permute.xlu0 3
        %2249 = vperm.xlu0 %2248, %v358
        %v2250 = vpop.permute.xlu0 %2249
        %2252 = vset.pattern.permute.xlu0 3
        %2253 = vperm.xlu0 %2252, %v359
        %v2254 = vpop.permute.xlu0 %2253
        %2256 = vset.pattern.permute.xlu0 3
        %2257 = vperm.xlu0 %2256, %v360
        %v2258 = vpop.permute.xlu0 %2257
        %2260 = vset.pattern.permute.xlu0 3
        %2261 = vperm.xlu0 %2260, %v361
        %v2262 = vpop.permute.xlu0 %2261
        %2264 = vset.pattern.permute.xlu0 3
        %2265 = vperm.xlu0 %2264, %v362
        %v2266 = vpop.permute.xlu0 %2265
        %2268 = vset.pattern.permute.xlu0 3
        %2269 = vperm.xlu0 %2268, %v363
        %v2270 = vpop.permute.xlu0 %2269
        %2272 = vset.pattern.permute.xlu0 3
        %2273 = vperm.xlu0 %2272, %v364
        %v2274 = vpop.permute.xlu0 %2273
        %2276 = vset.pattern.permute.xlu0 3
        %2277 = vperm.xlu0 %2276, %v365
        %v2278 = vpop.permute.xlu0 %2277
        %2280 = vset.pattern.permute.xlu0 3
        %2281 = vperm.xlu0 %2280, %v366
        %v2282 = vpop.permute.xlu0 %2281
        %2284 = vset.pattern.permute.xlu0 3
        %2285 = vperm.xlu0 %2284, %v367
        %v2286 = vpop.permute.xlu0 %2285
        %2288 = vset.pattern.permute.xlu0 3
        %2289 = vperm.xlu0 %2288, %v368
        %v2290 = vpop.permute.xlu0 %2289
        %2292 = vset.pattern.permute.xlu0 3
        %2293 = vperm.xlu0 %2292, %v369
        %v2294 = vpop.permute.xlu0 %2293
        %2296 = vset.pattern.permute.xlu0 3
        %2297 = vperm.xlu0 %2296, %v370
        %v2298 = vpop.permute.xlu0 %2297
        %2300 = vset.pattern.permute.xlu0 3
        %2301 = vperm.xlu0 %2300, %v371
        %v2302 = vpop.permute.xlu0 %2301
        %2304 = vset.pattern.permute.xlu0 3
        %2305 = vperm.xlu0 %2304, %v372
        %v2306 = vpop.permute.xlu0 %2305
        %2308 = vset.pattern.permute.xlu0 3
        %2309 = vperm.xlu0 %2308, %v373
        %v2310 = vpop.permute.xlu0 %2309
        %2312 = vset.pattern.permute.xlu0 3
        %2313 = vperm.xlu0 %2312, %v374
        %v2314 = vpop.permute.xlu0 %2313
        %2316 = vset.pattern.permute.xlu0 3
        %2317 = vperm.xlu0 %2316, %v375
        %v2318 = vpop.permute.xlu0 %2317
        %2320 = vset.pattern.permute.xlu0 3
        %2321 = vperm.xlu0 %2320, %v376
        %v2322 = vpop.permute.xlu0 %2321
        %2324 = vset.pattern.permute.xlu0 3
        %2325 = vperm.xlu0 %2324, %v377
        %v2326 = vpop.permute.xlu0 %2325
        %2328 = vset.pattern.permute.xlu0 3
        %2329 = vperm.xlu0 %2328, %v378
        %v2330 = vpop.permute.xlu0 %2329
        %2332 = vset.pattern.permute.xlu0 3
        %2333 = vperm.xlu0 %2332, %v379
        %v2334 = vpop.permute.xlu0 %2333
        %2336 = vset.pattern.permute.xlu0 3
        %2337 = vperm.xlu0 %2336, %v380
        %v2338 = vpop.permute.xlu0 %2337
        %2340 = vset.pattern.permute.xlu0 3
        %2341 = vperm.xlu0 %2340, %v381
        %v2342 = vpop.permute.xlu0 %2341
        %2344 = vset.pattern.permute.xlu0 3
        %2345 = vperm.xlu0 %2344, %v382
        %v2346 = vpop.permute.xlu0 %2345
        %2348 = vset.pattern.permute.xlu0 3
        %2349 = vperm.xlu0 %2348, %v383
        %v2350 = vpop.permute.xlu0 %2349
        %v2384 = vunpack.c.l.b16 %v2192
        %v2385 = vunpack.c.h.b16 %v2192
        %v2386 = vunpack.c.l.b16 %v2193
        %v2387 = vunpack.c.h.b16 %v2193
        %v2388 = vunpack.c.l.b16 %v2194
        %v2389 = vunpack.c.h.b16 %v2194
        %v2390 = vunpack.c.l.b16 %v2195
        %v2391 = vunpack.c.h.b16 %v2195
        %v2392 = vunpack.c.l.b16 %v2196
        %v2393 = vunpack.c.h.b16 %v2196
        %v2394 = vunpack.c.l.b16 %v2197
        %v2395 = vunpack.c.h.b16 %v2197
        %v2396 = vunpack.c.l.b16 %v2198
        %v2397 = vunpack.c.h.b16 %v2198
        %v2398 = vunpack.c.l.b16 %v2199
        %v2399 = vunpack.c.h.b16 %v2199
        %v2400 = vunpack.c.l.b16 %v2200
        %v2401 = vunpack.c.h.b16 %v2200
        %v2402 = vunpack.c.l.b16 %v2201
        %v2403 = vunpack.c.h.b16 %v2201
        %v2404 = vunpack.c.l.b16 %v2202
        %v2405 = vunpack.c.h.b16 %v2202
        %v2406 = vunpack.c.l.b16 %v2203
        %v2407 = vunpack.c.h.b16 %v2203
        %v2408 = vunpack.c.l.b16 %v2204
        %v2409 = vunpack.c.h.b16 %v2204
        %v2410 = vunpack.c.l.b16 %v2205
        %v2411 = vunpack.c.h.b16 %v2205
        %v2412 = vunpack.c.l.b16 %v2206
        %v2413 = vunpack.c.h.b16 %v2206
        %v2414 = vunpack.c.l.b16 %v2207
        %v2415 = vunpack.c.h.b16 %v2207
        %v2416 = vunpack.c.l.b16 %v2208
        %v2417 = vunpack.c.h.b16 %v2208
        %v2418 = vunpack.c.l.b16 %v2209
        %v2419 = vunpack.c.h.b16 %v2209
        %v2420 = vunpack.c.l.b16 %v2210
        %v2421 = vunpack.c.h.b16 %v2210
        %v2422 = vunpack.c.l.b16 %v2211
        %v2423 = vunpack.c.h.b16 %v2211
        %v2424 = vunpack.c.l.b16 %v2212
        %v2425 = vunpack.c.h.b16 %v2212
        %v2426 = vunpack.c.l.b16 %v2213
        %v2427 = vunpack.c.h.b16 %v2213
        %v2428 = vunpack.c.l.b16 %v2214
        %v2429 = vunpack.c.h.b16 %v2214
        %v2430 = vunpack.c.l.b16 %v2215
        %v2431 = vunpack.c.h.b16 %v2215
        %v2432 = vunpack.c.l.b16 %v2216
        %v2433 = vunpack.c.h.b16 %v2216
        %v2434 = vunpack.c.l.b16 %v2217
        %v2435 = vunpack.c.h.b16 %v2217
        %v2436 = vunpack.c.l.b16 %v2218
        %v2437 = vunpack.c.h.b16 %v2218
        %v2438 = vunpack.c.l.b16 %v2219
        %v2439 = vunpack.c.h.b16 %v2219
        %v2440 = vunpack.c.l.b16 %v2220
        %v2441 = vunpack.c.h.b16 %v2220
        %v2442 = vunpack.c.l.b16 %v2221
        %v2443 = vunpack.c.h.b16 %v2221
        %v2444 = vunpack.c.l.b16 %v2222
        %v2445 = vunpack.c.h.b16 %v2222
        %v2446 = vunpack.c.l.b16 %v2223
        %v2447 = vunpack.c.h.b16 %v2223
        %v2448 = vpack.c.b16 %v2386, %v2384
        %v2449 = vpack.c.b16 %v2387, %v2385
        %v2450 = vpack.c.b16 %v2390, %v2388
        %v2451 = vpack.c.b16 %v2391, %v2389
        %v2452 = vpack.c.b16 %v2394, %v2392
        %v2453 = vpack.c.b16 %v2395, %v2393
        %v2454 = vpack.c.b16 %v2398, %v2396
        %v2455 = vpack.c.b16 %v2399, %v2397
        %v2456 = vpack.c.b16 %v2402, %v2400
        %v2457 = vpack.c.b16 %v2403, %v2401
        %v2458 = vpack.c.b16 %v2406, %v2404
        %v2459 = vpack.c.b16 %v2407, %v2405
        %v2460 = vpack.c.b16 %v2410, %v2408
        %v2461 = vpack.c.b16 %v2411, %v2409
        %v2462 = vpack.c.b16 %v2414, %v2412
        %v2463 = vpack.c.b16 %v2415, %v2413
        %v2464 = vpack.c.b16 %v2418, %v2416
        %v2465 = vpack.c.b16 %v2419, %v2417
        %v2466 = vpack.c.b16 %v2422, %v2420
        %v2467 = vpack.c.b16 %v2423, %v2421
        %v2468 = vpack.c.b16 %v2426, %v2424
        %v2469 = vpack.c.b16 %v2427, %v2425
        %v2470 = vpack.c.b16 %v2430, %v2428
        %v2471 = vpack.c.b16 %v2431, %v2429
        %v2472 = vpack.c.b16 %v2434, %v2432
        %v2473 = vpack.c.b16 %v2435, %v2433
        %v2474 = vpack.c.b16 %v2438, %v2436
        %v2475 = vpack.c.b16 %v2439, %v2437
        %v2476 = vpack.c.b16 %v2442, %v2440
        %v2477 = vpack.c.b16 %v2443, %v2441
        %v2478 = vpack.c.b16 %v2446, %v2444
        %v2479 = vpack.c.b16 %v2447, %v2445
        %2512 = vmatprep.subr.bf16.mxu0 %v2160
        %2513 = vmatpush1.bf16.msra.mxu0 %v2159
        %2514 = vmatprep.subr.bf16.mxu0 %v2162
        %2515 = vmatpush1.bf16.msra.mxu0 %v2161
        %2516 = vmatprep.subr.bf16.mxu0 %v2164
        %2517 = vmatpush1.bf16.msra.mxu0 %v2163
        %2518 = vmatprep.subr.bf16.mxu0 %v2166
        %2519 = vmatpush1.bf16.msra.mxu0 %v2165
        %2520 = vmatprep.subr.bf16.mxu0 %v2168
        %2521 = vmatpush1.bf16.msra.mxu0 %v2167
        %2522 = vmatprep.subr.bf16.mxu0 %v2170
        %2523 = vmatpush1.bf16.msra.mxu0 %v2169
        %2524 = vmatprep.subr.bf16.mxu0 %v2172
        %2525 = vmatpush1.bf16.msra.mxu0 %v2171
        %2526 = vmatprep.subr.bf16.mxu0 %v2174
        %2527 = vmatpush1.bf16.msra.mxu0 %v2173
        %2528 = vmatprep.subr.bf16.mxu0 %v2176
        %2529 = vmatpush1.bf16.msra.mxu0 %v2175
        %2530 = vmatprep.subr.bf16.mxu0 %v2178
        %2531 = vmatpush1.bf16.msra.mxu0 %v2177
        %2532 = vmatprep.subr.bf16.mxu0 %v2180
        %2533 = vmatpush1.bf16.msra.mxu0 %v2179
        %2534 = vmatprep.subr.bf16.mxu0 %v2182
        %2535 = vmatpush1.bf16.msra.mxu0 %v2181
        %2536 = vmatprep.subr.bf16.mxu0 %v2184
        %2537 = vmatpush1.bf16.msra.mxu0 %v2183
        %2538 = vmatprep.subr.bf16.mxu0 %v2186
        %2539 = vmatpush1.bf16.msra.mxu0 %v2185
        %2540 = vmatprep.subr.bf16.mxu0 %v2188
        %2541 = vmatpush1.bf16.msra.mxu0 %v2187
        %2542 = vmatprep.subr.bf16.mxu0 %v2190
        %2543 = vmatpush1.bf16.msra.mxu0 %v2189
        %2544 = vmatprep.mubr.bf16.mxu0 %v2449
        %2545 = vmatmul.mubr.bf16.gmra.mrb[0].mxu0 %v2448
        %v2546 = vpop.f32.mrb[0].mxu0
        %v2547 = vadd.f32 %v2226, %v2546
        %v2548 = vpop.f32.mrb[0].mxu0
        %v2549 = vadd.f32 %v2226, %v2548
        %v2550 = vpop.f32.mrb[0].mxu0
        %v2551 = vadd.f32 %v2230, %v2550
        %v2552 = vpop.f32.mrb[0].mxu0
        %v2553 = vadd.f32 %v2230, %v2552
        %2554 = vmatprep.mubr.bf16.mxu0 %v2451
        %2555 = vmatmul.mubr.bf16.gmra.mrb[0].mxu0 %v2450
        %v2556 = vpop.f32.mrb[0].mxu0
        %v2557 = vadd.f32 %v2234, %v2556
        %v2558 = vpop.f32.mrb[0].mxu0
        %v2559 = vadd.f32 %v2234, %v2558
        %v2560 = vpop.f32.mrb[0].mxu0
        %v2561 = vadd.f32 %v2238, %v2560
        %v2562 = vpop.f32.mrb[0].mxu0
        %v2563 = vadd.f32 %v2238, %v2562
        %2564 = vmatprep.mubr.bf16.mxu0 %v2453
        %2565 = vmatmul.mubr.bf16.gmra.mrb[0].mxu0 %v2452
        %v2566 = vpop.f32.mrb[0].mxu0
        %v2567 = vadd.f32 %v2242, %v2566
        %v2568 = vpop.f32.mrb[0].mxu0
        %v2569 = vadd.f32 %v2242, %v2568
        %v2570 = vpop.f32.mrb[0].mxu0
        %v2571 = vadd.f32 %v2246, %v2570
        %v2572 = vpop.f32.mrb[0].mxu0
        %v2573 = vadd.f32 %v2246, %v2572
        %2574 = vmatprep.mubr.bf16.mxu0 %v2455
        %2575 = vmatmul.mubr.bf16.gmra.mrb[0].mxu0 %v2454
        %v2576 = vpop.f32.mrb[0].mxu0
        %v2577 = vadd.f32 %v2250, %v2576
        %v2578 = vpop.f32.mrb[0].mxu0
        %v2579 = vadd.f32 %v2250, %v2578
        %v2580 = vpop.f32.mrb[0].mxu0
        %v2581 = vadd.f32 %v2254, %v2580
        %v2582 = vpop.f32.mrb[0].mxu0
        %v2583 = vadd.f32 %v2254, %v2582
        %2584 = vmatprep.mubr.bf16.mxu0 %v2457
        %2585 = vmatmul.mubr.bf16.gmra.mrb[0].mxu0 %v2456
        %v2586 = vpop.f32.mrb[0].mxu0
        %v2587 = vadd.f32 %v2258, %v2586
        %v2588 = vpop.f32.mrb[0].mxu0
        %v2589 = vadd.f32 %v2258, %v2588
        %v2590 = vpop.f32.mrb[0].mxu0
        %v2591 = vadd.f32 %v2262, %v2590
        %v2592 = vpop.f32.mrb[0].mxu0
        %v2593 = vadd.f32 %v2262, %v2592
        %2594 = vmatprep.mubr.bf16.mxu0 %v2459
        %2595 = vmatmul.mubr.bf16.gmra.mrb[0].mxu0 %v2458
        %v2596 = vpop.f32.mrb[0].mxu0
        %v2597 = vadd.f32 %v2266, %v2596
        %v2598 = vpop.f32.mrb[0].mxu0
        %v2599 = vadd.f32 %v2266, %v2598
        %v2600 = vpop.f32.mrb[0].mxu0
        %v2601 = vadd.f32 %v2270, %v2600
        %v2602 = vpop.f32.mrb[0].mxu0
        %v2603 = vadd.f32 %v2270, %v2602
        %2604 = vmatprep.mubr.bf16.mxu0 %v2461
        %2605 = vmatmul.mubr.bf16.gmra.mrb[0].mxu0 %v2460
        %v2606 = vpop.f32.mrb[0].mxu0
        %v2607 = vadd.f32 %v2274, %v2606
        %v2608 = vpop.f32.mrb[0].mxu0
        %v2609 = vadd.f32 %v2274, %v2608
        %v2610 = vpop.f32.mrb[0].mxu0
        %v2611 = vadd.f32 %v2278, %v2610
        %v2612 = vpop.f32.mrb[0].mxu0
        %v2613 = vadd.f32 %v2278, %v2612
        %2614 = vmatprep.mubr.bf16.mxu0 %v2463
        %2615 = vmatmul.mubr.bf16.gmra.mrb[0].mxu0 %v2462
        %v2616 = vpop.f32.mrb[0].mxu0
        %v2617 = vadd.f32 %v2282, %v2616
        %v2618 = vpop.f32.mrb[0].mxu0
        %v2619 = vadd.f32 %v2282, %v2618
        %v2620 = vpop.f32.mrb[0].mxu0
        %v2621 = vadd.f32 %v2286, %v2620
        %v2622 = vpop.f32.mrb[0].mxu0
        %v2623 = vadd.f32 %v2286, %v2622
        %2624 = vmatprep.mubr.bf16.mxu0 %v2465
        %2625 = vmatmul.mubr.bf16.gmra.mrb[0].mxu0 %v2464
        %v2626 = vpop.f32.mrb[0].mxu0
        %v2627 = vadd.f32 %v2290, %v2626
        %v2628 = vpop.f32.mrb[0].mxu0
        %v2629 = vadd.f32 %v2290, %v2628
        %v2630 = vpop.f32.mrb[0].mxu0
        %v2631 = vadd.f32 %v2294, %v2630
        %v2632 = vpop.f32.mrb[0].mxu0
        %v2633 = vadd.f32 %v2294, %v2632
        %2634 = vmatprep.mubr.bf16.mxu0 %v2467
        %2635 = vmatmul.mubr.bf16.gmra.mrb[0].mxu0 %v2466
        %v2636 = vpop.f32.mrb[0].mxu0
        %v2637 = vadd.f32 %v2298, %v2636
        %v2638 = vpop.f32.mrb[0].mxu0
        %v2639 = vadd.f32 %v2298, %v2638
        %v2640 = vpop.f32.mrb[0].mxu0
        %v2641 = vadd.f32 %v2302, %v2640
        %v2642 = vpop.f32.mrb[0].mxu0
        %v2643 = vadd.f32 %v2302, %v2642
        %2644 = vmatprep.mubr.bf16.mxu0 %v2469
        %2645 = vmatmul.mubr.bf16.gmra.mrb[0].mxu0 %v2468
        %v2646 = vpop.f32.mrb[0].mxu0
        %v2647 = vadd.f32 %v2306, %v2646
        %v2648 = vpop.f32.mrb[0].mxu0
        %v2649 = vadd.f32 %v2306, %v2648
        %v2650 = vpop.f32.mrb[0].mxu0
        %v2651 = vadd.f32 %v2310, %v2650
        %v2652 = vpop.f32.mrb[0].mxu0
        %v2653 = vadd.f32 %v2310, %v2652
        %2654 = vmatprep.mubr.bf16.mxu0 %v2471
        %2655 = vmatmul.mubr.bf16.gmra.mrb[0].mxu0 %v2470
        %v2656 = vpop.f32.mrb[0].mxu0
        %v2657 = vadd.f32 %v2314, %v2656
        %v2658 = vpop.f32.mrb[0].mxu0
        %v2659 = vadd.f32 %v2314, %v2658
        %v2660 = vpop.f32.mrb[0].mxu0
        %v2661 = vadd.f32 %v2318, %v2660
        %v2662 = vpop.f32.mrb[0].mxu0
        %v2663 = vadd.f32 %v2318, %v2662
        %2664 = vmatprep.mubr.bf16.mxu0 %v2473
        %2665 = vmatmul.mubr.bf16.gmra.mrb[0].mxu0 %v2472
        %v2666 = vpop.f32.mrb[0].mxu0
        %v2667 = vadd.f32 %v2322, %v2666
        %v2668 = vpop.f32.mrb[0].mxu0
        %v2669 = vadd.f32 %v2322, %v2668
        %v2670 = vpop.f32.mrb[0].mxu0
        %v2671 = vadd.f32 %v2326, %v2670
        %v2672 = vpop.f32.mrb[0].mxu0
        %v2673 = vadd.f32 %v2326, %v2672
        %2674 = vmatprep.mubr.bf16.mxu0 %v2475
        %2675 = vmatmul.mubr.bf16.gmra.mrb[0].mxu0 %v2474
        %v2676 = vpop.f32.mrb[0].mxu0
        %v2677 = vadd.f32 %v2330, %v2676
        %v2678 = vpop.f32.mrb[0].mxu0
        %v2679 = vadd.f32 %v2330, %v2678
        %v2680 = vpop.f32.mrb[0].mxu0
        %v2681 = vadd.f32 %v2334, %v2680
        %v2682 = vpop.f32.mrb[0].mxu0
        %v2683 = vadd.f32 %v2334, %v2682
        %2684 = vmatprep.mubr.bf16.mxu0 %v2477
        %2685 = vmatmul.mubr.bf16.gmra.mrb[0].mxu0 %v2476
        %v2686 = vpop.f32.mrb[0].mxu0
        %v2687 = vadd.f32 %v2338, %v2686
        %v2688 = vpop.f32.mrb[0].mxu0
        %v2689 = vadd.f32 %v2338, %v2688
        %v2690 = vpop.f32.mrb[0].mxu0
        %v2691 = vadd.f32 %v2342, %v2690
        %v2692 = vpop.f32.mrb[0].mxu0
        %v2693 = vadd.f32 %v2342, %v2692
        %2694 = vmatprep.mubr.bf16.mxu0 %v2479
        %2695 = vmatmul.mubr.bf16.gmra.mrb[0].mxu0 %v2478
        %v2696 = vpop.f32.mrb[0].mxu0
        %v2697 = vadd.f32 %v2346, %v2696
        %v2698 = vpop.f32.mrb[0].mxu0
        %v2699 = vadd.f32 %v2346, %v2698
        %v2700 = vpop.f32.mrb[0].mxu0
        %v2701 = vadd.f32 %v2350, %v2700
        %v2702 = vpop.f32.mrb[0].mxu0
        %v2703 = vadd.f32 %v2350, %v2702
        %2704 = vdwg.mxu0
        %v2705 = vmax.f32 %v2547, 0.0
        %v2706 = vmax.f32 %v2549, 0.0
        %v2707 = vmax.f32 %v2551, 0.0
        %v2708 = vmax.f32 %v2553, 0.0
        %v2709 = vmax.f32 %v2557, 0.0
        %v2710 = vmax.f32 %v2559, 0.0
        %v2711 = vmax.f32 %v2561, 0.0
        %v2712 = vmax.f32 %v2563, 0.0
        %v2713 = vmax.f32 %v2567, 0.0
        %v2714 = vmax.f32 %v2569, 0.0
        %v2715 = vmax.f32 %v2571, 0.0
        %v2716 = vmax.f32 %v2573, 0.0
        %v2717 = vmax.f32 %v2577, 0.0
        %v2718 = vmax.f32 %v2579, 0.0
        %v2719 = vmax.f32 %v2581, 0.0
        %v2720 = vmax.f32 %v2583, 0.0
        %v2721 = vmax.f32 %v2587, 0.0
        %v2722 = vmax.f32 %v2589, 0.0
        %v2723 = vmax.f32 %v2591, 0.0
        %v2724 = vmax.f32 %v2593, 0.0
        %v2725 = vmax.f32 %v2597, 0.0
        %v2726 = vmax.f32 %v2599, 0.0
        %v2727 = vmax.f32 %v2601, 0.0
        %v2728 = vmax.f32 %v2603, 0.0
        %v2729 = vmax.f32 %v2607, 0.0
        %v2730 = vmax.f32 %v2609, 0.0
        %v2731 = vmax.f32 %v2611, 0.0
        %v2732 = vmax.f32 %v2613, 0.0
        %v2733 = vmax.f32 %v2617, 0.0
        %v2734 = vmax.f32 %v2619, 0.0
        %v2735 = vmax.f32 %v2621, 0.0
        %v2736 = vmax.f32 %v2623, 0.0
        %v2737 = vmax.f32 %v2627, 0.0
        %v2738 = vmax.f32 %v2629, 0.0
        %v2739 = vmax.f32 %v2631, 0.0
        %v2740 = vmax.f32 %v2633, 0.0
        %v2741 = vmax.f32 %v2637, 0.0
        %v2742 = vmax.f32 %v2639, 0.0
        %v2743 = vmax.f32 %v2641, 0.0
        %v2744 = vmax.f32 %v2643, 0.0
        %v2745 = vmax.f32 %v2647, 0.0
        %v2746 = vmax.f32 %v2649, 0.0
        %v2747 = vmax.f32 %v2651, 0.0
        %v2748 = vmax.f32 %v2653, 0.0
        %v2749 = vmax.f32 %v2657, 0.0
        %v2750 = vmax.f32 %v2659, 0.0
        %v2751 = vmax.f32 %v2661, 0.0
        %v2752 = vmax.f32 %v2663, 0.0
        %v2753 = vmax.f32 %v2667, 0.0
        %v2754 = vmax.f32 %v2669, 0.0
        %v2755 = vmax.f32 %v2671, 0.0
        %v2756 = vmax.f32 %v2673, 0.0
        %v2757 = vmax.f32 %v2677, 0.0
        %v2758 = vmax.f32 %v2679, 0.0
        %v2759 = vmax.f32 %v2681, 0.0
        %v2760 = vmax.f32 %v2683, 0.0
        %v2761 = vmax.f32 %v2687, 0.0
        %v2762 = vmax.f32 %v2689, 0.0
        %v2763 = vmax.f32 %v2691, 0.0
        %v2764 = vmax.f32 %v2693, 0.0
        %v2765 = vmax.f32 %v2697, 0.0
        %v2766 = vmax.f32 %v2699, 0.0
        %v2767 = vmax.f32 %v2701, 0.0
        %v2768 = vmax.f32 %v2703, 0.0
        %v2769 = vpack.c.bf16 %v2707, %v2705
        %v2770 = vpack.c.bf16 %v2708, %v2706
        %v2771 = vpack.c.bf16 %v2711, %v2709
        %v2772 = vpack.c.bf16 %v2712, %v2710
        %v2773 = vpack.c.bf16 %v2715, %v2713
        %v2774 = vpack.c.bf16 %v2716, %v2714
        %v2775 = vpack.c.bf16 %v2719, %v2717
        %v2776 = vpack.c.bf16 %v2720, %v2718
        %v2777 = vpack.c.bf16 %v2723, %v2721
        %v2778 = vpack.c.bf16 %v2724, %v2722
        %v2779 = vpack.c.bf16 %v2727, %v2725
        %v2780 = vpack.c.bf16 %v2728, %v2726
        %v2781 = vpack.c.bf16 %v2731, %v2729
        %v2782 = vpack.c.bf16 %v2732, %v2730
        %v2783 = vpack.c.bf16 %v2735, %v2733
        %v2784 = vpack.c.bf16 %v2736, %v2734
        %v2785 = vpack.c.bf16 %v2739, %v2737
        %v2786 = vpack.c.bf16 %v2740, %v2738
        %v2787 = vpack.c.bf16 %v2743, %v2741
        %v2788 = vpack.c.bf16 %v2744, %v2742
        %v2789 = vpack.c.bf16 %v2747, %v2745
        %v2790 = vpack.c.bf16 %v2748, %v2746
        %v2791 = vpack.c.bf16 %v2751, %v2749
        %v2792 = vpack.c.bf16 %v2752, %v2750
        %v2793 = vpack.c.bf16 %v2755, %v2753
        %v2794 = vpack.c.bf16 %v2756, %v2754
        %v2795 = vpack.c.bf16 %v2759, %v2757
        %v2796 = vpack.c.bf16 %v2760, %v2758
        %v2797 = vpack.c.bf16 %v2763, %v2761
        %v2798 = vpack.c.bf16 %v2764, %v2762
        %v2799 = vpack.c.bf16 %v2767, %v2765
        %v2800 = vpack.c.bf16 %v2768, %v2766
        %s2801 = scalar_lea.vmem [#allocation3], 768
        %v2802 = vld [vmem:[%s2801] sm:$0xff]
        %v2803 = vld [vmem:[%s2801 + $0x8] sm:$0xff]
        %v2804 = vld [vmem:[%s2801 + $0x10] sm:$0xff]
        %v2805 = vld [vmem:[%s2801 + $0x18] sm:$0xff]
        %v2806 = vld [vmem:[%s2801 + $0x20] sm:$0xff]
        %v2807 = vld [vmem:[%s2801 + $0x28] sm:$0xff]
        %v2808 = vld [vmem:[%s2801 + $0x30] sm:$0xff]
        %v2809 = vld [vmem:[%s2801 + $0x38] sm:$0xff]
        %v2810 = vld [vmem:[%s2801 + $0x40] sm:$0xff]
        %v2811 = vld [vmem:[%s2801 + $0x48] sm:$0xff]
        %v2812 = vld [vmem:[%s2801 + $0x50] sm:$0xff]
        %v2813 = vld [vmem:[%s2801 + $0x58] sm:$0xff]
        %v2814 = vld [vmem:[%s2801 + $0x60] sm:$0xff]
        %v2815 = vld [vmem:[%s2801 + $0x68] sm:$0xff]
        %v2816 = vld [vmem:[%s2801 + $0x70] sm:$0xff]
        %v2817 = vld [vmem:[%s2801 + $0x78] sm:$0xff]
        %v2818 = vld [vmem:[%s2801 + $0x80] sm:$0xff]
        %v2819 = vld [vmem:[%s2801 + $0x88] sm:$0xff]
        %v2820 = vld [vmem:[%s2801 + $0x90] sm:$0xff]
        %v2821 = vld [vmem:[%s2801 + $0x98] sm:$0xff]
        %v2822 = vld [vmem:[%s2801 + $0xa0] sm:$0xff]
        %v2823 = vld [vmem:[%s2801 + $0xa8] sm:$0xff]
        %v2824 = vld [vmem:[%s2801 + $0xb0] sm:$0xff]
        %v2825 = vld [vmem:[%s2801 + $0xb8] sm:$0xff]
        %v2826 = vld [vmem:[%s2801 + $0xc0] sm:$0xff]
        %v2827 = vld [vmem:[%s2801 + $0xc8] sm:$0xff]
        %v2828 = vld [vmem:[%s2801 + $0xd0] sm:$0xff]
        %v2829 = vld [vmem:[%s2801 + $0xd8] sm:$0xff]
        %v2830 = vld [vmem:[%s2801 + $0xe0] sm:$0xff]
        %v2831 = vld [vmem:[%s2801 + $0xe8] sm:$0xff]
        %v2832 = vld [vmem:[%s2801 + $0xf0] sm:$0xff]
        %v2833 = vld [vmem:[%s2801 + $0xf8] sm:$0xff]
        %2834 = vset.pattern.permute.xlu0 4
        %2835 = vperm.xlu0 %2834, %v352
        %v2836 = vpop.permute.xlu0 %2835
        %2838 = vset.pattern.permute.xlu0 4
        %2839 = vperm.xlu0 %2838, %v353
        %v2840 = vpop.permute.xlu0 %2839
        %2842 = vset.pattern.permute.xlu0 4
        %2843 = vperm.xlu0 %2842, %v354
        %v2844 = vpop.permute.xlu0 %2843
        %2846 = vset.pattern.permute.xlu0 4
        %2847 = vperm.xlu0 %2846, %v355
        %v2848 = vpop.permute.xlu0 %2847
        %2850 = vset.pattern.permute.xlu0 4
        %2851 = vperm.xlu0 %2850, %v356
        %v2852 = vpop.permute.xlu0 %2851
        %2854 = vset.pattern.permute.xlu0 4
        %2855 = vperm.xlu0 %2854, %v357
        %v2856 = vpop.permute.xlu0 %2855
        %2858 = vset.pattern.permute.xlu0 4
        %2859 = vperm.xlu0 %2858, %v358
        %v2860 = vpop.permute.xlu0 %2859
        %2862 = vset.pattern.permute.xlu0 4
        %2863 = vperm.xlu0 %2862, %v359
        %v2864 = vpop.permute.xlu0 %2863
        %2866 = vset.pattern.permute.xlu0 4
        %2867 = vperm.xlu0 %2866, %v360
        %v2868 = vpop.permute.xlu0 %2867
        %2870 = vset.pattern.permute.xlu0 4
        %2871 = vperm.xlu0 %2870, %v361
        %v2872 = vpop.permute.xlu0 %2871
        %2874 = vset.pattern.permute.xlu0 4
        %2875 = vperm.xlu0 %2874, %v362
        %v2876 = vpop.permute.xlu0 %2875
        %2878 = vset.pattern.permute.xlu0 4
        %2879 = vperm.xlu0 %2878, %v363
        %v2880 = vpop.permute.xlu0 %2879
        %2882 = vset.pattern.permute.xlu0 4
        %2883 = vperm.xlu0 %2882, %v364
        %v2884 = vpop.permute.xlu0 %2883
        %2886 = vset.pattern.permute.xlu0 4
        %2887 = vperm.xlu0 %2886, %v365
        %v2888 = vpop.permute.xlu0 %2887
        %2890 = vset.pattern.permute.xlu0 4
        %2891 = vperm.xlu0 %2890, %v366
        %v2892 = vpop.permute.xlu0 %2891
        %2894 = vset.pattern.permute.xlu0 4
        %2895 = vperm.xlu0 %2894, %v367
        %v2896 = vpop.permute.xlu0 %2895
        %2898 = vset.pattern.permute.xlu0 4
        %2899 = vperm.xlu0 %2898, %v368
        %v2900 = vpop.permute.xlu0 %2899
        %2902 = vset.pattern.permute.xlu0 4
        %2903 = vperm.xlu0 %2902, %v369
        %v2904 = vpop.permute.xlu0 %2903
        %2906 = vset.pattern.permute.xlu0 4
        %2907 = vperm.xlu0 %2906, %v370
        %v2908 = vpop.permute.xlu0 %2907
        %2910 = vset.pattern.permute.xlu0 4
        %2911 = vperm.xlu0 %2910, %v371
        %v2912 = vpop.permute.xlu0 %2911
        %2914 = vset.pattern.permute.xlu0 4
        %2915 = vperm.xlu0 %2914, %v372
        %v2916 = vpop.permute.xlu0 %2915
        %2918 = vset.pattern.permute.xlu0 4
        %2919 = vperm.xlu0 %2918, %v373
        %v2920 = vpop.permute.xlu0 %2919
        %2922 = vset.pattern.permute.xlu0 4
        %2923 = vperm.xlu0 %2922, %v374
        %v2924 = vpop.permute.xlu0 %2923
        %2926 = vset.pattern.permute.xlu0 4
        %2927 = vperm.xlu0 %2926, %v375
        %v2928 = vpop.permute.xlu0 %2927
        %2930 = vset.pattern.permute.xlu0 4
        %2931 = vperm.xlu0 %2930, %v376
        %v2932 = vpop.permute.xlu0 %2931
        %2934 = vset.pattern.permute.xlu0 4
        %2935 = vperm.xlu0 %2934, %v377
        %v2936 = vpop.permute.xlu0 %2935
        %2938 = vset.pattern.permute.xlu0 4
        %2939 = vperm.xlu0 %2938, %v378
        %v2940 = vpop.permute.xlu0 %2939
        %2942 = vset.pattern.permute.xlu0 4
        %2943 = vperm.xlu0 %2942, %v379
        %v2944 = vpop.permute.xlu0 %2943
        %2946 = vset.pattern.permute.xlu0 4
        %2947 = vperm.xlu0 %2946, %v380
        %v2948 = vpop.permute.xlu0 %2947
        %2950 = vset.pattern.permute.xlu0 4
        %2951 = vperm.xlu0 %2950, %v381
        %v2952 = vpop.permute.xlu0 %2951
        %2954 = vset.pattern.permute.xlu0 4
        %2955 = vperm.xlu0 %2954, %v382
        %v2956 = vpop.permute.xlu0 %2955
        %2958 = vset.pattern.permute.xlu0 4
        %2959 = vperm.xlu0 %2958, %v383
        %v2960 = vpop.permute.xlu0 %2959
        %v2994 = vunpack.c.l.b16 %v2802
        %v2995 = vunpack.c.h.b16 %v2802
        %v2996 = vunpack.c.l.b16 %v2803
        %v2997 = vunpack.c.h.b16 %v2803
        %v2998 = vunpack.c.l.b16 %v2804
        %v2999 = vunpack.c.h.b16 %v2804
        %v3000 = vunpack.c.l.b16 %v2805
        %v3001 = vunpack.c.h.b16 %v2805
        %v3002 = vunpack.c.l.b16 %v2806
        %v3003 = vunpack.c.h.b16 %v2806
        %v3004 = vunpack.c.l.b16 %v2807
        %v3005 = vunpack.c.h.b16 %v2807
        %v3006 = vunpack.c.l.b16 %v2808
        %v3007 = vunpack.c.h.b16 %v2808
        %v3008 = vunpack.c.l.b16 %v2809
        %v3009 = vunpack.c.h.b16 %v2809
        %v3010 = vunpack.c.l.b16 %v2810
        %v3011 = vunpack.c.h.b16 %v2810
        %v3012 = vunpack.c.l.b16 %v2811
        %v3013 = vunpack.c.h.b16 %v2811
        %v3014 = vunpack.c.l.b16 %v2812
        %v3015 = vunpack.c.h.b16 %v2812
        %v3016 = vunpack.c.l.b16 %v2813
        %v3017 = vunpack.c.h.b16 %v2813
        %v3018 = vunpack.c.l.b16 %v2814
        %v3019 = vunpack.c.h.b16 %v2814
        %v3020 = vunpack.c.l.b16 %v2815
        %v3021 = vunpack.c.h.b16 %v2815
        %v3022 = vunpack.c.l.b16 %v2816
        %v3023 = vunpack.c.h.b16 %v2816
        %v3024 = vunpack.c.l.b16 %v2817
        %v3025 = vunpack.c.h.b16 %v2817
        %v3026 = vunpack.c.l.b16 %v2818
        %v3027 = vunpack.c.h.b16 %v2818
        %v3028 = vunpack.c.l.b16 %v2819
        %v3029 = vunpack.c.h.b16 %v2819
        %v3030 = vunpack.c.l.b16 %v2820
        %v3031 = vunpack.c.h.b16 %v2820
        %v3032 = vunpack.c.l.b16 %v2821
        %v3033 = vunpack.c.h.b16 %v2821
        %v3034 = vunpack.c.l.b16 %v2822
        %v3035 = vunpack.c.h.b16 %v2822
        %v3036 = vunpack.c.l.b16 %v2823
        %v3037 = vunpack.c.h.b16 %v2823
        %v3038 = vunpack.c.l.b16 %v2824
        %v3039 = vunpack.c.h.b16 %v2824
        %v3040 = vunpack.c.l.b16 %v2825
        %v3041 = vunpack.c.h.b16 %v2825
        %v3042 = vunpack.c.l.b16 %v2826
        %v3043 = vunpack.c.h.b16 %v2826
        %v3044 = vunpack.c.l.b16 %v2827
        %v3045 = vunpack.c.h.b16 %v2827
        %v3046 = vunpack.c.l.b16 %v2828
        %v3047 = vunpack.c.h.b16 %v2828
        %v3048 = vunpack.c.l.b16 %v2829
        %v3049 = vunpack.c.h.b16 %v2829
        %v3050 = vunpack.c.l.b16 %v2830
        %v3051 = vunpack.c.h.b16 %v2830
        %v3052 = vunpack.c.l.b16 %v2831
        %v3053 = vunpack.c.h.b16 %v2831
        %v3054 = vunpack.c.l.b16 %v2832
        %v3055 = vunpack.c.h.b16 %v2832
        %v3056 = vunpack.c.l.b16 %v2833
        %v3057 = vunpack.c.h.b16 %v2833
        %v3058 = vpack.c.b16 %v2996, %v2994
        %v3059 = vpack.c.b16 %v2997, %v2995
        %v3060 = vpack.c.b16 %v3000, %v2998
        %v3061 = vpack.c.b16 %v3001, %v2999
        %v3062 = vpack.c.b16 %v3004, %v3002
        %v3063 = vpack.c.b16 %v3005, %v3003
        %v3064 = vpack.c.b16 %v3008, %v3006
        %v3065 = vpack.c.b16 %v3009, %v3007
        %v3066 = vpack.c.b16 %v3012, %v3010
        %v3067 = vpack.c.b16 %v3013, %v3011
        %v3068 = vpack.c.b16 %v3016, %v3014
        %v3069 = vpack.c.b16 %v3017, %v3015
        %v3070 = vpack.c.b16 %v3020, %v3018
        %v3071 = vpack.c.b16 %v3021, %v3019
        %v3072 = vpack.c.b16 %v3024, %v3022
        %v3073 = vpack.c.b16 %v3025, %v3023
        %v3074 = vpack.c.b16 %v3028, %v3026
        %v3075 = vpack.c.b16 %v3029, %v3027
        %v3076 = vpack.c.b16 %v3032, %v3030
        %v3077 = vpack.c.b16 %v3033, %v3031
        %v3078 = vpack.c.b16 %v3036, %v3034
        %v3079 = vpack.c.b16 %v3037, %v3035
        %v3080 = vpack.c.b16 %v3040, %v3038
        %v3081 = vpack.c.b16 %v3041, %v3039
        %v3082 = vpack.c.b16 %v3044, %v3042
        %v3083 = vpack.c.b16 %v3045, %v3043
        %v3084 = vpack.c.b16 %v3048, %v3046
        %v3085 = vpack.c.b16 %v3049, %v3047
        %v3086 = vpack.c.b16 %v3052, %v3050
        %v3087 = vpack.c.b16 %v3053, %v3051
        %v3088 = vpack.c.b16 %v3056, %v3054
        %v3089 = vpack.c.b16 %v3057, %v3055
        %3122 = vmatprep.subr.bf16.mxu0 %v2770
        %3123 = vmatpush1.bf16.msra.mxu0 %v2769
        %3124 = vmatprep.subr.bf16.mxu0 %v2772
        %3125 = vmatpush1.bf16.msra.mxu0 %v2771
        %3126 = vmatprep.subr.bf16.mxu0 %v2774
        %3127 = vmatpush1.bf16.msra.mxu0 %v2773
        %3128 = vmatprep.subr.bf16.mxu0 %v2776
        %3129 = vmatpush1.bf16.msra.mxu0 %v2775
        %3130 = vmatprep.subr.bf16.mxu0 %v2778
        %3131 = vmatpush1.bf16.msra.mxu0 %v2777
        %3132 = vmatprep.subr.bf16.mxu0 %v2780
        %3133 = vmatpush1.bf16.msra.mxu0 %v2779
        %3134 = vmatprep.subr.bf16.mxu0 %v2782
        %3135 = vmatpush1.bf16.msra.mxu0 %v2781
        %3136 = vmatprep.subr.bf16.mxu0 %v2784
        %3137 = vmatpush1.bf16.msra.mxu0 %v2783
        %3138 = vmatprep.subr.bf16.mxu0 %v2786
        %3139 = vmatpush1.bf16.msra.mxu0 %v2785
        %3140 = vmatprep.subr.bf16.mxu0 %v2788
        %3141 = vmatpush1.bf16.msra.mxu0 %v2787
        %3142 = vmatprep.subr.bf16.mxu0 %v2790
        %3143 = vmatpush1.bf16.msra.mxu0 %v2789
        %3144 = vmatprep.subr.bf16.mxu0 %v2792
        %3145 = vmatpush1.bf16.msra.mxu0 %v2791
        %3146 = vmatprep.subr.bf16.mxu0 %v2794
        %3147 = vmatpush1.bf16.msra.mxu0 %v2793
        %3148 = vmatprep.subr.bf16.mxu0 %v2796
        %3149 = vmatpush1.bf16.msra.mxu0 %v2795
        %3150 = vmatprep.subr.bf16.mxu0 %v2798
        %3151 = vmatpush1.bf16.msra.mxu0 %v2797
        %3152 = vmatprep.subr.bf16.mxu0 %v2800
        %3153 = vmatpush1.bf16.msra.mxu0 %v2799
        %3154 = vmatprep.mubr.bf16.mxu0 %v3059
        %3155 = vmatmul.mubr.bf16.gmra.mrb[0].mxu0 %v3058
        %v3156 = vpop.f32.mrb[0].mxu0
        %v3157 = vadd.f32 %v2836, %v3156
        %v3158 = vpop.f32.mrb[0].mxu0
        %v3159 = vadd.f32 %v2836, %v3158
        %v3160 = vpop.f32.mrb[0].mxu0
        %v3161 = vadd.f32 %v2840, %v3160
        %v3162 = vpop.f32.mrb[0].mxu0
        %v3163 = vadd.f32 %v2840, %v3162
        %3164 = vmatprep.mubr.bf16.mxu0 %v3061
        %3165 = vmatmul.mubr.bf16.gmra.mrb[0].mxu0 %v3060
        %v3166 = vpop.f32.mrb[0].mxu0
        %v3167 = vadd.f32 %v2844, %v3166
        %v3168 = vpop.f32.mrb[0].mxu0
        %v3169 = vadd.f32 %v2844, %v3168
        %v3170 = vpop.f32.mrb[0].mxu0
        %v3171 = vadd.f32 %v2848, %v3170
        %v3172 = vpop.f32.mrb[0].mxu0
        %v3173 = vadd.f32 %v2848, %v3172
        %3174 = vmatprep.mubr.bf16.mxu0 %v3063
        %3175 = vmatmul.mubr.bf16.gmra.mrb[0].mxu0 %v3062
        %v3176 = vpop.f32.mrb[0].mxu0
        %v3177 = vadd.f32 %v2852, %v3176
        %v3178 = vpop.f32.mrb[0].mxu0
        %v3179 = vadd.f32 %v2852, %v3178
        %v3180 = vpop.f32.mrb[0].mxu0
        %v3181 = vadd.f32 %v2856, %v3180
        %v3182 = vpop.f32.mrb[0].mxu0
        %v3183 = vadd.f32 %v2856, %v3182
        %3184 = vmatprep.mubr.bf16.mxu0 %v3065
        %3185 = vmatmul.mubr.bf16.gmra.mrb[0].mxu0 %v3064
        %v3186 = vpop.f32.mrb[0].mxu0
        %v3187 = vadd.f32 %v2860, %v3186
        %v3188 = vpop.f32.mrb[0].mxu0
        %v3189 = vadd.f32 %v2860, %v3188
        %v3190 = vpop.f32.mrb[0].mxu0
        %v3191 = vadd.f32 %v2864, %v3190
        %v3192 = vpop.f32.mrb[0].mxu0
        %v3193 = vadd.f32 %v2864, %v3192
        %3194 = vmatprep.mubr.bf16.mxu0 %v3067
        %3195 = vmatmul.mubr.bf16.gmra.mrb[0].mxu0 %v3066
        %v3196 = vpop.f32.mrb[0].mxu0
        %v3197 = vadd.f32 %v2868, %v3196
        %v3198 = vpop.f32.mrb[0].mxu0
        %v3199 = vadd.f32 %v2868, %v3198
        %v3200 = vpop.f32.mrb[0].mxu0
        %v3201 = vadd.f32 %v2872, %v3200
        %v3202 = vpop.f32.mrb[0].mxu0
        %v3203 = vadd.f32 %v2872, %v3202
        %3204 = vmatprep.mubr.bf16.mxu0 %v3069
        %3205 = vmatmul.mubr.bf16.gmra.mrb[0].mxu0 %v3068
        %v3206 = vpop.f32.mrb[0].mxu0
        %v3207 = vadd.f32 %v2876, %v3206
        %v3208 = vpop.f32.mrb[0].mxu0
        %v3209 = vadd.f32 %v2876, %v3208
        %v3210 = vpop.f32.mrb[0].mxu0
        %v3211 = vadd.f32 %v2880, %v3210
        %v3212 = vpop.f32.mrb[0].mxu0
        %v3213 = vadd.f32 %v2880, %v3212
        %3214 = vmatprep.mubr.bf16.mxu0 %v3071
        %3215 = vmatmul.mubr.bf16.gmra.mrb[0].mxu0 %v3070
        %v3216 = vpop.f32.mrb[0].mxu0
        %v3217 = vadd.f32 %v2884, %v3216
        %v3218 = vpop.f32.mrb[0].mxu0
        %v3219 = vadd.f32 %v2884, %v3218
        %v3220 = vpop.f32.mrb[0].mxu0
        %v3221 = vadd.f32 %v2888, %v3220
        %v3222 = vpop.f32.mrb[0].mxu0
        %v3223 = vadd.f32 %v2888, %v3222
        %3224 = vmatprep.mubr.bf16.mxu0 %v3073
        %3225 = vmatmul.mubr.bf16.gmra.mrb[0].mxu0 %v3072
        %v3226 = vpop.f32.mrb[0].mxu0
        %v3227 = vadd.f32 %v2892, %v3226
        %v3228 = vpop.f32.mrb[0].mxu0
        %v3229 = vadd.f32 %v2892, %v3228
        %v3230 = vpop.f32.mrb[0].mxu0
        %v3231 = vadd.f32 %v2896, %v3230
        %v3232 = vpop.f32.mrb[0].mxu0
        %v3233 = vadd.f32 %v2896, %v3232
        %3234 = vmatprep.mubr.bf16.mxu0 %v3075
        %3235 = vmatmul.mubr.bf16.gmra.mrb[0].mxu0 %v3074
        %v3236 = vpop.f32.mrb[0].mxu0
        %v3237 = vadd.f32 %v2900, %v3236
        %v3238 = vpop.f32.mrb[0].mxu0
        %v3239 = vadd.f32 %v2900, %v3238
        %v3240 = vpop.f32.mrb[0].mxu0
        %v3241 = vadd.f32 %v2904, %v3240
        %v3242 = vpop.f32.mrb[0].mxu0
        %v3243 = vadd.f32 %v2904, %v3242
        %3244 = vmatprep.mubr.bf16.mxu0 %v3077
        %3245 = vmatmul.mubr.bf16.gmra.mrb[0].mxu0 %v3076
        %v3246 = vpop.f32.mrb[0].mxu0
        %v3247 = vadd.f32 %v2908, %v3246
        %v3248 = vpop.f32.mrb[0].mxu0
        %v3249 = vadd.f32 %v2908, %v3248
        %v3250 = vpop.f32.mrb[0].mxu0
        %v3251 = vadd.f32 %v2912, %v3250
        %v3252 = vpop.f32.mrb[0].mxu0
        %v3253 = vadd.f32 %v2912, %v3252
        %3254 = vmatprep.mubr.bf16.mxu0 %v3079
        %3255 = vmatmul.mubr.bf16.gmra.mrb[0].mxu0 %v3078
        %v3256 = vpop.f32.mrb[0].mxu0
        %v3257 = vadd.f32 %v2916, %v3256
        %v3258 = vpop.f32.mrb[0].mxu0
        %v3259 = vadd.f32 %v2916, %v3258
        %v3260 = vpop.f32.mrb[0].mxu0
        %v3261 = vadd.f32 %v2920, %v3260
        %v3262 = vpop.f32.mrb[0].mxu0
        %v3263 = vadd.f32 %v2920, %v3262
        %3264 = vmatprep.mubr.bf16.mxu0 %v3081
        %3265 = vmatmul.mubr.bf16.gmra.mrb[0].mxu0 %v3080
        %v3266 = vpop.f32.mrb[0].mxu0
        %v3267 = vadd.f32 %v2924, %v3266
        %v3268 = vpop.f32.mrb[0].mxu0
        %v3269 = vadd.f32 %v2924, %v3268
        %v3270 = vpop.f32.mrb[0].mxu0
        %v3271 = vadd.f32 %v2928, %v3270
        %v3272 = vpop.f32.mrb[0].mxu0
        %v3273 = vadd.f32 %v2928, %v3272
        %3274 = vmatprep.mubr.bf16.mxu0 %v3083
        %3275 = vmatmul.mubr.bf16.gmra.mrb[0].mxu0 %v3082
        %v3276 = vpop.f32.mrb[0].mxu0
        %v3277 = vadd.f32 %v2932, %v3276
        %v3278 = vpop.f32.mrb[0].mxu0
        %v3279 = vadd.f32 %v2932, %v3278
        %v3280 = vpop.f32.mrb[0].mxu0
        %v3281 = vadd.f32 %v2936, %v3280
        %v3282 = vpop.f32.mrb[0].mxu0
        %v3283 = vadd.f32 %v2936, %v3282
        %3284 = vmatprep.mubr.bf16.mxu0 %v3085
        %3285 = vmatmul.mubr.bf16.gmra.mrb[0].mxu0 %v3084
        %v3286 = vpop.f32.mrb[0].mxu0
        %v3287 = vadd.f32 %v2940, %v3286
        %v3288 = vpop.f32.mrb[0].mxu0
        %v3289 = vadd.f32 %v2940, %v3288
        %v3290 = vpop.f32.mrb[0].mxu0
        %v3291 = vadd.f32 %v2944, %v3290
        %v3292 = vpop.f32.mrb[0].mxu0
        %v3293 = vadd.f32 %v2944, %v3292
        %3294 = vmatprep.mubr.bf16.mxu0 %v3087
        %3295 = vmatmul.mubr.bf16.gmra.mrb[0].mxu0 %v3086
        %v3296 = vpop.f32.mrb[0].mxu0
        %v3297 = vadd.f32 %v2948, %v3296
        %v3298 = vpop.f32.mrb[0].mxu0
        %v3299 = vadd.f32 %v2948, %v3298
        %v3300 = vpop.f32.mrb[0].mxu0
        %v3301 = vadd.f32 %v2952, %v3300
        %v3302 = vpop.f32.mrb[0].mxu0
        %v3303 = vadd.f32 %v2952, %v3302
        %3304 = vmatprep.mubr.bf16.mxu0 %v3089
        %3305 = vmatmul.mubr.bf16.gmra.mrb[0].mxu0 %v3088
        %v3306 = vpop.f32.mrb[0].mxu0
        %v3307 = vadd.f32 %v2956, %v3306
        %v3308 = vpop.f32.mrb[0].mxu0
        %v3309 = vadd.f32 %v2956, %v3308
        %v3310 = vpop.f32.mrb[0].mxu0
        %v3311 = vadd.f32 %v2960, %v3310
        %v3312 = vpop.f32.mrb[0].mxu0
        %v3313 = vadd.f32 %v2960, %v3312
        %3314 = vdwg.mxu0
        %v3315 = vmax.f32 %v3157, 0.0
        %v3316 = vmax.f32 %v3159, 0.0
        %v3317 = vmax.f32 %v3161, 0.0
        %v3318 = vmax.f32 %v3163, 0.0
        %v3319 = vmax.f32 %v3167, 0.0
        %v3320 = vmax.f32 %v3169, 0.0
        %v3321 = vmax.f32 %v3171, 0.0
        %v3322 = vmax.f32 %v3173, 0.0
        %v3323 = vmax.f32 %v3177, 0.0
        %v3324 = vmax.f32 %v3179, 0.0
        %v3325 = vmax.f32 %v3181, 0.0
        %v3326 = vmax.f32 %v3183, 0.0
        %v3327 = vmax.f32 %v3187, 0.0
        %v3328 = vmax.f32 %v3189, 0.0
        %v3329 = vmax.f32 %v3191, 0.0
        %v3330 = vmax.f32 %v3193, 0.0
        %v3331 = vmax.f32 %v3197, 0.0
        %v3332 = vmax.f32 %v3199, 0.0
        %v3333 = vmax.f32 %v3201, 0.0
        %v3334 = vmax.f32 %v3203, 0.0
        %v3335 = vmax.f32 %v3207, 0.0
        %v3336 = vmax.f32 %v3209, 0.0
        %v3337 = vmax.f32 %v3211, 0.0
        %v3338 = vmax.f32 %v3213, 0.0
        %v3339 = vmax.f32 %v3217, 0.0
        %v3340 = vmax.f32 %v3219, 0.0
        %v3341 = vmax.f32 %v3221, 0.0
        %v3342 = vmax.f32 %v3223, 0.0
        %v3343 = vmax.f32 %v3227, 0.0
        %v3344 = vmax.f32 %v3229, 0.0
        %v3345 = vmax.f32 %v3231, 0.0
        %v3346 = vmax.f32 %v3233, 0.0
        %v3347 = vmax.f32 %v3237, 0.0
        %v3348 = vmax.f32 %v3239, 0.0
        %v3349 = vmax.f32 %v3241, 0.0
        %v3350 = vmax.f32 %v3243, 0.0
        %v3351 = vmax.f32 %v3247, 0.0
        %v3352 = vmax.f32 %v3249, 0.0
        %v3353 = vmax.f32 %v3251, 0.0
        %v3354 = vmax.f32 %v3253, 0.0
        %v3355 = vmax.f32 %v3257, 0.0
        %v3356 = vmax.f32 %v3259, 0.0
        %v3357 = vmax.f32 %v3261, 0.0
        %v3358 = vmax.f32 %v3263, 0.0
        %v3359 = vmax.f32 %v3267, 0.0
        %v3360 = vmax.f32 %v3269, 0.0
        %v3361 = vmax.f32 %v3271, 0.0
        %v3362 = vmax.f32 %v3273, 0.0
        %v3363 = vmax.f32 %v3277, 0.0
        %v3364 = vmax.f32 %v3279, 0.0
        %v3365 = vmax.f32 %v3281, 0.0
        %v3366 = vmax.f32 %v3283, 0.0
        %v3367 = vmax.f32 %v3287, 0.0
        %v3368 = vmax.f32 %v3289, 0.0
        %v3369 = vmax.f32 %v3291, 0.0
        %v3370 = vmax.f32 %v3293, 0.0
        %v3371 = vmax.f32 %v3297, 0.0
        %v3372 = vmax.f32 %v3299, 0.0
        %v3373 = vmax.f32 %v3301, 0.0
        %v3374 = vmax.f32 %v3303, 0.0
        %v3375 = vmax.f32 %v3307, 0.0
        %v3376 = vmax.f32 %v3309, 0.0
        %v3377 = vmax.f32 %v3311, 0.0
        %v3378 = vmax.f32 %v3313, 0.0
        %v3379 = vpack.c.bf16 %v3317, %v3315
        %v3380 = vpack.c.bf16 %v3318, %v3316
        %v3381 = vpack.c.bf16 %v3321, %v3319
        %v3382 = vpack.c.bf16 %v3322, %v3320
        %v3383 = vpack.c.bf16 %v3325, %v3323
        %v3384 = vpack.c.bf16 %v3326, %v3324
        %v3385 = vpack.c.bf16 %v3329, %v3327
        %v3386 = vpack.c.bf16 %v3330, %v3328
        %v3387 = vpack.c.bf16 %v3333, %v3331
        %v3388 = vpack.c.bf16 %v3334, %v3332
        %v3389 = vpack.c.bf16 %v3337, %v3335
        %v3390 = vpack.c.bf16 %v3338, %v3336
        %v3391 = vpack.c.bf16 %v3341, %v3339
        %v3392 = vpack.c.bf16 %v3342, %v3340
        %v3393 = vpack.c.bf16 %v3345, %v3343
        %v3394 = vpack.c.bf16 %v3346, %v3344
        %v3395 = vpack.c.bf16 %v3349, %v3347
        %v3396 = vpack.c.bf16 %v3350, %v3348
        %v3397 = vpack.c.bf16 %v3353, %v3351
        %v3398 = vpack.c.bf16 %v3354, %v3352
        %v3399 = vpack.c.bf16 %v3357, %v3355
        %v3400 = vpack.c.bf16 %v3358, %v3356
        %v3401 = vpack.c.bf16 %v3361, %v3359
        %v3402 = vpack.c.bf16 %v3362, %v3360
        %v3403 = vpack.c.bf16 %v3365, %v3363
        %v3404 = vpack.c.bf16 %v3366, %v3364
        %v3405 = vpack.c.bf16 %v3369, %v3367
        %v3406 = vpack.c.bf16 %v3370, %v3368
        %v3407 = vpack.c.bf16 %v3373, %v3371
        %v3408 = vpack.c.bf16 %v3374, %v3372
        %v3409 = vpack.c.bf16 %v3377, %v3375
        %v3410 = vpack.c.bf16 %v3378, %v3376
        %v3411 = vld [vmem:[#allocation5] sm:$0xff]
        %v3412 = vld [vmem:[#allocation5 + $0x8] sm:$0xff]
        %v3413 = vld [vmem:[#allocation5 + $0x10] sm:$0xff]
        %v3414 = vld [vmem:[#allocation5 + $0x18] sm:$0xff]
        %v3415 = vld [vmem:[#allocation5 + $0x20] sm:$0xff]
        %v3416 = vld [vmem:[#allocation5 + $0x28] sm:$0xff]
        %v3417 = vld [vmem:[#allocation5 + $0x30] sm:$0xff]
        %v3418 = vld [vmem:[#allocation5 + $0x38] sm:$0xff]
        %v3419 = vld [vmem:[%s5] sm:$0xff]
        %v3420 = vld [vmem:[%s5 + $0x8] sm:$0xff]
        %v3421 = vld [vmem:[%s5 + $0x10] sm:$0xff]
        %v3422 = vld [vmem:[%s5 + $0x18] sm:$0xff]
        %v3423 = vld [vmem:[%s5 + $0x20] sm:$0xff]
        %v3424 = vld [vmem:[%s5 + $0x28] sm:$0xff]
        %v3425 = vld [vmem:[%s5 + $0x30] sm:$0xff]
        %v3426 = vld [vmem:[%s5 + $0x38] sm:$0xff]
        %3428 = vset.pattern.permute.xlu0 0
        %3429 = vperm.xlu0 %3428, %v3419
        %v3430 = vpop.permute.xlu0 %3429
        %3433 = vset.pattern.permute.xlu0 0
        %3434 = vperm.xlu0 %3433, %v3420
        %v3435 = vpop.permute.xlu0 %3434
        %3438 = vset.pattern.permute.xlu0 0
        %3439 = vperm.xlu0 %3438, %v3421
        %v3440 = vpop.permute.xlu0 %3439
        %3443 = vset.pattern.permute.xlu0 0
        %3444 = vperm.xlu0 %3443, %v3422
        %v3445 = vpop.permute.xlu0 %3444
        %3448 = vset.pattern.permute.xlu0 0
        %3449 = vperm.xlu0 %3448, %v3423
        %v3450 = vpop.permute.xlu0 %3449
        %3453 = vset.pattern.permute.xlu0 0
        %3454 = vperm.xlu0 %3453, %v3424
        %v3455 = vpop.permute.xlu0 %3454
        %3458 = vset.pattern.permute.xlu0 0
        %3459 = vperm.xlu0 %3458, %v3425
        %v3460 = vpop.permute.xlu0 %3459
        %3463 = vset.pattern.permute.xlu0 0
        %3464 = vperm.xlu0 %3463, %v3426
        %v3465 = vpop.permute.xlu0 %3464
        %v3475 = vunpack.c.l.b16 %v3411
        %v3476 = vunpack.c.h.b16 %v3411
        %v3477 = vunpack.c.l.b16 %v3412
        %v3478 = vunpack.c.h.b16 %v3412
        %v3479 = vunpack.c.l.b16 %v3413
        %v3480 = vunpack.c.h.b16 %v3413
        %v3481 = vunpack.c.l.b16 %v3414
        %v3482 = vunpack.c.h.b16 %v3414
        %v3483 = vunpack.c.l.b16 %v3415
        %v3484 = vunpack.c.h.b16 %v3415
        %v3485 = vunpack.c.l.b16 %v3416
        %v3486 = vunpack.c.h.b16 %v3416
        %v3487 = vunpack.c.l.b16 %v3417
        %v3488 = vunpack.c.h.b16 %v3417
        %v3489 = vunpack.c.l.b16 %v3418
        %v3490 = vunpack.c.h.b16 %v3418
        %v3491 = vpack.c.b16 %v3477, %v3475
        %v3492 = vpack.c.b16 %v3478, %v3476
        %v3493 = vpack.c.b16 %v3481, %v3479
        %v3494 = vpack.c.b16 %v3482, %v3480
        %v3495 = vpack.c.b16 %v3485, %v3483
        %v3496 = vpack.c.b16 %v3486, %v3484
        %v3497 = vpack.c.b16 %v3489, %v3487
        %v3498 = vpack.c.b16 %v3490, %v3488
        %3507 = vmatprep.subr.bf16.mxu0 %v3380
        %3508 = vmatpush1.bf16.msra.mxu0 %v3379
        %3509 = vmatprep.subr.bf16.mxu0 %v3382
        %3510 = vmatpush1.bf16.msra.mxu0 %v3381
        %3511 = vmatprep.subr.bf16.mxu0 %v3384
        %3512 = vmatpush1.bf16.msra.mxu0 %v3383
        %3513 = vmatprep.subr.bf16.mxu0 %v3386
        %3514 = vmatpush1.bf16.msra.mxu0 %v3385
        %3515 = vmatprep.subr.bf16.mxu0 %v3388
        %3516 = vmatpush1.bf16.msra.mxu0 %v3387
        %3517 = vmatprep.subr.bf16.mxu0 %v3390
        %3518 = vmatpush1.bf16.msra.mxu0 %v3389
        %3519 = vmatprep.subr.bf16.mxu0 %v3392
        %3520 = vmatpush1.bf16.msra.mxu0 %v3391
        %3521 = vmatprep.subr.bf16.mxu0 %v3394
        %3522 = vmatpush1.bf16.msra.mxu0 %v3393
        %3523 = vmatprep.subr.bf16.mxu0 %v3396
        %3524 = vmatpush1.bf16.msra.mxu0 %v3395
        %3525 = vmatprep.subr.bf16.mxu0 %v3398
        %3526 = vmatpush1.bf16.msra.mxu0 %v3397
        %3527 = vmatprep.subr.bf16.mxu0 %v3400
        %3528 = vmatpush1.bf16.msra.mxu0 %v3399
        %3529 = vmatprep.subr.bf16.mxu0 %v3402
        %3530 = vmatpush1.bf16.msra.mxu0 %v3401
        %3531 = vmatprep.subr.bf16.mxu0 %v3404
        %3532 = vmatpush1.bf16.msra.mxu0 %v3403
        %3533 = vmatprep.subr.bf16.mxu0 %v3406
        %3534 = vmatpush1.bf16.msra.mxu0 %v3405
        %3535 = vmatprep.subr.bf16.mxu0 %v3408
        %3536 = vmatpush1.bf16.msra.mxu0 %v3407
        %3537 = vmatprep.subr.bf16.mxu0 %v3410
        %3538 = vmatpush1.bf16.msra.mxu0 %v3409
        %3539 = vmatprep.mubr.bf16.mxu0 %v3492
        %3540 = vmatmul.mubr.bf16.gmra.mrb[0].mxu0 %v3491
        %v3541 = vpop.f32.mrb[0].mxu0
        %v3542 = vadd.f32 %v3430, %v3541
        %v3543 = vpop.f32.mrb[0].mxu0
        %v3544 = vadd.f32 %v3430, %v3543
        %v3545 = vpop.f32.mrb[0].mxu0
        %v3546 = vadd.f32 %v3435, %v3545
        %v3547 = vpop.f32.mrb[0].mxu0
        %v3548 = vadd.f32 %v3435, %v3547
        %3549 = vmatprep.mubr.bf16.mxu0 %v3494
        %3550 = vmatmul.mubr.bf16.gmra.mrb[0].mxu0 %v3493
        %v3551 = vpop.f32.mrb[0].mxu0
        %v3552 = vadd.f32 %v3440, %v3551
        %v3553 = vpop.f32.mrb[0].mxu0
        %v3554 = vadd.f32 %v3440, %v3553
        %v3555 = vpop.f32.mrb[0].mxu0
        %v3556 = vadd.f32 %v3445, %v3555
        %v3557 = vpop.f32.mrb[0].mxu0
        %v3558 = vadd.f32 %v3445, %v3557
        %3559 = vmatprep.mubr.bf16.mxu0 %v3496
        %3560 = vmatmul.mubr.bf16.gmra.mrb[0].mxu0 %v3495
        %v3561 = vpop.f32.mrb[0].mxu0
        %v3562 = vadd.f32 %v3450, %v3561
        %v3563 = vpop.f32.mrb[0].mxu0
        %v3564 = vadd.f32 %v3450, %v3563
        %v3565 = vpop.f32.mrb[0].mxu0
        %v3566 = vadd.f32 %v3455, %v3565
        %v3567 = vpop.f32.mrb[0].mxu0
        %v3568 = vadd.f32 %v3455, %v3567
        %3569 = vmatprep.mubr.bf16.mxu0 %v3498
        %3570 = vmatmul.mubr.bf16.gmra.mrb[0].mxu0 %v3497
        %v3571 = vpop.f32.mrb[0].mxu0
        %v3572 = vadd.f32 %v3460, %v3571
        %v3573 = vpop.f32.mrb[0].mxu0
        %v3574 = vadd.f32 %v3460, %v3573
        %v3575 = vpop.f32.mrb[0].mxu0
        %v3576 = vadd.f32 %v3465, %v3575
        %v3577 = vpop.f32.mrb[0].mxu0
        %v3578 = vadd.f32 %v3465, %v3577
        %3579 = vdwg.mxu0
        %v3580 = vpack.c.bf16 %v3546, %v3542
        %v3581 = vpack.c.bf16 %v3548, %v3544
        %v3582 = vpack.c.bf16 %v3556, %v3552
        %v3583 = vpack.c.bf16 %v3558, %v3554
        %v3584 = vpack.c.bf16 %v3566, %v3562
        %v3585 = vpack.c.bf16 %v3568, %v3564
        %v3586 = vpack.c.bf16 %v3576, %v3572
        %v3587 = vpack.c.bf16 %v3578, %v3574
        %v3596 = vunpack.c.l.b16 %v3580
        %v3597 = vunpack.c.l.b16 %v3581
        %v3598 = vunpack.c.h.b16 %v3580
        %v3599 = vunpack.c.h.b16 %v3581
        %v3600 = vunpack.c.l.b16 %v3582
        %v3601 = vunpack.c.l.b16 %v3583
        %v3602 = vunpack.c.h.b16 %v3582
        %v3603 = vunpack.c.h.b16 %v3583
        %v3604 = vunpack.c.l.b16 %v3584
        %v3605 = vunpack.c.l.b16 %v3585
        %v3606 = vunpack.c.h.b16 %v3584
        %v3607 = vunpack.c.h.b16 %v3585
        %v3608 = vunpack.c.l.b16 %v3586
        %v3609 = vunpack.c.l.b16 %v3587
        %v3610 = vunpack.c.h.b16 %v3586
        %v3611 = vunpack.c.h.b16 %v3587
        %v3612 = vpack.c.b16 %v3597, %v3596
        %v3613 = vpack.c.b16 %v3599, %v3598
        %v3614 = vpack.c.b16 %v3601, %v3600
        %v3615 = vpack.c.b16 %v3603, %v3602
        %v3616 = vpack.c.b16 %v3605, %v3604
        %v3617 = vpack.c.b16 %v3607, %v3606
        %v3618 = vpack.c.b16 %v3609, %v3608
        %v3619 = vpack.c.b16 %v3611, %v3610
        %3628 = vst [vmem:[%s314] sm:$0xff] %v3612
        %3629 = vst [vmem:[%s314 + $0x8] sm:$0xff] %v3613
        %3630 = vst [vmem:[%s314 + $0x10] sm:$0xff] %v3614
        %3631 = vst [vmem:[%s314 + $0x18] sm:$0xff] %v3615
        %3632 = vst [vmem:[%s314 + $0x20] sm:$0xff] %v3616
        %3633 = vst [vmem:[%s314 + $0x28] sm:$0xff] %v3617
        %3634 = vst [vmem:[%s314 + $0x30] sm:$0xff] %v3618
        %3635 = vst [vmem:[%s314 + $0x38] sm:$0xff] %v3619
        %s3636 = sand.u32 %s158, 1
        %s3637 = sand.u32 %s158, 1
        %s3638 = smul.addr %s3637, 64
        %s3639 = scalar_lea.vmem [#allocation7], %s3638
        // Predicated region
        $region91: #{srnet_forward.1} parent=77 // pred_check
          %p3640 = pneg %p168
        $region92: #{srnet_forward.1} parent=77 // pred_check_branch
          %3642 = sbr.rel (%p3640) target = $region94
        $region93: #{srnet_forward.1} parent=77 // pred_region
          %s3643 = smul.u32 2, %s19
          %s3644 = smul.addr %s3643, 4
          %s3645 = scalar_lea.vmem %s6, %s3644
          // Predicated region
          $region95: #{srnet_forward.1} parent=93 // pred_check
            _
          $region96: #{srnet_forward.1} parent=93 // pred_check_branch
            %3647 = sbr.rel (0) target = $region98
          $region97: #{srnet_forward.1} parent=93 // pred_region
            // Predicated region
            $region99: #{srnet_forward.1} parent=97 // pred_check
              _
            $region100: #{srnet_forward.1} parent=97 // pred_check_branch
              %3649 = sbr.rel (0) target = $region102
            $region101: #{srnet_forward.1} parent=97 // pred_region
              // Predicated region
              $region114: #{srnet_forward.1} parent=101 // pred_check
                _
              $region115: #{srnet_forward.1} parent=101 // pred_check_branch
                %3678 = sbr.rel (0) target = $region117
              $region116: #{srnet_forward.1} parent=101 // pred_region
                loop: start=0, step=1, limit=1
                $region118: #{srnet_forward.1} parent=116 // loop_pre_header
                  _
                $region119: #{srnet_forward.1} parent=116 // loop_header
                  %s3680 = sphi 0, %s3684
                  %p3681 = scmp.ge.s32.totalorder %s3680, 1
                  %s3685 = sphi %s3639, %s3639
                  %s3686 = sphi %s3645, %s3645
                $region120: #{srnet_forward.1} parent=116 // loop_header_branch
                  %3683 = sbr.rel (%p3681) target = $region124
                $region121: #{srnet_forward.1} parent=116 // loop_body
                  %v3687 = vld [vmem:[%s3685] sm:$0xff]
                  %3688 = vst [vmem:[%s3686] sm:$0xff] %v3687
                  %v3689 = vld [vmem:[%s3685 + $0x8] sm:$0xff]
                  %3690 = vst [vmem:[%s3686 + $0x10] sm:$0xff] %v3689
                  %v3691 = vld [vmem:[%s3685 + $0x10] sm:$0xff]
                  %3692 = vst [vmem:[%s3686 + $0x20] sm:$0xff] %v3691
                  %v3693 = vld [vmem:[%s3685 + $0x18] sm:$0xff]
                  %3694 = vst [vmem:[%s3686 + $0x30] sm:$0xff] %v3693
                  %v3695 = vld [vmem:[%s3685 + $0x20] sm:$0xff]
                  %3696 = vst [vmem:[%s3686 + $0x40] sm:$0xff] %v3695
                  %v3697 = vld [vmem:[%s3685 + $0x28] sm:$0xff]
                  %3698 = vst [vmem:[%s3686 + $0x50] sm:$0xff] %v3697
                  %v3699 = vld [vmem:[%s3685 + $0x30] sm:$0xff]
                  %3700 = vst [vmem:[%s3686 + $0x60] sm:$0xff] %v3699
                  %v3701 = vld [vmem:[%s3685 + $0x38] sm:$0xff]
                  %3702 = vst [vmem:[%s3686 + $0x70] sm:$0xff] %v3701
                $region122: #{srnet_forward.1} parent=116 // loop_footer
                  %s3684 = sadd.s32 1, %s3680
                $region123: #{srnet_forward.1} parent=116 // loop_footer_branch
                  %3679 = sbr.rel target = $region119
                $region124: #{srnet_forward.1} parent=116 // loop_exit
                  _
              $region117: #{srnet_forward.1} parent=101 // pred_fallthru
                _
              // Predicated region
              $region125: #{srnet_forward.1} parent=101 // pred_check
                _
              $region126: #{srnet_forward.1} parent=101 // pred_check_branch
                %3704 = sbr.rel target = $region128
              $region127: #{srnet_forward.1} parent=101 // pred_region
                _
              $region128: #{srnet_forward.1} parent=101 // pred_fallthru
                _
            $region102: #{srnet_forward.1} parent=97 // pred_fallthru
              _
            // Predicated region
            $region103: #{srnet_forward.1} parent=97 // pred_check
              _
            $region104: #{srnet_forward.1} parent=97 // pred_check_branch
              %3651 = sbr.rel target = $region106
            $region105: #{srnet_forward.1} parent=97 // pred_region
              loop: start=0, step=1, limit=1
              $region107: #{srnet_forward.1} parent=105 // loop_pre_header
                _
              $region108: #{srnet_forward.1} parent=105 // loop_header
                %s3654 = sphi 0, %s3658
                %p3655 = scmp.ge.s32.totalorder %s3654, 1
                %s3659 = sphi %s3639, %s3639
                %s3660 = sphi %s3645, %s3645
              $region109: #{srnet_forward.1} parent=105 // loop_header_branch
                %3657 = sbr.rel (%p3655) target = $region113
              $region110: #{srnet_forward.1} parent=105 // loop_body
                %v3661 = vld [vmem:[%s3659] sm:$0xff]
                %3662 = vst [vmem:[%s3660] sm:$0xff] %v3661
                %v3663 = vld [vmem:[%s3659 + $0x8] sm:$0xff]
                %3664 = vst [vmem:[%s3660 + $0x10] sm:$0xff] %v3663
                %v3665 = vld [vmem:[%s3659 + $0x10] sm:$0xff]
                %3666 = vst [vmem:[%s3660 + $0x20] sm:$0xff] %v3665
                %v3667 = vld [vmem:[%s3659 + $0x18] sm:$0xff]
                %3668 = vst [vmem:[%s3660 + $0x30] sm:$0xff] %v3667
                %v3669 = vld [vmem:[%s3659 + $0x20] sm:$0xff]
                %3670 = vst [vmem:[%s3660 + $0x40] sm:$0xff] %v3669
                %v3671 = vld [vmem:[%s3659 + $0x28] sm:$0xff]
                %3672 = vst [vmem:[%s3660 + $0x50] sm:$0xff] %v3671
                %v3673 = vld [vmem:[%s3659 + $0x30] sm:$0xff]
                %3674 = vst [vmem:[%s3660 + $0x60] sm:$0xff] %v3673
                %v3675 = vld [vmem:[%s3659 + $0x38] sm:$0xff]
                %3676 = vst [vmem:[%s3660 + $0x70] sm:$0xff] %v3675
              $region111: #{srnet_forward.1} parent=105 // loop_footer
                %s3658 = sadd.s32 1, %s3654
              $region112: #{srnet_forward.1} parent=105 // loop_footer_branch
                %3653 = sbr.rel target = $region108
              $region113: #{srnet_forward.1} parent=105 // loop_exit
                _
            $region106: #{srnet_forward.1} parent=97 // pred_fallthru
              _
          $region98: #{srnet_forward.1} parent=93 // pred_fallthru
            _
          %3705 = vnop
        $region94: #{srnet_forward.1} parent=77 // pred_fallthru
          _
      $region78: #{srnet_forward.1} parent=5 // pred_fallthru
        _
      %p3706 = scmp.le.s32.totalorder 2, %s14
      // Predicated region
      $region129: #{srnet_forward.1} parent=5 // pred_check
        %p3707 = pneg %p3706
      $region130: #{srnet_forward.1} parent=5 // pred_check_branch
        %3709 = sbr.rel (%p3707) target = $region132
      $region131: #{srnet_forward.1} parent=5 // pred_region
        %s3710 = ssub.s32 %s14, 2
        // Predicated region
        $region133: #{srnet_forward.1} parent=131 // pred_check
          %p3711 = pneg %p174
        $region134: #{srnet_forward.1} parent=131 // pred_check_branch
          %3713 = sbr.rel (%p3711) target = $region136
        $region135: #{srnet_forward.1} parent=131 // pred_region
          %s3714 = sand.u32 %s159, 1
          %s3715 = sand.u32 %s159, 1
          %s3716 = smul.addr %s3715, 64
          %s3717 = scalar_lea.vmem [#allocation7], %s3716
        $region136: #{srnet_forward.1} parent=131 // pred_fallthru
          _
      $region132: #{srnet_forward.1} parent=5 // pred_fallthru
        _
    $region6: #{srnet_forward.1} parent=1 // loop_footer
      %s18 = sadd.s32 1, %s14
    $region7: #{srnet_forward.1} parent=1 // loop_footer_branch
      %13 = sbr.rel target = $region3
    $region8: #{srnet_forward.1} parent=1 // loop_exit
      _
    %3718 = vsyncpa [#allocation4], 1
    %s3719 = scalar_lea.sflag [#allocation4], 1
    %3720 = vsyncpa %s3719, 1
    %3721 = vsyncpa [#allocation6], 1

</llo_original>
